<compile_context>
chip_gen: v7x
topology: tpu7x:2x2x1
jax: 0.10.0
libtpu: 0.0.40
codegen_flags: <defaults>
</compile_context>

<pallas_src>
import functools

import jax
import jax.numpy as jnp
from jax.experimental import pallas as pl
from jax.experimental.pallas import tpu as pltpu

EPS = 1e-5                      # nn.InstanceNorm2d default eps
MATMUL_DTYPE = jnp.bfloat16     # MXU operand dtype (f32 accumulation kept)


def _fill_im2col(zcol_ref, z, *, H, W, C):
    """Write zcol_ref[hp, w, kw*C + ci] = reflect_pad1(z)[hp, w + kw, ci] (bf16).

    z        : (H, W, C) activations (channels-last, C on lanes)
    zcol_ref : (H+2, W, 3*C) bf16 VMEM scratch, shared by both conv stages.
    Reflect padding and the three kw shifts of the 3x3 conv are folded into this
    single write pass (no padded slab, no concatenates).
    """
    zb = z.astype(MATMUL_DTYPE)
    # Interior rows (padded rows 1..H):
    # kw = 0: padded cols [reflect(col 1), cols 0..W-2]
    zcol_ref[pl.ds(1, H), pl.ds(0, 1), pl.ds(0, C)] = zb[:, 1:2, :]
    zcol_ref[pl.ds(1, H), pl.ds(1, W - 1), pl.ds(0, C)] = zb[:, 0:W - 1, :]
    # kw = 1: cols 0..W-1
    zcol_ref[pl.ds(1, H), pl.ds(0, W), pl.ds(C, C)] = zb
    # kw = 2: padded cols [cols 1..W-1, reflect(col W-2)]
    zcol_ref[pl.ds(1, H), pl.ds(0, W - 1), pl.ds(2 * C, C)] = zb[:, 1:W, :]
    zcol_ref[pl.ds(1, H), pl.ds(W - 1, 1), pl.ds(2 * C, C)] = zb[:, W - 2:W - 1, :]
    # Reflected rows: padded row 0 == z row 1 == interior row hp=2,
    #                 padded row H+1 == z row H-2 == interior row hp=H-1.
    zcol_ref[pl.ds(0, 1), :, :] = zcol_ref[pl.ds(2, 1), :, :]
    zcol_ref[pl.ds(H + 1, 1), :, :] = zcol_ref[pl.ds(H - 1, 1), :, :]


def _conv3x3_from_im2col(zcol_ref, w_ref, acc_ref, *, H, W, C):
    """acc_ref (H*W, C) f32 <- 3x3 conv as 3 accumulating MXU matmuls (one per kh).

    w_ref : (3, 3*C, C) bf16, w_ref[kh, kw*C + ci, co] == torch_w[co, ci, kh, kw]
    """
    HW = H * W
    for kh in range(3):
        tile = zcol_ref[pl.ds(kh, H), :, :].reshape(HW, 3 * C)    # bf16 (HW, 3C)
        part = jnp.dot(tile, w_ref[kh], preferred_element_type=jnp.float32)
        if kh == 0:
            acc_ref[...] = part
        else:
            acc_ref[...] += part


def _instance_norm(a):
    """InstanceNorm2d(affine=False, eps=1e-5) over flattened spatial axis, f32, two-pass."""
    mean = jnp.mean(a, axis=0, keepdims=True)                     # (1, C)
    c = a - mean
    var = jnp.mean(c * c, axis=0, keepdims=True)
    return c * jax.lax.rsqrt(var + EPS)


def _resnet_block_kernel(x_ref, w1_ref, w2_ref, o_ref, zcol_ref, acc_ref, *, C, H, W):
    """Fused ResnetBlock forward for one batch element (NHWC, channels on lanes).

    x_ref    : (1, H, W, C)        input
    w1_ref   : (3, 3*C, C)  bf16   stage-1 conv weights (kh, kw*C+ci, co)
    w2_ref   : (3, 3*C, C)  bf16   stage-2 conv weights
    o_ref    : (1, H, W, C)        output
    zcol_ref : (H+2, W, 3*C) bf16  scratch -- shared reflect-pad / im2col slab
    acc_ref  : (H*W, C) f32        scratch -- shared conv accumulator
    """
    # Stage 1: ReLU(IN(conv3x3(reflpad(x)))).  Conv bias intentionally omitted:
    # a per-channel constant added before InstanceNorm(affine=False) is cancelled
    # exactly by the mean subtraction.
    _fill_im2col(zcol_ref, x_ref[0], H=H, W=W, C=C)
    _conv3x3_from_im2col(zcol_ref, w1_ref, acc_ref, H=H, W=W, C=C)
    h = jnp.maximum(_instance_norm(acc_ref[...]), 0.0).reshape(H, W, C)
    # TODO(synk): nn.Dropout(0.5) branch skipped -- module built with use_dropout=False.

    # Stage 2: IN(conv3x3(reflpad(h))), reusing the same scratch buffers.
    _fill_im2col(zcol_ref, h, H=H, W=W, C=C)
    _conv3x3_from_im2col(zcol_ref, w2_ref, acc_ref, H=H, W=W, C=C)
    y = _instance_norm(acc_ref[...]).reshape(H, W, C)

    # Residual: re-read x_ref (still resident in the pipeline input buffer) instead
    # of keeping an f32 copy live across both stages.
    o_ref[0] = (x_ref[0].astype(jnp.float32) + y).astype(o_ref.dtype)


def _vmem_limit_bytes(default_bytes=64 * 1024 * 1024):
    """Generation-aware scoped-VMEM budget: ~3/4 of physical, capped at 100 MiB."""
    try:
        cap = int(pltpu.get_tpu_info().vmem_capacity_bytes)
        return min(100 * 1024 * 1024, (cap * 3) // 4)
    except Exception:  # interpret mode / older runtimes: safe fallback
        return default_bytes


def _prep_conv_weight(w, C):
    """(Cout, Cin, 3, 3) torch layout -> (kh, kw*C+ci, co) bf16 matrices for the MXU."""
    return jnp.transpose(w, (2, 3, 1, 0)).reshape(3, 3 * C, C).astype(MATMUL_DTYPE)


def resnet_block_forward_nhwc(x_nhwc, params):
    """Native NHWC entry point (channels on lanes); use this when chaining blocks."""
    N, H, W, C = x_nhwc.shape
    assert H >= 2 and W >= 2, "reflect padding of 1 needs H, W >= 2"
    # TODO(synk): if W % 8 != 0 the in-kernel (H, W, *) <-> (H*W, *) reshapes fall
    # back to copies; pad W to a multiple of 8 in the wrapper for best performance.

    w1 = _prep_conv_weight(params["w1"], C)
    w2 = _prep_conv_weight(params["w2"], C)
    # params["b1"]/["b2"] unused: bias before InstanceNorm(affine=False) is a no-op.

    kernel = functools.partial(_resnet_block_kernel, C=C, H=H, W=W)

    # TODO(synk): on v7x (2 TensorCores) batch-1 calls leave one core idle; add a
    # core-parallel split over H halves (1-row halo, cross-core IN reduction).
    # TODO(synk): weights are grid-invariant; single-buffer them with
    # pipeline_mode=pl.Buffered(1) when the top-level TPU pipeline supports it.
    return pl.pallas_call(
        kernel,
        out_shape=jax.ShapeDtypeStruct((N, H, W, C), x_nhwc.dtype),
        grid=(N,),
        in_specs=[
            pl.BlockSpec((1, H, W, C), lambda n: (n, 0, 0, 0)),
            pl.BlockSpec((3, 3 * C, C), lambda n: (0, 0, 0)),   # weights resident in VMEM
            pl.BlockSpec((3, 3 * C, C), lambda n: (0, 0, 0)),
        ],
        out_specs=pl.BlockSpec((1, H, W, C), lambda n: (n, 0, 0, 0)),
        scratch_shapes=[
            pltpu.VMEM((H + 2, W, 3 * C), MATMUL_DTYPE),   # shared im2col / pad slab
            pltpu.VMEM((H * W, C), jnp.float32),           # shared conv accumulator
        ],
        compiler_params=pltpu.CompilerParams(
            dimension_semantics=("parallel",),
            vmem_limit_bytes=_vmem_limit_bytes(),
        ),
    )(x_nhwc, w1, w2)


def resnet_block_forward(x, params):
    """PyTorch-compatible NCHW entry point: x (N, C, H, W) -> (N, C, H, W).

    When stacking ResnetBlocks (CycleGAN uses 9), call resnet_block_forward_nhwc
    directly and keep activations NHWC end-to-end to skip these two transposes.
    """
    xt = jnp.transpose(x, (0, 2, 3, 1))
    out = resnet_block_forward_nhwc(xt, params)
    return jnp.transpose(out, (0, 3, 1, 2))


def _reference_forward(x, params):
    """Pure-JAX f32 reference (matches the PyTorch module semantics, incl. bias)."""
    def conv(z, w, b):
        zp = jnp.pad(z, ((0, 0), (0, 0), (1, 1), (1, 1)), mode="reflect")
        y = jax.lax.conv_general_dilated(
            zp, w, window_strides=(1, 1), padding="VALID",
            dimension_numbers=("NCHW", "OIHW", "NCHW"),
            precision=jax.lax.Precision.HIGHEST)
        return y + b[None, :, None, None]

    def inorm(z):
        m = jnp.mean(z, axis=(2, 3), keepdims=True)
        v = jnp.mean((z - m) ** 2, axis=(2, 3), keepdims=True)
        return (z - m) * jax.lax.rsqrt(v + EPS)

    h = jax.nn.relu(inorm(conv(x, params["w1"], params["b1"])))
    return x + inorm(conv(h, params["w2"], params["b2"]))


def init_params(key, dim):
    """Deterministic synthetic init; conv weights are (Cout, Cin, 3, 3) like PyTorch."""
    k1, k2, k3, k4 = jax.random.split(key, 4)
    scale = 1.0 / jnp.sqrt(9.0 * dim)
    return {
        "w1": jax.random.normal(k1, (dim, dim, 3, 3), jnp.float32) * scale,
        "b1": jax.random.normal(k2, (dim,), jnp.float32) * 0.1,
        "w2": jax.random.normal(k3, (dim, dim, 3, 3), jnp.float32) * scale,
        "b2": jax.random.normal(k4, (dim,), jnp.float32) * 0.1,
    }


if __name__ == "__main__":
    N, C, H, W = 2, 4, 16, 16
    key = jax.random.PRNGKey(0)
    kx, kp = jax.random.split(key)
    x = jax.random.normal(kx, (N, C, H, W), jnp.float32)
    params = init_params(kp, C)

    out = jax.jit(resnet_block_forward)(x, params)
    out = jax.block_until_ready(out)

    ref = _reference_forward(x, params)
    assert out.shape == (N, C, H, W)
    # bf16 MXU operands (f32 accumulation / f32 norm math) vs. the f32 reference:
    # tolerance loosened accordingly.
    assert jnp.allclose(out, ref, atol=5e-2, rtol=5e-2), "mismatch vs reference"

    print("KERNEL_OK")
</pallas_src>

<mosaic_0001>
module attributes {stable_mosaic.version = 11 : i64} {
  func.func @_resnet_block_kernel(%arg0: i32, %arg1: memref<1x16x16x4xf32, #tpu.memory_space<vmem>>, %arg2: memref<3x12x4xbf16, #tpu.memory_space<vmem>>, %arg3: memref<3x12x4xbf16, #tpu.memory_space<vmem>>, %arg4: memref<1x16x16x4xf32, #tpu.memory_space<vmem>>, %arg5: memref<18x16x12xbf16, #tpu.memory_space<vmem>>, %arg6: memref<256x4xf32, #tpu.memory_space<vmem>>) attributes {dimension_semantics = [#tpu.dimension_semantics<parallel>], iteration_bounds = array<i64: 2>, scalar_prefetch = 0 : i64, scratch_operands = 2 : i64, tpu.core_type = #tpu.core_type<tc>, window_params = [{transform_indices = @transform_0, window_bounds = array<i64: 1, 16, 16, 4>}, {pipeline_mode = #tpu.pipeline_mode<synchronous>, transform_indices = @transform_1, window_bounds = array<i64: 3, 12, 4>}, {pipeline_mode = #tpu.pipeline_mode<synchronous>, transform_indices = @transform_2, window_bounds = array<i64: 3, 12, 4>}, {transform_indices = @transform_3, window_bounds = array<i64: 1, 16, 16, 4>}]} {
    %c0 = arith.constant 0 : index
    %c0_0 = arith.constant 0 : index
    %c0_1 = arith.constant 0 : index
    %c0_2 = arith.constant 0 : index
    %0 = vector.load %arg1[%c0, %c0_0, %c0_1, %c0_2] : memref<1x16x16x4xf32, #tpu.memory_space<vmem>>, vector<1x16x16x4xf32>
    %1 = vector.shape_cast %0 : vector<1x16x16x4xf32> to vector<16x16x4xf32>
    %2 = arith.truncf %1 : vector<16x16x4xf32> to vector<16x16x4xbf16>
    %3 = vector.extract_strided_slice %2 {offsets = [0, 1, 0], sizes = [16, 1, 4], strides = [1, 1, 1]} : vector<16x16x4xbf16> to vector<16x1x4xbf16>
    %c1 = arith.constant 1 : index
    %c0_3 = arith.constant 0 : index
    %c0_4 = arith.constant 0 : index
    %4 = vector.load %arg5[%c1, %c0_3, %c0_4] : memref<18x16x12xbf16, #tpu.memory_space<vmem>>, vector<16x1x4xbf16>
    tpu.vector_store %arg5[%c1, %c0_3, %c0_4], %3 {strides = array<i32>} : memref<18x16x12xbf16, #tpu.memory_space<vmem>>, vector<16x1x4xbf16>,
    %5 = vector.extract_strided_slice %2 {offsets = [0, 0, 0], sizes = [16, 15, 4], strides = [1, 1, 1]} : vector<16x16x4xbf16> to vector<16x15x4xbf16>
    %c1_5 = arith.constant 1 : index
    %c1_6 = arith.constant 1 : index
    %c0_7 = arith.constant 0 : index
    %6 = vector.load %arg5[%c1_5, %c1_6, %c0_7] : memref<18x16x12xbf16, #tpu.memory_space<vmem>>, vector<16x15x4xbf16>
    tpu.vector_store %arg5[%c1_5, %c1_6, %c0_7], %5 {strides = array<i32>} : memref<18x16x12xbf16, #tpu.memory_space<vmem>>, vector<16x15x4xbf16>,
    %c1_8 = arith.constant 1 : index
    %c0_9 = arith.constant 0 : index
    %c4 = arith.constant 4 : index
    %7 = vector.load %arg5[%c1_8, %c0_9, %c4] : memref<18x16x12xbf16, #tpu.memory_space<vmem>>, vector<16x16x4xbf16>
    tpu.vector_store %arg5[%c1_8, %c0_9, %c4], %2 {strides = array<i32>} : memref<18x16x12xbf16, #tpu.memory_space<vmem>>, vector<16x16x4xbf16>,
    %8 = vector.extract_strided_slice %2 {offsets = [0, 1, 0], sizes = [16, 15, 4], strides = [1, 1, 1]} : vector<16x16x4xbf16> to vector<16x15x4xbf16>
    %c1_10 = arith.constant 1 : index
    %c0_11 = arith.constant 0 : index
    %c8 = arith.constant 8 : index
    %9 = vector.load %arg5[%c1_10, %c0_11, %c8] : memref<18x16x12xbf16, #tpu.memory_space<vmem>>, vector<16x15x4xbf16>
    tpu.vector_store %arg5[%c1_10, %c0_11, %c8], %8 {strides = array<i32>} : memref<18x16x12xbf16, #tpu.memory_space<vmem>>, vector<16x15x4xbf16>,
    %10 = vector.extract_strided_slice %2 {offsets = [0, 14, 0], sizes = [16, 1, 4], strides = [1, 1, 1]} : vector<16x16x4xbf16> to vector<16x1x4xbf16>
    %c1_12 = arith.constant 1 : index
    %c15 = arith.constant 15 : index
    %c8_13 = arith.constant 8 : index
    %11 = vector.load %arg5[%c1_12, %c15, %c8_13] : memref<18x16x12xbf16, #tpu.memory_space<vmem>>, vector<16x1x4xbf16>
    tpu.vector_store %arg5[%c1_12, %c15, %c8_13], %10 {strides = array<i32>} : memref<18x16x12xbf16, #tpu.memory_space<vmem>>, vector<16x1x4xbf16>,
    %c2 = arith.constant 2 : index
    %c0_14 = arith.constant 0 : index
    %c0_15 = arith.constant 0 : index
    %12 = vector.load %arg5[%c2, %c0_14, %c0_15] : memref<18x16x12xbf16, #tpu.memory_space<vmem>>, vector<1x16x12xbf16>
    %c0_16 = arith.constant 0 : index
    %c0_17 = arith.constant 0 : index
    %c0_18 = arith.constant 0 : index
    %13 = vector.load %arg5[%c0_16, %c0_17, %c0_18] : memref<18x16x12xbf16, #tpu.memory_space<vmem>>, vector<1x16x12xbf16>
    tpu.vector_store %arg5[%c0_16, %c0_17, %c0_18], %12 {strides = array<i32>} : memref<18x16x12xbf16, #tpu.memory_space<vmem>>, vector<1x16x12xbf16>,
    %c15_19 = arith.constant 15 : index
    %c0_20 = arith.constant 0 : index
    %c0_21 = arith.constant 0 : index
    %14 = vector.load %arg5[%c15_19, %c0_20, %c0_21] : memref<18x16x12xbf16, #tpu.memory_space<vmem>>, vector<1x16x12xbf16>
    %c17 = arith.constant 17 : index
    %c0_22 = arith.constant 0 : index
    %c0_23 = arith.constant 0 : index
    %15 = vector.load %arg5[%c17, %c0_22, %c0_23] : memref<18x16x12xbf16, #tpu.memory_space<vmem>>, vector<1x16x12xbf16>
    tpu.vector_store %arg5[%c17, %c0_22, %c0_23], %14 {strides = array<i32>} : memref<18x16x12xbf16, #tpu.memory_space<vmem>>, vector<1x16x12xbf16>,
    %c0_24 = arith.constant 0 : index
    %c0_25 = arith.constant 0 : index
    %c0_26 = arith.constant 0 : index
    %16 = vector.load %arg5[%c0_24, %c0_25, %c0_26] : memref<18x16x12xbf16, #tpu.memory_space<vmem>>, vector<16x16x12xbf16>
    %17 = vector.shape_cast %16 : vector<16x16x12xbf16> to vector<256x12xbf16>
    %c0_27 = arith.constant 0 : index
    %c0_28 = arith.constant 0 : index
    %c0_29 = arith.constant 0 : index
    %18 = vector.load %arg2[%c0_27, %c0_28, %c0_29] : memref<3x12x4xbf16, #tpu.memory_space<vmem>>, vector<1x12x4xbf16>
    %19 = vector.shape_cast %18 : vector<1x12x4xbf16> to vector<12x4xbf16>
    %cst = arith.constant dense<0.000000e+00> : vector<256x4xf32>
    %20 = tpu.matmul %17, %19, %cst {dimension_numbers = #tpu.dot_dimension_numbers<[1], [0], [0], [1], [0, 0, 1, 1], [], []>} : vector<256x12xbf16>, vector<12x4xbf16>, vector<256x4xf32> -> vector<256x4xf32>
    %c0_30 = arith.constant 0 : index
    %c0_31 = arith.constant 0 : index
    %21 = vector.load %arg6[%c0_30, %c0_31] : memref<256x4xf32, #tpu.memory_space<vmem>>, vector<256x4xf32>
    tpu.vector_store %arg6[%c0_30, %c0_31], %20 {strides = array<i32>} : memref<256x4xf32, #tpu.memory_space<vmem>>, vector<256x4xf32>,
    %c1_32 = arith.constant 1 : index
    %c0_33 = arith.constant 0 : index
    %c0_34 = arith.constant 0 : index
    %22 = vector.load %arg5[%c1_32, %c0_33, %c0_34] : memref<18x16x12xbf16, #tpu.memory_space<vmem>>, vector<16x16x12xbf16>
    %23 = vector.shape_cast %22 : vector<16x16x12xbf16> to vector<256x12xbf16>
    %c1_35 = arith.constant 1 : index
    %c0_36 = arith.constant 0 : index
    %c0_37 = arith.constant 0 : index
    %24 = vector.load %arg2[%c1_35, %c0_36, %c0_37] : memref<3x12x4xbf16, #tpu.memory_space<vmem>>, vector<1x12x4xbf16>
    %25 = vector.shape_cast %24 : vector<1x12x4xbf16> to vector<12x4xbf16>
    %cst_38 = arith.constant dense<0.000000e+00> : vector<256x4xf32>
    %26 = tpu.matmul %23, %25, %cst_38 {dimension_numbers = #tpu.dot_dimension_numbers<[1], [0], [0], [1], [0, 0, 1, 1], [], []>} : vector<256x12xbf16>, vector<12x4xbf16>, vector<256x4xf32> -> vector<256x4xf32>
    %c0_39 = arith.constant 0 : index
    %c0_40 = arith.constant 0 : index
    %27 = vector.load %arg6[%c0_39, %c0_40] : memref<256x4xf32, #tpu.memory_space<vmem>>, vector<256x4xf32>
    %28 = arith.addf %27, %26 : vector<256x4xf32>
    %c0_41 = arith.constant 0 : index
    %c0_42 = arith.constant 0 : index
    %29 = vector.load %arg6[%c0_41, %c0_42] : memref<256x4xf32, #tpu.memory_space<vmem>>, vector<256x4xf32>
    tpu.vector_store %arg6[%c0_41, %c0_42], %28 {strides = array<i32>} : memref<256x4xf32, #tpu.memory_space<vmem>>, vector<256x4xf32>,
    %c2_43 = arith.constant 2 : index
    %c0_44 = arith.constant 0 : index
    %c0_45 = arith.constant 0 : index
    %30 = vector.load %arg5[%c2_43, %c0_44, %c0_45] : memref<18x16x12xbf16, #tpu.memory_space<vmem>>, vector<16x16x12xbf16>
    %31 = vector.shape_cast %30 : vector<16x16x12xbf16> to vector<256x12xbf16>
    %c2_46 = arith.constant 2 : index
    %c0_47 = arith.constant 0 : index
    %c0_48 = arith.constant 0 : index
    %32 = vector.load %arg2[%c2_46, %c0_47, %c0_48] : memref<3x12x4xbf16, #tpu.memory_space<vmem>>, vector<1x12x4xbf16>
    %33 = vector.shape_cast %32 : vector<1x12x4xbf16> to vector<12x4xbf16>
    %cst_49 = arith.constant dense<0.000000e+00> : vector<256x4xf32>
    %34 = tpu.matmul %31, %33, %cst_49 {dimension_numbers = #tpu.dot_dimension_numbers<[1], [0], [0], [1], [0, 0, 1, 1], [], []>} : vector<256x12xbf16>, vector<12x4xbf16>, vector<256x4xf32> -> vector<256x4xf32>
    %c0_50 = arith.constant 0 : index
    %c0_51 = arith.constant 0 : index
    %35 = vector.load %arg6[%c0_50, %c0_51] : memref<256x4xf32, #tpu.memory_space<vmem>>, vector<256x4xf32>
    %36 = arith.addf %35, %34 : vector<256x4xf32>
    %c0_52 = arith.constant 0 : index
    %c0_53 = arith.constant 0 : index
    %37 = vector.load %arg6[%c0_52, %c0_53] : memref<256x4xf32, #tpu.memory_space<vmem>>, vector<256x4xf32>
    tpu.vector_store %arg6[%c0_52, %c0_53], %36 {strides = array<i32>} : memref<256x4xf32, #tpu.memory_space<vmem>>, vector<256x4xf32>,
    %c0_54 = arith.constant 0 : index
    %c0_55 = arith.constant 0 : index
    %38 = vector.load %arg6[%c0_54, %c0_55] : memref<256x4xf32, #tpu.memory_space<vmem>>, vector<256x4xf32>
    %cst_56 = arith.constant dense<0.000000e+00> : vector<4xf32>
    %39 = vector.multi_reduction <add>, %38, %cst_56 [0] : vector<256x4xf32> to vector<4xf32>
    %40 = vector.shape_cast %39 : vector<4xf32> to vector<1x4xf32>
    %cst_57 = arith.constant 2.560000e+02 : f32
    %41 = vector.broadcast %cst_57 : f32 to vector<1x4xf32>
    %42 = arith.divf %40, %41 : vector<1x4xf32>
    %43 = vector.broadcast %42 : vector<1x4xf32> to vector<256x4xf32>
    %44 = arith.subf %38, %43 : vector<256x4xf32>
    %45 = arith.mulf %44, %44 : vector<256x4xf32>
    %cst_58 = arith.constant dense<0.000000e+00> : vector<4xf32>
    %46 = vector.multi_reduction <add>, %45, %cst_58 [0] : vector<256x4xf32> to vector<4xf32>
    %47 = vector.shape_cast %46 : vector<4xf32> to vector<1x4xf32>
    %cst_59 = arith.constant 2.560000e+02 : f32
    %48 = vector.broadcast %cst_59 : f32 to vector<1x4xf32>
    %49 = arith.divf %47, %48 : vector<1x4xf32>
    %cst_60 = arith.constant 9.99999974E-6 : f32
    %50 = vector.broadcast %cst_60 : f32 to vector<1x4xf32>
    %51 = arith.addf %49, %50 : vector<1x4xf32>
    %52 = math.rsqrt %51 : vector<1x4xf32>
    %53 = vector.broadcast %52 : vector<1x4xf32> to vector<256x4xf32>
    %54 = arith.mulf %44, %53 : vector<256x4xf32>
    %cst_61 = arith.constant 0.000000e+00 : f32
    %55 = vector.broadcast %cst_61 : f32 to vector<256x4xf32>
    %56 = arith.maximumf %54, %55 : vector<256x4xf32>
    %57 = vector.shape_cast %56 : vector<256x4xf32> to vector<16x16x4xf32>
    %58 = arith.truncf %57 : vector<16x16x4xf32> to vector<16x16x4xbf16>
    %59 = vector.extract_strided_slice %58 {offsets = [0, 1, 0], sizes = [16, 1, 4], strides = [1, 1, 1]} : vector<16x16x4xbf16> to vector<16x1x4xbf16>
    %c1_62 = arith.constant 1 : index
    %c0_63 = arith.constant 0 : index
    %c0_64 = arith.constant 0 : index
    %60 = vector.load %arg5[%c1_62, %c0_63, %c0_64] : memref<18x16x12xbf16, #tpu.memory_space<vmem>>, vector<16x1x4xbf16>
    tpu.vector_store %arg5[%c1_62, %c0_63, %c0_64], %59 {strides = array<i32>} : memref<18x16x12xbf16, #tpu.memory_space<vmem>>, vector<16x1x4xbf16>,
    %61 = vector.extract_strided_slice %58 {offsets = [0, 0, 0], sizes = [16, 15, 4], strides = [1, 1, 1]} : vector<16x16x4xbf16> to vector<16x15x4xbf16>
    %c1_65 = arith.constant 1 : index
    %c1_66 = arith.constant 1 : index
    %c0_67 = arith.constant 0 : index
    %62 = vector.load %arg5[%c1_65, %c1_66, %c0_67] : memref<18x16x12xbf16, #tpu.memory_space<vmem>>, vector<16x15x4xbf16>
    tpu.vector_store %arg5[%c1_65, %c1_66, %c0_67], %61 {strides = array<i32>} : memref<18x16x12xbf16, #tpu.memory_space<vmem>>, vector<16x15x4xbf16>,
    %c1_68 = arith.constant 1 : index
    %c0_69 = arith.constant 0 : index
    %c4_70 = arith.constant 4 : index
    %63 = vector.load %arg5[%c1_68, %c0_69, %c4_70] : memref<18x16x12xbf16, #tpu.memory_space<vmem>>, vector<16x16x4xbf16>
    tpu.vector_store %arg5[%c1_68, %c0_69, %c4_70], %58 {strides = array<i32>} : memref<18x16x12xbf16, #tpu.memory_space<vmem>>, vector<16x16x4xbf16>,
    %64 = vector.extract_strided_slice %58 {offsets = [0, 1, 0], sizes = [16, 15, 4], strides = [1, 1, 1]} : vector<16x16x4xbf16> to vector<16x15x4xbf16>
    %c1_71 = arith.constant 1 : index
    %c0_72 = arith.constant 0 : index
    %c8_73 = arith.constant 8 : index
    %65 = vector.load %arg5[%c1_71, %c0_72, %c8_73] : memref<18x16x12xbf16, #tpu.memory_space<vmem>>, vector<16x15x4xbf16>
    tpu.vector_store %arg5[%c1_71, %c0_72, %c8_73], %64 {strides = array<i32>} : memref<18x16x12xbf16, #tpu.memory_space<vmem>>, vector<16x15x4xbf16>,
    %66 = vector.extract_strided_slice %58 {offsets = [0, 14, 0], sizes = [16, 1, 4], strides = [1, 1, 1]} : vector<16x16x4xbf16> to vector<16x1x4xbf16>
    %c1_74 = arith.constant 1 : index
    %c15_75 = arith.constant 15 : index
    %c8_76 = arith.constant 8 : index
    %67 = vector.load %arg5[%c1_74, %c15_75, %c8_76] : memref<18x16x12xbf16, #tpu.memory_space<vmem>>, vector<16x1x4xbf16>
    tpu.vector_store %arg5[%c1_74, %c15_75, %c8_76], %66 {strides = array<i32>} : memref<18x16x12xbf16, #tpu.memory_space<vmem>>, vector<16x1x4xbf16>,
    %c2_77 = arith.constant 2 : index
    %c0_78 = arith.constant 0 : index
    %c0_79 = arith.constant 0 : index
    %68 = vector.load %arg5[%c2_77, %c0_78, %c0_79] : memref<18x16x12xbf16, #tpu.memory_space<vmem>>, vector<1x16x12xbf16>
    %c0_80 = arith.constant 0 : index
    %c0_81 = arith.constant 0 : index
    %c0_82 = arith.constant 0 : index
    %69 = vector.load %arg5[%c0_80, %c0_81, %c0_82] : memref<18x16x12xbf16, #tpu.memory_space<vmem>>, vector<1x16x12xbf16>
    tpu.vector_store %arg5[%c0_80, %c0_81, %c0_82], %68 {strides = array<i32>} : memref<18x16x12xbf16, #tpu.memory_space<vmem>>, vector<1x16x12xbf16>,
    %c15_83 = arith.constant 15 : index
    %c0_84 = arith.constant 0 : index
    %c0_85 = arith.constant 0 : index
    %70 = vector.load %arg5[%c15_83, %c0_84, %c0_85] : memref<18x16x12xbf16, #tpu.memory_space<vmem>>, vector<1x16x12xbf16>
    %c17_86 = arith.constant 17 : index
    %c0_87 = arith.constant 0 : index
    %c0_88 = arith.constant 0 : index
    %71 = vector.load %arg5[%c17_86, %c0_87, %c0_88] : memref<18x16x12xbf16, #tpu.memory_space<vmem>>, vector<1x16x12xbf16>
    tpu.vector_store %arg5[%c17_86, %c0_87, %c0_88], %70 {strides = array<i32>} : memref<18x16x12xbf16, #tpu.memory_space<vmem>>, vector<1x16x12xbf16>,
    %c0_89 = arith.constant 0 : index
    %c0_90 = arith.constant 0 : index
    %c0_91 = arith.constant 0 : index
    %72 = vector.load %arg5[%c0_89, %c0_90, %c0_91] : memref<18x16x12xbf16, #tpu.memory_space<vmem>>, vector<16x16x12xbf16>
    %73 = vector.shape_cast %72 : vector<16x16x12xbf16> to vector<256x12xbf16>
    %c0_92 = arith.constant 0 : index
    %c0_93 = arith.constant 0 : index
    %c0_94 = arith.constant 0 : index
    %74 = vector.load %arg3[%c0_92, %c0_93, %c0_94] : memref<3x12x4xbf16, #tpu.memory_space<vmem>>, vector<1x12x4xbf16>
    %75 = vector.shape_cast %74 : vector<1x12x4xbf16> to vector<12x4xbf16>
    %cst_95 = arith.constant dense<0.000000e+00> : vector<256x4xf32>
    %76 = tpu.matmul %73, %75, %cst_95 {dimension_numbers = #tpu.dot_dimension_numbers<[1], [0], [0], [1], [0, 0, 1, 1], [], []>} : vector<256x12xbf16>, vector<12x4xbf16>, vector<256x4xf32> -> vector<256x4xf32>
    %c0_96 = arith.constant 0 : index
    %c0_97 = arith.constant 0 : index
    %77 = vector.load %arg6[%c0_96, %c0_97] : memref<256x4xf32, #tpu.memory_space<vmem>>, vector<256x4xf32>
    tpu.vector_store %arg6[%c0_96, %c0_97], %76 {strides = array<i32>} : memref<256x4xf32, #tpu.memory_space<vmem>>, vector<256x4xf32>,
    %c1_98 = arith.constant 1 : index
    %c0_99 = arith.constant 0 : index
    %c0_100 = arith.constant 0 : index
    %78 = vector.load %arg5[%c1_98, %c0_99, %c0_100] : memref<18x16x12xbf16, #tpu.memory_space<vmem>>, vector<16x16x12xbf16>
    %79 = vector.shape_cast %78 : vector<16x16x12xbf16> to vector<256x12xbf16>
    %c1_101 = arith.constant 1 : index
    %c0_102 = arith.constant 0 : index
    %c0_103 = arith.constant 0 : index
    %80 = vector.load %arg3[%c1_101, %c0_102, %c0_103] : memref<3x12x4xbf16, #tpu.memory_space<vmem>>, vector<1x12x4xbf16>
    %81 = vector.shape_cast %80 : vector<1x12x4xbf16> to vector<12x4xbf16>
    %cst_104 = arith.constant dense<0.000000e+00> : vector<256x4xf32>
    %82 = tpu.matmul %79, %81, %cst_104 {dimension_numbers = #tpu.dot_dimension_numbers<[1], [0], [0], [1], [0, 0, 1, 1], [], []>} : vector<256x12xbf16>, vector<12x4xbf16>, vector<256x4xf32> -> vector<256x4xf32>
    %c0_105 = arith.constant 0 : index
    %c0_106 = arith.constant 0 : index
    %83 = vector.load %arg6[%c0_105, %c0_106] : memref<256x4xf32, #tpu.memory_space<vmem>>, vector<256x4xf32>
    %84 = arith.addf %83, %82 : vector<256x4xf32>
    %c0_107 = arith.constant 0 : index
    %c0_108 = arith.constant 0 : index
    %85 = vector.load %arg6[%c0_107, %c0_108] : memref<256x4xf32, #tpu.memory_space<vmem>>, vector<256x4xf32>
    tpu.vector_store %arg6[%c0_107, %c0_108], %84 {strides = array<i32>} : memref<256x4xf32, #tpu.memory_space<vmem>>, vector<256x4xf32>,
    %c2_109 = arith.constant 2 : index
    %c0_110 = arith.constant 0 : index
    %c0_111 = arith.constant 0 : index
    %86 = vector.load %arg5[%c2_109, %c0_110, %c0_111] : memref<18x16x12xbf16, #tpu.memory_space<vmem>>, vector<16x16x12xbf16>
    %87 = vector.shape_cast %86 : vector<16x16x12xbf16> to vector<256x12xbf16>
    %c2_112 = arith.constant 2 : index
    %c0_113 = arith.constant 0 : index
    %c0_114 = arith.constant 0 : index
    %88 = vector.load %arg3[%c2_112, %c0_113, %c0_114] : memref<3x12x4xbf16, #tpu.memory_space<vmem>>, vector<1x12x4xbf16>
    %89 = vector.shape_cast %88 : vector<1x12x4xbf16> to vector<12x4xbf16>
    %cst_115 = arith.constant dense<0.000000e+00> : vector<256x4xf32>
    %90 = tpu.matmul %87, %89, %cst_115 {dimension_numbers = #tpu.dot_dimension_numbers<[1], [0], [0], [1], [0, 0, 1, 1], [], []>} : vector<256x12xbf16>, vector<12x4xbf16>, vector<256x4xf32> -> vector<256x4xf32>
    %c0_116 = arith.constant 0 : index
    %c0_117 = arith.constant 0 : index
    %91 = vector.load %arg6[%c0_116, %c0_117] : memref<256x4xf32, #tpu.memory_space<vmem>>, vector<256x4xf32>
    %92 = arith.addf %91, %90 : vector<256x4xf32>
    %c0_118 = arith.constant 0 : index
    %c0_119 = arith.constant 0 : index
    %93 = vector.load %arg6[%c0_118, %c0_119] : memref<256x4xf32, #tpu.memory_space<vmem>>, vector<256x4xf32>
    tpu.vector_store %arg6[%c0_118, %c0_119], %92 {strides = array<i32>} : memref<256x4xf32, #tpu.memory_space<vmem>>, vector<256x4xf32>,
    %c0_120 = arith.constant 0 : index
    %c0_121 = arith.constant 0 : index
    %94 = vector.load %arg6[%c0_120, %c0_121] : memref<256x4xf32, #tpu.memory_space<vmem>>, vector<256x4xf32>
    %cst_122 = arith.constant dense<0.000000e+00> : vector<4xf32>
    %95 = vector.multi_reduction <add>, %94, %cst_122 [0] : vector<256x4xf32> to vector<4xf32>
    %96 = vector.shape_cast %95 : vector<4xf32> to vector<1x4xf32>
    %cst_123 = arith.constant 2.560000e+02 : f32
    %97 = vector.broadcast %cst_123 : f32 to vector<1x4xf32>
    %98 = arith.divf %96, %97 : vector<1x4xf32>
    %99 = vector.broadcast %98 : vector<1x4xf32> to vector<256x4xf32>
    %100 = arith.subf %94, %99 : vector<256x4xf32>
    %101 = arith.mulf %100, %100 : vector<256x4xf32>
    %cst_124 = arith.constant dense<0.000000e+00> : vector<4xf32>
    %102 = vector.multi_reduction <add>, %101, %cst_124 [0] : vector<256x4xf32> to vector<4xf32>
    %103 = vector.shape_cast %102 : vector<4xf32> to vector<1x4xf32>
    %cst_125 = arith.constant 2.560000e+02 : f32
    %104 = vector.broadcast %cst_125 : f32 to vector<1x4xf32>
    %105 = arith.divf %103, %104 : vector<1x4xf32>
    %cst_126 = arith.constant 9.99999974E-6 : f32
    %106 = vector.broadcast %cst_126 : f32 to vector<1x4xf32>
    %107 = arith.addf %105, %106 : vector<1x4xf32>
    %108 = math.rsqrt %107 : vector<1x4xf32>
    %109 = vector.broadcast %108 : vector<1x4xf32> to vector<256x4xf32>
    %110 = arith.mulf %100, %109 : vector<256x4xf32>
    %111 = vector.shape_cast %110 : vector<256x4xf32> to vector<16x16x4xf32>
    %c0_127 = arith.constant 0 : index
    %c0_128 = arith.constant 0 : index
    %c0_129 = arith.constant 0 : index
    %c0_130 = arith.constant 0 : index
    %112 = vector.load %arg1[%c0_127, %c0_128, %c0_129, %c0_130] : memref<1x16x16x4xf32, #tpu.memory_space<vmem>>, vector<1x16x16x4xf32>
    %113 = vector.shape_cast %112 : vector<1x16x16x4xf32> to vector<16x16x4xf32>
    %114 = arith.addf %113, %111 : vector<16x16x4xf32>
    %c0_131 = arith.constant 0 : index
    %c0_132 = arith.constant 0 : index
    %c0_133 = arith.constant 0 : index
    %c0_134 = arith.constant 0 : index
    %115 = vector.load %arg4[%c0_131, %c0_132, %c0_133, %c0_134] : memref<1x16x16x4xf32, #tpu.memory_space<vmem>>, vector<1x16x16x4xf32>
    %116 = vector.shape_cast %115 : vector<1x16x16x4xf32> to vector<16x16x4xf32>
    %117 = vector.shape_cast %114 : vector<16x16x4xf32> to vector<1x16x16x4xf32>
    tpu.vector_store %arg4[%c0_131, %c0_132, %c0_133, %c0_134], %117 {strides = array<i32>} : memref<1x16x16x4xf32, #tpu.memory_space<vmem>>, vector<1x16x16x4xf32>,
    return
  }
  func.func @transform_0(%arg0: i32) -> (i32, i32, i32, i32) {
    %c0_i32 = arith.constant 0 : i32
    %c0_i32_0 = arith.constant 0 : i32
    %c0_i32_1 = arith.constant 0 : i32
    %c0_i32_2 = arith.constant 0 : i32
    return %arg0, %c0_i32, %c0_i32_0, %c0_i32_1 : i32, i32, i32, i32
  }
  func.func @transform_1(%arg0: i32) -> (i32, i32, i32) {
    %c0_i32 = arith.constant 0 : i32
    %c0_i32_0 = arith.constant 0 : i32
    %c0_i32_1 = arith.constant 0 : i32
    %c0_i32_2 = arith.constant 0 : i32
    return %c0_i32, %c0_i32_0, %c0_i32_1 : i32, i32, i32
  }
  func.func @transform_2(%arg0: i32) -> (i32, i32, i32) {
    %c0_i32 = arith.constant 0 : i32
    %c0_i32_0 = arith.constant 0 : i32
    %c0_i32_1 = arith.constant 0 : i32
    %c0_i32_2 = arith.constant 0 : i32
    return %c0_i32, %c0_i32_0, %c0_i32_1 : i32, i32, i32
  }
  func.func @transform_3(%arg0: i32) -> (i32, i32, i32, i32) {
    %c0_i32 = arith.constant 0 : i32
    %c0_i32_0 = arith.constant 0 : i32
    %c0_i32_1 = arith.constant 0 : i32
    %c0_i32_2 = arith.constant 0 : i32
    return %arg0, %c0_i32, %c0_i32_0, %c0_i32_1 : i32, i32, i32, i32
  }
}

</mosaic_0001>

<llo_original>
// kernel: resnet_block_forward.1
$region0: #{resnet_block_forward.1}
  #allocation0 [shape = 'u32[]', space=smem, size = 0x4, offset = 0x4, fixed_abs, tag = 'smem constant byte address 0x4 - core index']
  #allocation1 [shape = 'u32[144,128]{1,0:T(1,128)}', space=vmem, size = 0x12000, scoped, tag = 'internal scratch']
  #allocation2 [shape = 'bf16[18,16,12]{2,1,0:T(16,128)(2,1)}', space=vmem, size = 0x12000, scoped, tag = 'scratch operand']
  #allocation3 [shape = 'f32[256,4]{1,0:T(8,128)}', space=vmem, size = 0x20000, scoped, tag = 'scratch operand']
  %s0 = inlined_call_operand.hbm [shape: f32[2,16,16,4], index: 0, kind: input, shape index: {}]
  %s1 = inlined_call_operand.hbm [shape: bf16[3,12,4], index: 1, kind: input, shape index: {}]
  %s2 = inlined_call_operand.hbm [shape: bf16[3,12,4], index: 2, kind: input, shape index: {}]
  %s3 = inlined_call_operand.hbm [shape: f32[2,16,16,4], index: 3, kind: output, shape index: {}]
  %s4 = sld [smem:[#allocation0]]
  $region57: #{resnet_block_forward.1} parent=0
    _
  %s6 = ssub.s32 1, %s4
  %s7 = scalar_select 0, %s6, %s4
  $region1: #{resnet_block_forward.1} parent=0
    #allocation4 [shape = 'u8[262144]{0}', space=vmem, size = 0x40000, scoped, tag = 'input window, operand 0']
    #allocation5 [shape = 's32[2]{0}', space=sflag, size = 0x8, scoped, tag = 'scoped memory for resnet_block_forward.1']
    #allocation6 [shape = 's32[2]{0}', space=sflag, size = 0x8, scoped, tag = 'scoped memory for resnet_block_forward.1']
    #allocation7 [shape = 'u8[12288]{0}', space=vmem, size = 0x3000, scoped, tag = 'input window, operand 1, single buffered']
    #allocation8 [shape = 's32[1]{0}', space=sflag, size = 0x4, scoped, tag = 'scoped memory for resnet_block_forward.1']
    #allocation9 [shape = 'u8[12288]{0}', space=vmem, size = 0x3000, scoped, tag = 'input window, operand 2, single buffered']
    #allocation10 [shape = 'u8[262144]{0}', space=vmem, size = 0x40000, scoped, tag = 'output window, operand 0']
    %8 = vsyncpa [#allocation5], 0
    %s9 = scalar_lea.sflag [#allocation5], 1
    %10 = vsyncpa %s9, 0
    %11 = vsyncpa [#allocation8], 0
    %12 = vsyncpa [#allocation6], 0
    %s13 = scalar_lea.sflag [#allocation6], 1
    %14 = vsyncpa %s13, 0
    loop: start=0, step=1, limit=4
    $region2: #{resnet_block_forward.1} parent=1 // loop_pre_header
      _
    $region3: #{resnet_block_forward.1} parent=1 // loop_header
      %s16 = sphi 0, %s20
      %p17 = scmp.ge.s32.totalorder %s16, 4
      %s26 = sphi 0, %s28
      %s29 = sphi 0, %s26
      %s30 = sphi 0, %s29
      %s46 = sphi 0, %s30
      %s50 = sphi 0, %s50
      %s52 = sphi 0, %s50
      %s53 = sphi 0, %s52
      %s67 = sphi 0, %s53
      %s71 = sphi 0, %s71
      %s73 = sphi 0, %s71
      %s74 = sphi 0, %s73
      %s88 = sphi 0, %s74
      %s94 = sphi 0, %s96
      %s97 = sphi 0, %s94
      %s98 = sphi 0, %s97
      %s114 = sphi 0, %s98
    $region4: #{resnet_block_forward.1} parent=1 // loop_header_branch
      %19 = sbr.rel (%p17) target = $region8
    $region5: #{resnet_block_forward.1} parent=1 // loop_body
      %s21 = ssub.s32 %s16, 1
      %s22 = ssub.s32 %s16, 2
      %s23 = sadd.s32 %s16, 1
      %s24 = ssub.s32 %s16, %s23
      %p25 = scmp.eq.s32.totalorder %s24, 0
      %s27 = sadd.s32 %s26, 1
      %s28 = scalar_select %p25, %s26, %s27
      %p31 = pneg %p25
      %p32 = scmp.eq.s32.totalorder %s16, 1
      %p33 = por %p31, %p32
      %p34 = scmp.ne.s32.totalorder %s26, %s29
      %p35 = scmp.eq.s32.totalorder %s16, 0
      %p36 = por %p34, %p35
      %p37 = scmp.ne.s32.totalorder %s26, %s29
      %p38 = scmp.eq.s32.totalorder %s21, 1
      %p39 = por %p37, %p38
      %p40 = scmp.ne.s32.totalorder %s29, %s30
      %p41 = scmp.eq.s32.totalorder %s21, 0
      %p42 = por %p40, %p41
      %p43 = scmp.ne.s32.totalorder %s29, %s30
      %p44 = scmp.eq.s32.totalorder %s22, 1
      %p45 = por %p43, %p44
      %p47 = scmp.ne.s32.totalorder %s30, %s46
      %p48 = scmp.eq.s32.totalorder %s22, 0
      %p49 = por %p47, %p48
      %s51 = sadd.s32 %s50, 1
      %p54 = scmp.eq.s32.totalorder %s16, 1
      %p55 = scmp.ne.s32.totalorder %s50, %s52
      %p56 = scmp.eq.s32.totalorder %s16, 0
      %p57 = por %p55, %p56
      %p58 = scmp.ne.s32.totalorder %s50, %s52
      %p59 = scmp.eq.s32.totalorder %s21, 1
      %p60 = por %p58, %p59
      %p61 = scmp.ne.s32.totalorder %s52, %s53
      %p62 = scmp.eq.s32.totalorder %s21, 0
      %p63 = por %p61, %p62
      %p64 = scmp.ne.s32.totalorder %s52, %s53
      %p65 = scmp.eq.s32.totalorder %s22, 1
      %p66 = por %p64, %p65
      %p68 = scmp.ne.s32.totalorder %s53, %s67
      %p69 = scmp.eq.s32.totalorder %s22, 0
      %p70 = por %p68, %p69
      %s72 = sadd.s32 %s71, 1
      %p75 = scmp.eq.s32.totalorder %s16, 1
      %p76 = scmp.ne.s32.totalorder %s71, %s73
      %p77 = scmp.eq.s32.totalorder %s16, 0
      %p78 = por %p76, %p77
      %p79 = scmp.ne.s32.totalorder %s71, %s73
      %p80 = scmp.eq.s32.totalorder %s21, 1
      %p81 = por %p79, %p80
      %p82 = scmp.ne.s32.totalorder %s73, %s74
      %p83 = scmp.eq.s32.totalorder %s21, 0
      %p84 = por %p82, %p83
      %p85 = scmp.ne.s32.totalorder %s73, %s74
      %p86 = scmp.eq.s32.totalorder %s22, 1
      %p87 = por %p85, %p86
      %p89 = scmp.ne.s32.totalorder %s74, %s88
      %p90 = scmp.eq.s32.totalorder %s22, 0
      %p91 = por %p89, %p90
      %s92 = ssub.s32 %s16, %s23
      %p93 = scmp.eq.s32.totalorder %s92, 0
      %s95 = sadd.s32 %s94, 1
      %s96 = scalar_select %p93, %s94, %s95
      %p99 = pneg %p93
      %p100 = scmp.eq.s32.totalorder %s16, 1
      %p101 = por %p99, %p100
      %p102 = scmp.ne.s32.totalorder %s94, %s97
      %p103 = scmp.eq.s32.totalorder %s16, 0
      %p104 = por %p102, %p103
      %p105 = scmp.ne.s32.totalorder %s94, %s97
      %p106 = scmp.eq.s32.totalorder %s21, 1
      %p107 = por %p105, %p106
      %p108 = scmp.ne.s32.totalorder %s97, %s98
      %p109 = scmp.eq.s32.totalorder %s21, 0
      %p110 = por %p108, %p109
      %p111 = scmp.ne.s32.totalorder %s97, %s98
      %p112 = scmp.eq.s32.totalorder %s22, 1
      %p113 = por %p111, %p112
      %p115 = scmp.ne.s32.totalorder %s98, %s114
      %p116 = scmp.eq.s32.totalorder %s22, 0
      %p117 = por %p115, %p116
      %p118 = scmp.le.s32.totalorder 1, %s16
      %p119 = scmp.lt.s32.totalorder %s16, 3
      %p120 = pnand %p118, %p119
      %p121 = pneg %p120
      // Predicated region
      $region9: #{resnet_block_forward.1} parent=5 // pred_check
        _
      $region10: #{resnet_block_forward.1} parent=5 // pred_check_branch
        %123 = sbr.rel (%p120) target = $region12
      $region11: #{resnet_block_forward.1} parent=5 // pred_region
        %s124 = ssub.s32 %s16, 1
        // Predicated region
        $region13: #{resnet_block_forward.1} parent=11 // pred_check
          %p125 = pneg %p63
        $region14: #{resnet_block_forward.1} parent=11 // pred_check_branch
          %127 = sbr.rel (%p125) target = $region16
        $region15: #{resnet_block_forward.1} parent=11 // pred_region
          %s129 = ssub.s32 384, 384
          %130 = vsyncadd [#allocation8], %s129
          %s131 = sshll.u32 [#allocation7], 4
          %s132 = int_to_ptr.vmem [resolvable:$true] %s131
          %137 = dma.hbm_to_vmem [thread:$0]  %s1, 384, %s132, [#allocation8], 64, 64, 4
        $region16: #{resnet_block_forward.1} parent=11 // pred_fallthru
          _
        // Predicated region
        $region17: #{resnet_block_forward.1} parent=11 // pred_check
          %p138 = pneg %p84
        $region18: #{resnet_block_forward.1} parent=11 // pred_check_branch
          %140 = sbr.rel (%p138) target = $region20
        $region19: #{resnet_block_forward.1} parent=11 // pred_region
          %s142 = ssub.s32 384, 384
          %143 = vsyncadd [#allocation8], %s142
          %s144 = sshll.u32 [#allocation9], 4
          %s145 = int_to_ptr.vmem [resolvable:$true] %s144
          %150 = dma.hbm_to_vmem [thread:$0]  %s2, 384, %s145, [#allocation8], 64, 64, 4
        $region20: #{resnet_block_forward.1} parent=11 // pred_fallthru
          _
      $region12: #{resnet_block_forward.1} parent=5 // pred_fallthru
        _
      %p151 = scmp.lt.s32.totalorder %s16, 2
      // Predicated region
      $region21: #{resnet_block_forward.1} parent=5 // pred_check
        %p152 = pneg %p151
      $region22: #{resnet_block_forward.1} parent=5 // pred_check_branch
        %154 = sbr.rel (%p152) target = $region24
      $region23: #{resnet_block_forward.1} parent=5 // pred_region
        // Predicated region
        $region25: #{resnet_block_forward.1} parent=23 // pred_check
          %p155 = pneg %p36
        $region26: #{resnet_block_forward.1} parent=23 // pred_check_branch
          %157 = sbr.rel (%p155) target = $region28
        $region27: #{resnet_block_forward.1} parent=23 // pred_region
          %s158 = sand.u32 %s26, 1
          %s159 = scalar_lea.sflag [#allocation5], %s158
          %s160 = sand.u32 %s26, 1
          %s161 = smul.addr %s160, 256
          %s162 = scalar_lea.vmem [#allocation4], %s161
          %s164 = ssub.s32 4096, 4096
          %165 = vsyncadd %s159, %s164
          %s166 = smul.addr %s16, 32
          %s167 = smul.addr %s166, 128
          %s168 = scalar_lea.hbm %s0, %s167
          %s169 = sshll.u32 %s162, 4
          %s170 = int_to_ptr.vmem [resolvable:$true] %s169
          %175 = dma.hbm_to_vmem [thread:$0]  %s168, 4096, %s170, %s159, 128, 128, 8
        $region28: #{resnet_block_forward.1} parent=23 // pred_fallthru
          _
      $region24: #{resnet_block_forward.1} parent=5 // pred_fallthru
        _
      %p176 = scmp.le.s32.totalorder 1, %s16
      %p177 = scmp.lt.s32.totalorder %s16, 3
      %p178 = pnand %p176, %p177
      %p179 = pneg %p178
      // Predicated region
      $region29: #{resnet_block_forward.1} parent=5 // pred_check
        _
      $region30: #{resnet_block_forward.1} parent=5 // pred_check_branch
        %181 = sbr.rel (%p178) target = $region32
      $region31: #{resnet_block_forward.1} parent=5 // pred_region
        %s182 = ssub.s32 %s16, 1
        %s183 = sand.u32 %s29, 1
        %s184 = scalar_lea.sflag [#allocation5], %s183
        %s185 = sand.u32 %s29, 1
        %s186 = smul.addr %s185, 256
        %s187 = scalar_lea.vmem [#allocation4], %s186
        // Predicated region
        $region33: #{resnet_block_forward.1} parent=31 // pred_check
          %p188 = pneg %p42
        $region34: #{resnet_block_forward.1} parent=31 // pred_check_branch
          %190 = sbr.rel (%p188) target = $region36
        $region35: #{resnet_block_forward.1} parent=31 // pred_region
          %191 = dma.done %s184, 4096
        $region36: #{resnet_block_forward.1} parent=31 // pred_fallthru
          _
        // Predicated region
        $region37: #{resnet_block_forward.1} parent=31 // pred_check
          %p192 = pneg %p63
        $region38: #{resnet_block_forward.1} parent=31 // pred_check_branch
          %194 = sbr.rel (%p192) target = $region40
        $region39: #{resnet_block_forward.1} parent=31 // pred_region
          %195 = dma.done [#allocation8], 384
        $region40: #{resnet_block_forward.1} parent=31 // pred_fallthru
          _
        // Predicated region
        $region41: #{resnet_block_forward.1} parent=31 // pred_check
          %p196 = pneg %p84
        $region42: #{resnet_block_forward.1} parent=31 // pred_check_branch
          %198 = sbr.rel (%p196) target = $region44
        $region43: #{resnet_block_forward.1} parent=31 // pred_region
          %199 = dma.done [#allocation8], 384
        $region44: #{resnet_block_forward.1} parent=31 // pred_fallthru
          _
        %s200 = sand.u32 %s29, 1
        %s201 = scalar_lea.sflag [#allocation5], %s200
        %s202 = sand.u32 %s29, 1
        %s203 = smul.addr %s202, 256
        %s204 = scalar_lea.vmem [#allocation4], %s203
        %p205 = pneg %p42
        %p206 = pneg %p39
        %p207 = pneg %p63
        %p208 = pneg %p60
        %p209 = pneg %p84
        %p210 = pneg %p81
        %p211 = pneg %p110
        %p212 = pneg %p107
        %s213 = sand.u32 %s97, 1
        %s214 = scalar_lea.sflag [#allocation6], %s213
        %s215 = sand.u32 %s97, 1
        %s216 = smul.addr %s215, 256
        %s217 = scalar_lea.vmem [#allocation10], %s216
        %v219 = vld [vmem:[%s187] sm:$0xff]
        %v220 = vld [vmem:[%s187 + $0x8] sm:$0xff]
        %v221 = vld [vmem:[%s187 + $0x10] sm:$0xff]
        %v222 = vld [vmem:[%s187 + $0x18] sm:$0xff]
        %v223 = vld [vmem:[%s187 + $0x20] sm:$0xff]
        %v224 = vld [vmem:[%s187 + $0x28] sm:$0xff]
        %v225 = vld [vmem:[%s187 + $0x30] sm:$0xff]
        %v226 = vld [vmem:[%s187 + $0x38] sm:$0xff]
        %v227 = vld [vmem:[%s187 + $0x40] sm:$0xff]
        %v228 = vld [vmem:[%s187 + $0x48] sm:$0xff]
        %v229 = vld [vmem:[%s187 + $0x50] sm:$0xff]
        %v230 = vld [vmem:[%s187 + $0x58] sm:$0xff]
        %v231 = vld [vmem:[%s187 + $0x60] sm:$0xff]
        %v232 = vld [vmem:[%s187 + $0x68] sm:$0xff]
        %v233 = vld [vmem:[%s187 + $0x70] sm:$0xff]
        %v234 = vld [vmem:[%s187 + $0x78] sm:$0xff]
        %v235 = vld [vmem:[%s187 + $0x80] sm:$0xff]
        %v236 = vld [vmem:[%s187 + $0x88] sm:$0xff]
        %v237 = vld [vmem:[%s187 + $0x90] sm:$0xff]
        %v238 = vld [vmem:[%s187 + $0x98] sm:$0xff]
        %v239 = vld [vmem:[%s187 + $0xa0] sm:$0xff]
        %v240 = vld [vmem:[%s187 + $0xa8] sm:$0xff]
        %v241 = vld [vmem:[%s187 + $0xb0] sm:$0xff]
        %v242 = vld [vmem:[%s187 + $0xb8] sm:$0xff]
        %v243 = vld [vmem:[%s187 + $0xc0] sm:$0xff]
        %v244 = vld [vmem:[%s187 + $0xc8] sm:$0xff]
        %v245 = vld [vmem:[%s187 + $0xd0] sm:$0xff]
        %v246 = vld [vmem:[%s187 + $0xd8] sm:$0xff]
        %v247 = vld [vmem:[%s187 + $0xe0] sm:$0xff]
        %v248 = vld [vmem:[%s187 + $0xe8] sm:$0xff]
        %v249 = vld [vmem:[%s187 + $0xf0] sm:$0xff]
        %v250 = vld [vmem:[%s187 + $0xf8] sm:$0xff]
        %v251 = vpack.c.bf16 %v220, %v219
        %v252 = vpack.c.bf16 %v222, %v221
        %v253 = vpack.c.bf16 %v224, %v223
        %v254 = vpack.c.bf16 %v226, %v225
        %v255 = vpack.c.bf16 %v228, %v227
        %v256 = vpack.c.bf16 %v230, %v229
        %v257 = vpack.c.bf16 %v232, %v231
        %v258 = vpack.c.bf16 %v234, %v233
        %v259 = vpack.c.bf16 %v236, %v235
        %v260 = vpack.c.bf16 %v238, %v237
        %v261 = vpack.c.bf16 %v240, %v239
        %v262 = vpack.c.bf16 %v242, %v241
        %v263 = vpack.c.bf16 %v244, %v243
        %v264 = vpack.c.bf16 %v246, %v245
        %v265 = vpack.c.bf16 %v248, %v247
        %v266 = vpack.c.bf16 %v250, %v249
        %v268 = vshrl.u32 %v251, 16
        %v271 = vshrl.u32 %v252, 16
        %v274 = vshrl.u32 %v253, 16
        %v277 = vshrl.u32 %v254, 16
        %v280 = vshrl.u32 %v255, 16
        %v283 = vshrl.u32 %v256, 16
        %v286 = vshrl.u32 %v257, 16
        %v289 = vshrl.u32 %v258, 16
        %v292 = vshrl.u32 %v259, 16
        %v295 = vshrl.u32 %v260, 16
        %v298 = vshrl.u32 %v261, 16
        %v301 = vshrl.u32 %v262, 16
        %v304 = vshrl.u32 %v263, 16
        %v307 = vshrl.u32 %v264, 16
        %v310 = vshrl.u32 %v265, 16
        %v313 = vshrl.u32 %v266, 16
        %s331 = scalar_lea.vmem [#allocation2], 8
        %vm332 = vcmask 24576
        %vm333 = vsmask.f32 256
        %vm334 = vmand %vm332, %vm333
        %v335 = vld [vmem:[%s331] sm:$0x1]
        %v336 = vsel %vm334, %v268, %v335
        %337 = vst [vmem:[%s331] sm:$0x1] %v336
        %v338 = vld [vmem:[%s331 + $0x8] sm:$0x1]
        %v339 = vsel %vm334, %v271, %v338
        %340 = vst [vmem:[%s331 + $0x8] sm:$0x1] %v339
        %v341 = vld [vmem:[%s331 + $0x10] sm:$0x1]
        %v342 = vsel %vm334, %v274, %v341
        %343 = vst [vmem:[%s331 + $0x10] sm:$0x1] %v342
        %v344 = vld [vmem:[%s331 + $0x18] sm:$0x1]
        %v345 = vsel %vm334, %v277, %v344
        %346 = vst [vmem:[%s331 + $0x18] sm:$0x1] %v345
        %v347 = vld [vmem:[%s331 + $0x20] sm:$0x1]
        %v348 = vsel %vm334, %v280, %v347
        %349 = vst [vmem:[%s331 + $0x20] sm:$0x1] %v348
        %v350 = vld [vmem:[%s331 + $0x28] sm:$0x1]
        %v351 = vsel %vm334, %v283, %v350
        %352 = vst [vmem:[%s331 + $0x28] sm:$0x1] %v351
        %v353 = vld [vmem:[%s331 + $0x30] sm:$0x1]
        %v354 = vsel %vm334, %v286, %v353
        %355 = vst [vmem:[%s331 + $0x30] sm:$0x1] %v354
        %v356 = vld [vmem:[%s331 + $0x38] sm:$0x1]
        %v357 = vsel %vm334, %v289, %v356
        %358 = vst [vmem:[%s331 + $0x38] sm:$0x1] %v357
        %v359 = vld [vmem:[%s331 + $0x40] sm:$0x1]
        %v360 = vsel %vm334, %v292, %v359
        %361 = vst [vmem:[%s331 + $0x40] sm:$0x1] %v360
        %v362 = vld [vmem:[%s331 + $0x48] sm:$0x1]
        %v363 = vsel %vm334, %v295, %v362
        %364 = vst [vmem:[%s331 + $0x48] sm:$0x1] %v363
        %v365 = vld [vmem:[%s331 + $0x50] sm:$0x1]
        %v366 = vsel %vm334, %v298, %v365
        %367 = vst [vmem:[%s331 + $0x50] sm:$0x1] %v366
        %v368 = vld [vmem:[%s331 + $0x58] sm:$0x1]
        %v369 = vsel %vm334, %v301, %v368
        %370 = vst [vmem:[%s331 + $0x58] sm:$0x1] %v369
        %v371 = vld [vmem:[%s331 + $0x60] sm:$0x1]
        %v372 = vsel %vm334, %v304, %v371
        %373 = vst [vmem:[%s331 + $0x60] sm:$0x1] %v372
        %v374 = vld [vmem:[%s331 + $0x68] sm:$0x1]
        %v375 = vsel %vm334, %v307, %v374
        %376 = vst [vmem:[%s331 + $0x68] sm:$0x1] %v375
        %v377 = vld [vmem:[%s331 + $0x70] sm:$0x1]
        %v378 = vsel %vm334, %v310, %v377
        %379 = vst [vmem:[%s331 + $0x70] sm:$0x1] %v378
        %v380 = vld [vmem:[%s331 + $0x78] sm:$0x1]
        %v381 = vsel %vm334, %v313, %v380
        %382 = vst [vmem:[%s331 + $0x78] sm:$0x1] %v381
        %v383 = vrot.slane %v268, 7
        %v384 = vshll.u32 %v251, 16
        %v386 = vor.u32 %v383, %v384
        %v387 = vrot.slane %v271, 7
        %v388 = vshll.u32 %v252, 16
        %v390 = vor.u32 %v387, %v388
        %v391 = vrot.slane %v274, 7
        %v392 = vshll.u32 %v253, 16
        %v394 = vor.u32 %v391, %v392
        %v395 = vrot.slane %v277, 7
        %v396 = vshll.u32 %v254, 16
        %v398 = vor.u32 %v395, %v396
        %v399 = vrot.slane %v280, 7
        %v400 = vshll.u32 %v255, 16
        %v402 = vor.u32 %v399, %v400
        %v403 = vrot.slane %v283, 7
        %v404 = vshll.u32 %v256, 16
        %v406 = vor.u32 %v403, %v404
        %v407 = vrot.slane %v286, 7
        %v408 = vshll.u32 %v257, 16
        %v410 = vor.u32 %v407, %v408
        %v411 = vrot.slane %v289, 7
        %v412 = vshll.u32 %v258, 16
        %v414 = vor.u32 %v411, %v412
        %v415 = vrot.slane %v292, 7
        %v416 = vshll.u32 %v259, 16
        %v418 = vor.u32 %v415, %v416
        %v419 = vrot.slane %v295, 7
        %v420 = vshll.u32 %v260, 16
        %v422 = vor.u32 %v419, %v420
        %v423 = vrot.slane %v298, 7
        %v424 = vshll.u32 %v261, 16
        %v426 = vor.u32 %v423, %v424
        %v427 = vrot.slane %v301, 7
        %v428 = vshll.u32 %v262, 16
        %v430 = vor.u32 %v427, %v428
        %v431 = vrot.slane %v304, 7
        %v432 = vshll.u32 %v263, 16
        %v434 = vor.u32 %v431, %v432
        %v435 = vrot.slane %v307, 7
        %v436 = vshll.u32 %v264, 16
        %v438 = vor.u32 %v435, %v436
        %v439 = vrot.slane %v310, 7
        %v440 = vshll.u32 %v265, 16
        %v442 = vor.u32 %v439, %v440
        %v443 = vrot.slane %v313, 7
        %v444 = vshll.u32 %v266, 16
        %v446 = vor.u32 %v443, %v444
        %vm463 = vcmask 31744
        %vm464 = vsmask.f32 7938
        %vm465 = vmand %vm463, %vm464
        %v466 = vld [vmem:[%s331] sm:$0xff]
        %v467 = vsel %vm465, %v386, %v466
        %468 = vst [vmem:[%s331] sm:$0xff] %v467
        %v469 = vld [vmem:[%s331 + $0x8] sm:$0xff]
        %v470 = vsel %vm465, %v390, %v469
        %471 = vst [vmem:[%s331 + $0x8] sm:$0xff] %v470
        %v472 = vld [vmem:[%s331 + $0x10] sm:$0xff]
        %v473 = vsel %vm465, %v394, %v472
        %474 = vst [vmem:[%s331 + $0x10] sm:$0xff] %v473
        %v475 = vld [vmem:[%s331 + $0x18] sm:$0xff]
        %v476 = vsel %vm465, %v398, %v475
        %477 = vst [vmem:[%s331 + $0x18] sm:$0xff] %v476
        %v478 = vld [vmem:[%s331 + $0x20] sm:$0xff]
        %v479 = vsel %vm465, %v402, %v478
        %480 = vst [vmem:[%s331 + $0x20] sm:$0xff] %v479
        %v481 = vld [vmem:[%s331 + $0x28] sm:$0xff]
        %v482 = vsel %vm465, %v406, %v481
        %483 = vst [vmem:[%s331 + $0x28] sm:$0xff] %v482
        %v484 = vld [vmem:[%s331 + $0x30] sm:$0xff]
        %v485 = vsel %vm465, %v410, %v484
        %486 = vst [vmem:[%s331 + $0x30] sm:$0xff] %v485
        %v487 = vld [vmem:[%s331 + $0x38] sm:$0xff]
        %v488 = vsel %vm465, %v414, %v487
        %489 = vst [vmem:[%s331 + $0x38] sm:$0xff] %v488
        %v490 = vld [vmem:[%s331 + $0x40] sm:$0xff]
        %v491 = vsel %vm465, %v418, %v490
        %492 = vst [vmem:[%s331 + $0x40] sm:$0xff] %v491
        %v493 = vld [vmem:[%s331 + $0x48] sm:$0xff]
        %v494 = vsel %vm465, %v422, %v493
        %495 = vst [vmem:[%s331 + $0x48] sm:$0xff] %v494
        %v496 = vld [vmem:[%s331 + $0x50] sm:$0xff]
        %v497 = vsel %vm465, %v426, %v496
        %498 = vst [vmem:[%s331 + $0x50] sm:$0xff] %v497
        %v499 = vld [vmem:[%s331 + $0x58] sm:$0xff]
        %v500 = vsel %vm465, %v430, %v499
        %501 = vst [vmem:[%s331 + $0x58] sm:$0xff] %v500
        %v502 = vld [vmem:[%s331 + $0x60] sm:$0xff]
        %v503 = vsel %vm465, %v434, %v502
        %504 = vst [vmem:[%s331 + $0x60] sm:$0xff] %v503
        %v505 = vld [vmem:[%s331 + $0x68] sm:$0xff]
        %v506 = vsel %vm465, %v438, %v505
        %507 = vst [vmem:[%s331 + $0x68] sm:$0xff] %v506
        %v508 = vld [vmem:[%s331 + $0x70] sm:$0xff]
        %v509 = vsel %vm465, %v442, %v508
        %510 = vst [vmem:[%s331 + $0x70] sm:$0xff] %v509
        %v511 = vld [vmem:[%s331 + $0x78] sm:$0xff]
        %v512 = vsel %vm465, %v446, %v511
        %513 = vst [vmem:[%s331 + $0x78] sm:$0xff] %v512
        %530 = vrot.lane.b32.xlu0 %v251, 4
        %v531 = vpop.permute.xlu0 %530
        %532 = vrot.lane.b32.xlu0 %v252, 4
        %v533 = vpop.permute.xlu0 %532
        %534 = vrot.lane.b32.xlu0 %v253, 4
        %v535 = vpop.permute.xlu0 %534
        %536 = vrot.lane.b32.xlu0 %v254, 4
        %v537 = vpop.permute.xlu0 %536
        %538 = vrot.lane.b32.xlu0 %v255, 4
        %v539 = vpop.permute.xlu0 %538
        %540 = vrot.lane.b32.xlu0 %v256, 4
        %v541 = vpop.permute.xlu0 %540
        %542 = vrot.lane.b32.xlu0 %v257, 4
        %v543 = vpop.permute.xlu0 %542
        %544 = vrot.lane.b32.xlu0 %v258, 4
        %v545 = vpop.permute.xlu0 %544
        %546 = vrot.lane.b32.xlu0 %v259, 4
        %v547 = vpop.permute.xlu0 %546
        %548 = vrot.lane.b32.xlu0 %v260, 4
        %v549 = vpop.permute.xlu0 %548
        %550 = vrot.lane.b32.xlu0 %v261, 4
        %v551 = vpop.permute.xlu0 %550
        %552 = vrot.lane.b32.xlu0 %v262, 4
        %v553 = vpop.permute.xlu0 %552
        %554 = vrot.lane.b32.xlu0 %v263, 4
        %v555 = vpop.permute.xlu0 %554
        %556 = vrot.lane.b32.xlu0 %v264, 4
        %v557 = vpop.permute.xlu0 %556
        %558 = vrot.lane.b32.xlu0 %v265, 4
        %v559 = vpop.permute.xlu0 %558
        %560 = vrot.lane.b32.xlu0 %v266, 4
        %v561 = vpop.permute.xlu0 %560
        %vm578 = vcmask 64544
        %579 = vst.msk [vmem:[%s331] sm:$0xff] %vm578, %v531
        %580 = vst.msk [vmem:[%s331 + $0x8] sm:$0xff] %vm578, %v533
        %581 = vst.msk [vmem:[%s331 + $0x10] sm:$0xff] %vm578, %v535
        %582 = vst.msk [vmem:[%s331 + $0x18] sm:$0xff] %vm578, %v537
        %583 = vst.msk [vmem:[%s331 + $0x20] sm:$0xff] %vm578, %v539
        %584 = vst.msk [vmem:[%s331 + $0x28] sm:$0xff] %vm578, %v541
        %585 = vst.msk [vmem:[%s331 + $0x30] sm:$0xff] %vm578, %v543
        %586 = vst.msk [vmem:[%s331 + $0x38] sm:$0xff] %vm578, %v545
        %587 = vst.msk [vmem:[%s331 + $0x40] sm:$0xff] %vm578, %v547
        %588 = vst.msk [vmem:[%s331 + $0x48] sm:$0xff] %vm578, %v549
        %589 = vst.msk [vmem:[%s331 + $0x50] sm:$0xff] %vm578, %v551
        %590 = vst.msk [vmem:[%s331 + $0x58] sm:$0xff] %vm578, %v553
        %591 = vst.msk [vmem:[%s331 + $0x60] sm:$0xff] %vm578, %v555
        %592 = vst.msk [vmem:[%s331 + $0x68] sm:$0xff] %vm578, %v557
        %593 = vst.msk [vmem:[%s331 + $0x70] sm:$0xff] %vm578, %v559
        %594 = vst.msk [vmem:[%s331 + $0x78] sm:$0xff] %vm578, %v561
        %v595 = vrot.slane %v384, 1
        %v596 = vor.u32 %v268, %v595
        %v597 = vrot.slane %v388, 1
        %v598 = vor.u32 %v271, %v597
        %v599 = vrot.slane %v392, 1
        %v600 = vor.u32 %v274, %v599
        %v601 = vrot.slane %v396, 1
        %v602 = vor.u32 %v277, %v601
        %v603 = vrot.slane %v400, 1
        %v604 = vor.u32 %v280, %v603
        %v605 = vrot.slane %v404, 1
        %v606 = vor.u32 %v283, %v605
        %v607 = vrot.slane %v408, 1
        %v608 = vor.u32 %v286, %v607
        %v609 = vrot.slane %v412, 1
        %v610 = vor.u32 %v289, %v609
        %v611 = vrot.slane %v416, 1
        %v612 = vor.u32 %v292, %v611
        %v613 = vrot.slane %v420, 1
        %v614 = vor.u32 %v295, %v613
        %v615 = vrot.slane %v424, 1
        %v616 = vor.u32 %v298, %v615
        %v617 = vrot.slane %v428, 1
        %v618 = vor.u32 %v301, %v617
        %v619 = vrot.slane %v432, 1
        %v620 = vor.u32 %v304, %v619
        %v621 = vrot.slane %v436, 1
        %v622 = vor.u32 %v307, %v621
        %v623 = vrot.slane %v440, 1
        %v624 = vor.u32 %v310, %v623
        %v625 = vrot.slane %v444, 1
        %v626 = vor.u32 %v313, %v625
        %627 = vrot.lane.b32.xlu0 %v596, 8
        %v628 = vpop.permute.xlu0 %627
        %629 = vrot.lane.b32.xlu0 %v598, 8
        %v630 = vpop.permute.xlu0 %629
        %631 = vrot.lane.b32.xlu0 %v600, 8
        %v632 = vpop.permute.xlu0 %631
        %633 = vrot.lane.b32.xlu0 %v602, 8
        %v634 = vpop.permute.xlu0 %633
        %635 = vrot.lane.b32.xlu0 %v604, 8
        %v636 = vpop.permute.xlu0 %635
        %637 = vrot.lane.b32.xlu0 %v606, 8
        %v638 = vpop.permute.xlu0 %637
        %639 = vrot.lane.b32.xlu0 %v608, 8
        %v640 = vpop.permute.xlu0 %639
        %641 = vrot.lane.b32.xlu0 %v610, 8
        %v642 = vpop.permute.xlu0 %641
        %643 = vrot.lane.b32.xlu0 %v612, 8
        %v644 = vpop.permute.xlu0 %643
        %645 = vrot.lane.b32.xlu0 %v614, 8
        %v646 = vpop.permute.xlu0 %645
        %647 = vrot.lane.b32.xlu0 %v616, 8
        %v648 = vpop.permute.xlu0 %647
        %649 = vrot.lane.b32.xlu0 %v618, 8
        %v650 = vpop.permute.xlu0 %649
        %651 = vrot.lane.b32.xlu0 %v620, 8
        %v652 = vpop.permute.xlu0 %651
        %653 = vrot.lane.b32.xlu0 %v622, 8
        %v654 = vpop.permute.xlu0 %653
        %655 = vrot.lane.b32.xlu0 %v624, 8
        %v656 = vpop.permute.xlu0 %655
        %657 = vrot.lane.b32.xlu0 %v626, 8
        %v658 = vpop.permute.xlu0 %657
        %vm675 = vcmask 97344
        %vm676 = vsmask.f32 7424
        %vm677 = vmand %vm675, %vm676
        %v678 = vld [vmem:[%s331] sm:$0xff]
        %v679 = vsel %vm677, %v628, %v678
        %680 = vst [vmem:[%s331] sm:$0xff] %v679
        %v681 = vld [vmem:[%s331 + $0x8] sm:$0xff]
        %v682 = vsel %vm677, %v630, %v681
        %683 = vst [vmem:[%s331 + $0x8] sm:$0xff] %v682
        %v684 = vld [vmem:[%s331 + $0x10] sm:$0xff]
        %v685 = vsel %vm677, %v632, %v684
        %686 = vst [vmem:[%s331 + $0x10] sm:$0xff] %v685
        %v687 = vld [vmem:[%s331 + $0x18] sm:$0xff]
        %v688 = vsel %vm677, %v634, %v687
        %689 = vst [vmem:[%s331 + $0x18] sm:$0xff] %v688
        %v690 = vld [vmem:[%s331 + $0x20] sm:$0xff]
        %v691 = vsel %vm677, %v636, %v690
        %692 = vst [vmem:[%s331 + $0x20] sm:$0xff] %v691
        %v693 = vld [vmem:[%s331 + $0x28] sm:$0xff]
        %v694 = vsel %vm677, %v638, %v693
        %695 = vst [vmem:[%s331 + $0x28] sm:$0xff] %v694
        %v696 = vld [vmem:[%s331 + $0x30] sm:$0xff]
        %v697 = vsel %vm677, %v640, %v696
        %698 = vst [vmem:[%s331 + $0x30] sm:$0xff] %v697
        %v699 = vld [vmem:[%s331 + $0x38] sm:$0xff]
        %v700 = vsel %vm677, %v642, %v699
        %701 = vst [vmem:[%s331 + $0x38] sm:$0xff] %v700
        %v702 = vld [vmem:[%s331 + $0x40] sm:$0xff]
        %v703 = vsel %vm677, %v644, %v702
        %704 = vst [vmem:[%s331 + $0x40] sm:$0xff] %v703
        %v705 = vld [vmem:[%s331 + $0x48] sm:$0xff]
        %v706 = vsel %vm677, %v646, %v705
        %707 = vst [vmem:[%s331 + $0x48] sm:$0xff] %v706
        %v708 = vld [vmem:[%s331 + $0x50] sm:$0xff]
        %v709 = vsel %vm677, %v648, %v708
        %710 = vst [vmem:[%s331 + $0x50] sm:$0xff] %v709
        %v711 = vld [vmem:[%s331 + $0x58] sm:$0xff]
        %v712 = vsel %vm677, %v650, %v711
        %713 = vst [vmem:[%s331 + $0x58] sm:$0xff] %v712
        %v714 = vld [vmem:[%s331 + $0x60] sm:$0xff]
        %v715 = vsel %vm677, %v652, %v714
        %716 = vst [vmem:[%s331 + $0x60] sm:$0xff] %v715
        %v717 = vld [vmem:[%s331 + $0x68] sm:$0xff]
        %v718 = vsel %vm677, %v654, %v717
        %719 = vst [vmem:[%s331 + $0x68] sm:$0xff] %v718
        %v720 = vld [vmem:[%s331 + $0x70] sm:$0xff]
        %v721 = vsel %vm677, %v656, %v720
        %722 = vst [vmem:[%s331 + $0x70] sm:$0xff] %v721
        %v723 = vld [vmem:[%s331 + $0x78] sm:$0xff]
        %v724 = vsel %vm677, %v658, %v723
        %725 = vst [vmem:[%s331 + $0x78] sm:$0xff] %v724
        %726 = vrot.lane.b32.xlu0 %v384, 8
        %v727 = vpop.permute.xlu0 %726
        %728 = vrot.lane.b32.xlu0 %v388, 8
        %v729 = vpop.permute.xlu0 %728
        %730 = vrot.lane.b32.xlu0 %v392, 8
        %v731 = vpop.permute.xlu0 %730
        %732 = vrot.lane.b32.xlu0 %v396, 8
        %v733 = vpop.permute.xlu0 %732
        %734 = vrot.lane.b32.xlu0 %v400, 8
        %v735 = vpop.permute.xlu0 %734
        %736 = vrot.lane.b32.xlu0 %v404, 8
        %v737 = vpop.permute.xlu0 %736
        %738 = vrot.lane.b32.xlu0 %v408, 8
        %v739 = vpop.permute.xlu0 %738
        %740 = vrot.lane.b32.xlu0 %v412, 8
        %v741 = vpop.permute.xlu0 %740
        %742 = vrot.lane.b32.xlu0 %v416, 8
        %v743 = vpop.permute.xlu0 %742
        %744 = vrot.lane.b32.xlu0 %v420, 8
        %v745 = vpop.permute.xlu0 %744
        %746 = vrot.lane.b32.xlu0 %v424, 8
        %v747 = vpop.permute.xlu0 %746
        %748 = vrot.lane.b32.xlu0 %v428, 8
        %v749 = vpop.permute.xlu0 %748
        %750 = vrot.lane.b32.xlu0 %v432, 8
        %v751 = vpop.permute.xlu0 %750
        %752 = vrot.lane.b32.xlu0 %v436, 8
        %v753 = vpop.permute.xlu0 %752
        %754 = vrot.lane.b32.xlu0 %v440, 8
        %v755 = vpop.permute.xlu0 %754
        %756 = vrot.lane.b32.xlu0 %v444, 8
        %v757 = vpop.permute.xlu0 %756
        %vm774 = vcmask 97351
        %vm775 = vsmask.f32 7966
        %vm776 = vmand %vm774, %vm775
        %v777 = vld [vmem:[%s331] sm:$0x80]
        %v778 = vsel %vm776, %v727, %v777
        %779 = vst [vmem:[%s331] sm:$0x80] %v778
        %v780 = vld [vmem:[%s331 + $0x8] sm:$0x80]
        %v781 = vsel %vm776, %v729, %v780
        %782 = vst [vmem:[%s331 + $0x8] sm:$0x80] %v781
        %v783 = vld [vmem:[%s331 + $0x10] sm:$0x80]
        %v784 = vsel %vm776, %v731, %v783
        %785 = vst [vmem:[%s331 + $0x10] sm:$0x80] %v784
        %v786 = vld [vmem:[%s331 + $0x18] sm:$0x80]
        %v787 = vsel %vm776, %v733, %v786
        %788 = vst [vmem:[%s331 + $0x18] sm:$0x80] %v787
        %v789 = vld [vmem:[%s331 + $0x20] sm:$0x80]
        %v790 = vsel %vm776, %v735, %v789
        %791 = vst [vmem:[%s331 + $0x20] sm:$0x80] %v790
        %v792 = vld [vmem:[%s331 + $0x28] sm:$0x80]
        %v793 = vsel %vm776, %v737, %v792
        %794 = vst [vmem:[%s331 + $0x28] sm:$0x80] %v793
        %v795 = vld [vmem:[%s331 + $0x30] sm:$0x80]
        %v796 = vsel %vm776, %v739, %v795
        %797 = vst [vmem:[%s331 + $0x30] sm:$0x80] %v796
        %v798 = vld [vmem:[%s331 + $0x38] sm:$0x80]
        %v799 = vsel %vm776, %v741, %v798
        %800 = vst [vmem:[%s331 + $0x38] sm:$0x80] %v799
        %v801 = vld [vmem:[%s331 + $0x40] sm:$0x80]
        %v802 = vsel %vm776, %v743, %v801
        %803 = vst [vmem:[%s331 + $0x40] sm:$0x80] %v802
        %v804 = vld [vmem:[%s331 + $0x48] sm:$0x80]
        %v805 = vsel %vm776, %v745, %v804
        %806 = vst [vmem:[%s331 + $0x48] sm:$0x80] %v805
        %v807 = vld [vmem:[%s331 + $0x50] sm:$0x80]
        %v808 = vsel %vm776, %v747, %v807
        %809 = vst [vmem:[%s331 + $0x50] sm:$0x80] %v808
        %v810 = vld [vmem:[%s331 + $0x58] sm:$0x80]
        %v811 = vsel %vm776, %v749, %v810
        %812 = vst [vmem:[%s331 + $0x58] sm:$0x80] %v811
        %v813 = vld [vmem:[%s331 + $0x60] sm:$0x80]
        %v814 = vsel %vm776, %v751, %v813
        %815 = vst [vmem:[%s331 + $0x60] sm:$0x80] %v814
        %v816 = vld [vmem:[%s331 + $0x68] sm:$0x80]
        %v817 = vsel %vm776, %v753, %v816
        %818 = vst [vmem:[%s331 + $0x68] sm:$0x80] %v817
        %v819 = vld [vmem:[%s331 + $0x70] sm:$0x80]
        %v820 = vsel %vm776, %v755, %v819
        %821 = vst [vmem:[%s331 + $0x70] sm:$0x80] %v820
        %v822 = vld [vmem:[%s331 + $0x78] sm:$0x80]
        %v823 = vsel %vm776, %v757, %v822
        %824 = vst [vmem:[%s331 + $0x78] sm:$0x80] %v823
        %s825 = scalar_lea.vmem [#allocation2], 16
        %v826 = vld [vmem:[%s825] sm:$0xff]
        %vm827 = vcmask 97280
        %828 = vst.msk [vmem:[#allocation2] sm:$0xff] %vm827, %v826
        %s829 = scalar_lea.vmem [#allocation2], 120
        %v830 = vld [vmem:[%s829] sm:$0xff]
        %s831 = scalar_lea.vmem [#allocation2], 136
        %832 = vst.msk [vmem:[%s831] sm:$0xff] %vm827, %v830
        %v833 = vld [vmem:[#allocation2] sm:$0xff]
        %v834 = vld [vmem:[#allocation2 + $0x8] sm:$0xff]
        %v835 = vld [vmem:[#allocation2 + $0x10] sm:$0xff]
        %v836 = vld [vmem:[#allocation2 + $0x18] sm:$0xff]
        %v837 = vld [vmem:[#allocation2 + $0x20] sm:$0xff]
        %v838 = vld [vmem:[#allocation2 + $0x28] sm:$0xff]
        %v839 = vld [vmem:[#allocation2 + $0x30] sm:$0xff]
        %v840 = vld [vmem:[#allocation2 + $0x38] sm:$0xff]
        %v841 = vld [vmem:[#allocation2 + $0x40] sm:$0xff]
        %v842 = vld [vmem:[#allocation2 + $0x48] sm:$0xff]
        %v843 = vld [vmem:[#allocation2 + $0x50] sm:$0xff]
        %v844 = vld [vmem:[#allocation2 + $0x58] sm:$0xff]
        %v845 = vld [vmem:[#allocation2 + $0x60] sm:$0xff]
        %v846 = vld [vmem:[#allocation2 + $0x68] sm:$0xff]
        %v847 = vld [vmem:[#allocation2 + $0x70] sm:$0xff]
        %v848 = vld [vmem:[#allocation2 + $0x78] sm:$0xff]
        %v849 = vld [vmem:[#allocation7] sm:$0xf]
        %v850 = vld [vmem:[#allocation7 + $0x4] sm:$0x3]
        %v853 = vunpack.c.l.b16 %v849
        %v854 = vunpack.c.l.b16 %v850
        %v855 = vpack.c.b16 %v854, %v853
        %v857 = vsel %vm827, %v833, 0
        %v860 = vsel %vm827, %v834, 0
        %v863 = vsel %vm827, %v835, 0
        %v866 = vsel %vm827, %v836, 0
        %v869 = vsel %vm827, %v837, 0
        %v872 = vsel %vm827, %v838, 0
        %v875 = vsel %vm827, %v839, 0
        %v878 = vsel %vm827, %v840, 0
        %v881 = vsel %vm827, %v841, 0
        %v884 = vsel %vm827, %v842, 0
        %v887 = vsel %vm827, %v843, 0
        %v890 = vsel %vm827, %v844, 0
        %v893 = vsel %vm827, %v845, 0
        %v896 = vsel %vm827, %v846, 0
        %v899 = vsel %vm827, %v847, 0
        %v902 = vsel %vm827, %v848, 0
        %vm904 = vcmask 1045504
        %v906 = vsel %vm904, %v855, 0
        %908 = vmatprep.subr.bf16.mxu0 0
        %909 = vmatpush1.bf16.msra.mxu0 %v906
        %910 = vmatprep.subr.bf16.mxu0 0
        %911 = vmatpush1.bf16.msra.mxu0 0
        %912 = vmatprep.subr.bf16.mxu0 0
        %913 = vmatpush1.bf16.msra.mxu0 0
        %914 = vmatprep.subr.bf16.mxu0 0
        %915 = vmatpush1.bf16.msra.mxu0 0
        %916 = vmatprep.subr.bf16.mxu0 0
        %917 = vmatpush1.bf16.msra.mxu0 0
        %918 = vmatprep.subr.bf16.mxu0 0
        %919 = vmatpush1.bf16.msra.mxu0 0
        %920 = vmatprep.subr.bf16.mxu0 0
        %921 = vmatpush1.bf16.msra.mxu0 0
        %922 = vmatprep.subr.bf16.mxu0 0
        %923 = vmatpush1.bf16.msra.mxu0 0
        %924 = vmatprep.subr.bf16.mxu0 0
        %925 = vmatpush1.bf16.msra.mxu0 0
        %926 = vmatprep.subr.bf16.mxu0 0
        %927 = vmatpush1.bf16.msra.mxu0 0
        %928 = vmatprep.subr.bf16.mxu0 0
        %929 = vmatpush1.bf16.msra.mxu0 0
        %930 = vmatprep.subr.bf16.mxu0 0
        %931 = vmatpush1.bf16.msra.mxu0 0
        %932 = vmatprep.subr.bf16.mxu0 0
        %933 = vmatpush1.bf16.msra.mxu0 0
        %934 = vmatprep.subr.bf16.mxu0 0
        %935 = vmatpush1.bf16.msra.mxu0 0
        %936 = vmatprep.subr.bf16.mxu0 0
        %937 = vmatpush1.bf16.msra.mxu0 0
        %938 = vmatprep.subr.bf16.mxu0 0
        %939 = vmatpush1.bf16.msra.mxu0 0
        %940 = vmatprep.mubr.bf16.mxu0 0
        %941 = vmatmul.mubr.bf16.gmra.mrb[0].mxu0 %v857
        %v942 = vpop.f32.mrb[0].mxu0
        %v943 = vadd.f32 0.0, %v942
        %v944 = vpop.f32.mrb[0].mxu0
        %v945 = vpop.f32.mrb[0].mxu0
        %v946 = vadd.f32 0.0, %v945
        %v947 = vpop.f32.mrb[0].mxu0
        %948 = vmatprep.mubr.bf16.mxu0 0
        %949 = vmatmul.mubr.bf16.gmra.mrb[0].mxu0 %v860
        %v950 = vpop.f32.mrb[0].mxu0
        %v951 = vadd.f32 0.0, %v950
        %v952 = vpop.f32.mrb[0].mxu0
        %v953 = vpop.f32.mrb[0].mxu0
        %v954 = vadd.f32 0.0, %v953
        %v955 = vpop.f32.mrb[0].mxu0
        %956 = vmatprep.mubr.bf16.mxu0 0
        %957 = vmatmul.mubr.bf16.gmra.mrb[0].mxu0 %v863
        %v958 = vpop.f32.mrb[0].mxu0
        %v959 = vadd.f32 0.0, %v958
        %v960 = vpop.f32.mrb[0].mxu0
        %v961 = vpop.f32.mrb[0].mxu0
        %v962 = vadd.f32 0.0, %v961
        %v963 = vpop.f32.mrb[0].mxu0
        %964 = vmatprep.mubr.bf16.mxu0 0
        %965 = vmatmul.mubr.bf16.gmra.mrb[0].mxu0 %v866
        %v966 = vpop.f32.mrb[0].mxu0
        %v967 = vadd.f32 0.0, %v966
        %v968 = vpop.f32.mrb[0].mxu0
        %v969 = vpop.f32.mrb[0].mxu0
        %v970 = vadd.f32 0.0, %v969
        %v971 = vpop.f32.mrb[0].mxu0
        %972 = vmatprep.mubr.bf16.mxu0 0
        %973 = vmatmul.mubr.bf16.gmra.mrb[0].mxu0 %v869
        %v974 = vpop.f32.mrb[0].mxu0
        %v975 = vadd.f32 0.0, %v974
        %v976 = vpop.f32.mrb[0].mxu0
        %v977 = vpop.f32.mrb[0].mxu0
        %v978 = vadd.f32 0.0, %v977
        %v979 = vpop.f32.mrb[0].mxu0
        %980 = vmatprep.mubr.bf16.mxu0 0
        %981 = vmatmul.mubr.bf16.gmra.mrb[0].mxu0 %v872
        %v982 = vpop.f32.mrb[0].mxu0
        %v983 = vadd.f32 0.0, %v982
        %v984 = vpop.f32.mrb[0].mxu0
        %v985 = vpop.f32.mrb[0].mxu0
        %v986 = vadd.f32 0.0, %v985
        %v987 = vpop.f32.mrb[0].mxu0
        %988 = vmatprep.mubr.bf16.mxu0 0
        %989 = vmatmul.mubr.bf16.gmra.mrb[0].mxu0 %v875
        %v990 = vpop.f32.mrb[0].mxu0
        %v991 = vadd.f32 0.0, %v990
        %v992 = vpop.f32.mrb[0].mxu0
        %v993 = vpop.f32.mrb[0].mxu0
        %v994 = vadd.f32 0.0, %v993
        %v995 = vpop.f32.mrb[0].mxu0
        %996 = vmatprep.mubr.bf16.mxu0 0
        %997 = vmatmul.mubr.bf16.gmra.mrb[0].mxu0 %v878
        %v998 = vpop.f32.mrb[0].mxu0
        %v999 = vadd.f32 0.0, %v998
        %v1000 = vpop.f32.mrb[0].mxu0
        %v1001 = vpop.f32.mrb[0].mxu0
        %v1002 = vadd.f32 0.0, %v1001
        %v1003 = vpop.f32.mrb[0].mxu0
        %1004 = vmatprep.mubr.bf16.mxu0 0
        %1005 = vmatmul.mubr.bf16.gmra.mrb[0].mxu0 %v881
        %v1006 = vpop.f32.mrb[0].mxu0
        %v1007 = vadd.f32 0.0, %v1006
        %v1008 = vpop.f32.mrb[0].mxu0
        %v1009 = vpop.f32.mrb[0].mxu0
        %v1010 = vadd.f32 0.0, %v1009
        %v1011 = vpop.f32.mrb[0].mxu0
        %1012 = vmatprep.mubr.bf16.mxu0 0
        %1013 = vmatmul.mubr.bf16.gmra.mrb[0].mxu0 %v884
        %v1014 = vpop.f32.mrb[0].mxu0
        %v1015 = vadd.f32 0.0, %v1014
        %v1016 = vpop.f32.mrb[0].mxu0
        %v1017 = vpop.f32.mrb[0].mxu0
        %v1018 = vadd.f32 0.0, %v1017
        %v1019 = vpop.f32.mrb[0].mxu0
        %1020 = vmatprep.mubr.bf16.mxu0 0
        %1021 = vmatmul.mubr.bf16.gmra.mrb[0].mxu0 %v887
        %v1022 = vpop.f32.mrb[0].mxu0
        %v1023 = vadd.f32 0.0, %v1022
        %v1024 = vpop.f32.mrb[0].mxu0
        %v1025 = vpop.f32.mrb[0].mxu0
        %v1026 = vadd.f32 0.0, %v1025
        %v1027 = vpop.f32.mrb[0].mxu0
        %1028 = vmatprep.mubr.bf16.mxu0 0
        %1029 = vmatmul.mubr.bf16.gmra.mrb[0].mxu0 %v890
        %v1030 = vpop.f32.mrb[0].mxu0
        %v1031 = vadd.f32 0.0, %v1030
        %v1032 = vpop.f32.mrb[0].mxu0
        %v1033 = vpop.f32.mrb[0].mxu0
        %v1034 = vadd.f32 0.0, %v1033
        %v1035 = vpop.f32.mrb[0].mxu0
        %1036 = vmatprep.mubr.bf16.mxu0 0
        %1037 = vmatmul.mubr.bf16.gmra.mrb[0].mxu0 %v893
        %v1038 = vpop.f32.mrb[0].mxu0
        %v1039 = vadd.f32 0.0, %v1038
        %v1040 = vpop.f32.mrb[0].mxu0
        %v1041 = vpop.f32.mrb[0].mxu0
        %v1042 = vadd.f32 0.0, %v1041
        %v1043 = vpop.f32.mrb[0].mxu0
        %1044 = vmatprep.mubr.bf16.mxu0 0
        %1045 = vmatmul.mubr.bf16.gmra.mrb[0].mxu0 %v896
        %v1046 = vpop.f32.mrb[0].mxu0
        %v1047 = vadd.f32 0.0, %v1046
        %v1048 = vpop.f32.mrb[0].mxu0
        %v1049 = vpop.f32.mrb[0].mxu0
        %v1050 = vadd.f32 0.0, %v1049
        %v1051 = vpop.f32.mrb[0].mxu0
        %1052 = vmatprep.mubr.bf16.mxu0 0
        %1053 = vmatmul.mubr.bf16.gmra.mrb[0].mxu0 %v899
        %v1054 = vpop.f32.mrb[0].mxu0
        %v1055 = vadd.f32 0.0, %v1054
        %v1056 = vpop.f32.mrb[0].mxu0
        %v1057 = vpop.f32.mrb[0].mxu0
        %v1058 = vadd.f32 0.0, %v1057
        %v1059 = vpop.f32.mrb[0].mxu0
        %1060 = vmatprep.mubr.bf16.mxu0 0
        %1061 = vmatmul.mubr.bf16.gmra.mrb[0].mxu0 %v902
        %v1062 = vpop.f32.mrb[0].mxu0
        %v1063 = vadd.f32 0.0, %v1062
        %v1064 = vpop.f32.mrb[0].mxu0
        %v1065 = vpop.f32.mrb[0].mxu0
        %v1066 = vadd.f32 0.0, %v1065
        %v1067 = vpop.f32.mrb[0].mxu0
        %1068 = vdwg.mxu0
        %vm1069 = vcmask 31744
        %1070 = vst.msk [vmem:[#allocation3] sm:$0xff] %vm1069, %v943
        %1071 = vst.msk [vmem:[#allocation3 + $0x8] sm:$0xff] %vm1069, %v946
        %1072 = vst.msk [vmem:[#allocation3 + $0x10] sm:$0xff] %vm1069, %v951
        %1073 = vst.msk [vmem:[#allocation3 + $0x18] sm:$0xff] %vm1069, %v954
        %1074 = vst.msk [vmem:[#allocation3 + $0x20] sm:$0xff] %vm1069, %v959
        %1075 = vst.msk [vmem:[#allocation3 + $0x28] sm:$0xff] %vm1069, %v962
        %1076 = vst.msk [vmem:[#allocation3 + $0x30] sm:$0xff] %vm1069, %v967
        %1077 = vst.msk [vmem:[#allocation3 + $0x38] sm:$0xff] %vm1069, %v970
        %1078 = vst.msk [vmem:[#allocation3 + $0x40] sm:$0xff] %vm1069, %v975
        %1079 = vst.msk [vmem:[#allocation3 + $0x48] sm:$0xff] %vm1069, %v978
        %1080 = vst.msk [vmem:[#allocation3 + $0x50] sm:$0xff] %vm1069, %v983
        %1081 = vst.msk [vmem:[#allocation3 + $0x58] sm:$0xff] %vm1069, %v986
        %1082 = vst.msk [vmem:[#allocation3 + $0x60] sm:$0xff] %vm1069, %v991
        %1083 = vst.msk [vmem:[#allocation3 + $0x68] sm:$0xff] %vm1069, %v994
        %1084 = vst.msk [vmem:[#allocation3 + $0x70] sm:$0xff] %vm1069, %v999
        %1085 = vst.msk [vmem:[#allocation3 + $0x78] sm:$0xff] %vm1069, %v1002
        %1086 = vst.msk [vmem:[#allocation3 + $0x80] sm:$0xff] %vm1069, %v1007
        %1087 = vst.msk [vmem:[#allocation3 + $0x88] sm:$0xff] %vm1069, %v1010
        %1088 = vst.msk [vmem:[#allocation3 + $0x90] sm:$0xff] %vm1069, %v1015
        %1089 = vst.msk [vmem:[#allocation3 + $0x98] sm:$0xff] %vm1069, %v1018
        %1090 = vst.msk [vmem:[#allocation3 + $0xa0] sm:$0xff] %vm1069, %v1023
        %1091 = vst.msk [vmem:[#allocation3 + $0xa8] sm:$0xff] %vm1069, %v1026
        %1092 = vst.msk [vmem:[#allocation3 + $0xb0] sm:$0xff] %vm1069, %v1031
        %1093 = vst.msk [vmem:[#allocation3 + $0xb8] sm:$0xff] %vm1069, %v1034
        %1094 = vst.msk [vmem:[#allocation3 + $0xc0] sm:$0xff] %vm1069, %v1039
        %1095 = vst.msk [vmem:[#allocation3 + $0xc8] sm:$0xff] %vm1069, %v1042
        %1096 = vst.msk [vmem:[#allocation3 + $0xd0] sm:$0xff] %vm1069, %v1047
        %1097 = vst.msk [vmem:[#allocation3 + $0xd8] sm:$0xff] %vm1069, %v1050
        %1098 = vst.msk [vmem:[#allocation3 + $0xe0] sm:$0xff] %vm1069, %v1055
        %1099 = vst.msk [vmem:[#allocation3 + $0xe8] sm:$0xff] %vm1069, %v1058
        %1100 = vst.msk [vmem:[#allocation3 + $0xf0] sm:$0xff] %vm1069, %v1063
        %1101 = vst.msk [vmem:[#allocation3 + $0xf8] sm:$0xff] %vm1069, %v1066
        %v1102 = vld [vmem:[%s331] sm:$0xff]
        %v1103 = vld [vmem:[%s331 + $0x8] sm:$0xff]
        %v1104 = vld [vmem:[%s331 + $0x10] sm:$0xff]
        %v1105 = vld [vmem:[%s331 + $0x18] sm:$0xff]
        %v1106 = vld [vmem:[%s331 + $0x20] sm:$0xff]
        %v1107 = vld [vmem:[%s331 + $0x28] sm:$0xff]
        %v1108 = vld [vmem:[%s331 + $0x30] sm:$0xff]
        %v1109 = vld [vmem:[%s331 + $0x38] sm:$0xff]
        %v1110 = vld [vmem:[%s331 + $0x40] sm:$0xff]
        %v1111 = vld [vmem:[%s331 + $0x48] sm:$0xff]
        %v1112 = vld [vmem:[%s331 + $0x50] sm:$0xff]
        %v1113 = vld [vmem:[%s331 + $0x58] sm:$0xff]
        %v1114 = vld [vmem:[%s331 + $0x60] sm:$0xff]
        %v1115 = vld [vmem:[%s331 + $0x68] sm:$0xff]
        %v1116 = vld [vmem:[%s331 + $0x70] sm:$0xff]
        %v1117 = vld [vmem:[%s331 + $0x78] sm:$0xff]
        %s1118 = scalar_lea.vmem [#allocation7], 8
        %v1119 = vld [vmem:[%s1118] sm:$0xf]
        %v1120 = vld [vmem:[%s1118 + $0x4] sm:$0x3]
        %v1123 = vunpack.c.l.b16 %v1119
        %v1124 = vunpack.c.l.b16 %v1120
        %v1125 = vpack.c.b16 %v1124, %v1123
        %v1127 = vsel %vm827, %v1102, 0
        %v1130 = vsel %vm827, %v1103, 0
        %v1133 = vsel %vm827, %v1104, 0
        %v1136 = vsel %vm827, %v1105, 0
        %v1139 = vsel %vm827, %v1106, 0
        %v1142 = vsel %vm827, %v1107, 0
        %v1145 = vsel %vm827, %v1108, 0
        %v1148 = vsel %vm827, %v1109, 0
        %v1151 = vsel %vm827, %v1110, 0
        %v1154 = vsel %vm827, %v1111, 0
        %v1157 = vsel %vm827, %v1112, 0
        %v1160 = vsel %vm827, %v1113, 0
        %v1163 = vsel %vm827, %v1114, 0
        %v1166 = vsel %vm827, %v1115, 0
        %v1169 = vsel %vm827, %v1116, 0
        %v1172 = vsel %vm827, %v1117, 0
        %v1175 = vsel %vm904, %v1125, 0
        %1177 = vmatprep.subr.bf16.mxu0 0
        %1178 = vmatpush1.bf16.msra.mxu0 %v1175
        %1179 = vmatprep.subr.bf16.mxu0 0
        %1180 = vmatpush1.bf16.msra.mxu0 0
        %1181 = vmatprep.subr.bf16.mxu0 0
        %1182 = vmatpush1.bf16.msra.mxu0 0
        %1183 = vmatprep.subr.bf16.mxu0 0
        %1184 = vmatpush1.bf16.msra.mxu0 0
        %1185 = vmatprep.subr.bf16.mxu0 0
        %1186 = vmatpush1.bf16.msra.mxu0 0
        %1187 = vmatprep.subr.bf16.mxu0 0
        %1188 = vmatpush1.bf16.msra.mxu0 0
        %1189 = vmatprep.subr.bf16.mxu0 0
        %1190 = vmatpush1.bf16.msra.mxu0 0
        %1191 = vmatprep.subr.bf16.mxu0 0
        %1192 = vmatpush1.bf16.msra.mxu0 0
        %1193 = vmatprep.subr.bf16.mxu0 0
        %1194 = vmatpush1.bf16.msra.mxu0 0
        %1195 = vmatprep.subr.bf16.mxu0 0
        %1196 = vmatpush1.bf16.msra.mxu0 0
        %1197 = vmatprep.subr.bf16.mxu0 0
        %1198 = vmatpush1.bf16.msra.mxu0 0
        %1199 = vmatprep.subr.bf16.mxu0 0
        %1200 = vmatpush1.bf16.msra.mxu0 0
        %1201 = vmatprep.subr.bf16.mxu0 0
        %1202 = vmatpush1.bf16.msra.mxu0 0
        %1203 = vmatprep.subr.bf16.mxu0 0
        %1204 = vmatpush1.bf16.msra.mxu0 0
        %1205 = vmatprep.subr.bf16.mxu0 0
        %1206 = vmatpush1.bf16.msra.mxu0 0
        %1207 = vmatprep.subr.bf16.mxu0 0
        %1208 = vmatpush1.bf16.msra.mxu0 0
        %1209 = vmatprep.mubr.bf16.mxu0 0
        %1210 = vmatmul.mubr.bf16.gmra.mrb[0].mxu0 %v1127
        %v1211 = vpop.f32.mrb[0].mxu0
        %v1212 = vadd.f32 0.0, %v1211
        %v1213 = vpop.f32.mrb[0].mxu0
        %v1214 = vpop.f32.mrb[0].mxu0
        %v1215 = vadd.f32 0.0, %v1214
        %v1216 = vpop.f32.mrb[0].mxu0
        %1217 = vmatprep.mubr.bf16.mxu0 0
        %1218 = vmatmul.mubr.bf16.gmra.mrb[0].mxu0 %v1130
        %v1219 = vpop.f32.mrb[0].mxu0
        %v1220 = vadd.f32 0.0, %v1219
        %v1221 = vpop.f32.mrb[0].mxu0
        %v1222 = vpop.f32.mrb[0].mxu0
        %v1223 = vadd.f32 0.0, %v1222
        %v1224 = vpop.f32.mrb[0].mxu0
        %1225 = vmatprep.mubr.bf16.mxu0 0
        %1226 = vmatmul.mubr.bf16.gmra.mrb[0].mxu0 %v1133
        %v1227 = vpop.f32.mrb[0].mxu0
        %v1228 = vadd.f32 0.0, %v1227
        %v1229 = vpop.f32.mrb[0].mxu0
        %v1230 = vpop.f32.mrb[0].mxu0
        %v1231 = vadd.f32 0.0, %v1230
        %v1232 = vpop.f32.mrb[0].mxu0
        %1233 = vmatprep.mubr.bf16.mxu0 0
        %1234 = vmatmul.mubr.bf16.gmra.mrb[0].mxu0 %v1136
        %v1235 = vpop.f32.mrb[0].mxu0
        %v1236 = vadd.f32 0.0, %v1235
        %v1237 = vpop.f32.mrb[0].mxu0
        %v1238 = vpop.f32.mrb[0].mxu0
        %v1239 = vadd.f32 0.0, %v1238
        %v1240 = vpop.f32.mrb[0].mxu0
        %1241 = vmatprep.mubr.bf16.mxu0 0
        %1242 = vmatmul.mubr.bf16.gmra.mrb[0].mxu0 %v1139
        %v1243 = vpop.f32.mrb[0].mxu0
        %v1244 = vadd.f32 0.0, %v1243
        %v1245 = vpop.f32.mrb[0].mxu0
        %v1246 = vpop.f32.mrb[0].mxu0
        %v1247 = vadd.f32 0.0, %v1246
        %v1248 = vpop.f32.mrb[0].mxu0
        %1249 = vmatprep.mubr.bf16.mxu0 0
        %1250 = vmatmul.mubr.bf16.gmra.mrb[0].mxu0 %v1142
        %v1251 = vpop.f32.mrb[0].mxu0
        %v1252 = vadd.f32 0.0, %v1251
        %v1253 = vpop.f32.mrb[0].mxu0
        %v1254 = vpop.f32.mrb[0].mxu0
        %v1255 = vadd.f32 0.0, %v1254
        %v1256 = vpop.f32.mrb[0].mxu0
        %1257 = vmatprep.mubr.bf16.mxu0 0
        %1258 = vmatmul.mubr.bf16.gmra.mrb[0].mxu0 %v1145
        %v1259 = vpop.f32.mrb[0].mxu0
        %v1260 = vadd.f32 0.0, %v1259
        %v1261 = vpop.f32.mrb[0].mxu0
        %v1262 = vpop.f32.mrb[0].mxu0
        %v1263 = vadd.f32 0.0, %v1262
        %v1264 = vpop.f32.mrb[0].mxu0
        %1265 = vmatprep.mubr.bf16.mxu0 0
        %1266 = vmatmul.mubr.bf16.gmra.mrb[0].mxu0 %v1148
        %v1267 = vpop.f32.mrb[0].mxu0
        %v1268 = vadd.f32 0.0, %v1267
        %v1269 = vpop.f32.mrb[0].mxu0
        %v1270 = vpop.f32.mrb[0].mxu0
        %v1271 = vadd.f32 0.0, %v1270
        %v1272 = vpop.f32.mrb[0].mxu0
        %1273 = vmatprep.mubr.bf16.mxu0 0
        %1274 = vmatmul.mubr.bf16.gmra.mrb[0].mxu0 %v1151
        %v1275 = vpop.f32.mrb[0].mxu0
        %v1276 = vadd.f32 0.0, %v1275
        %v1277 = vpop.f32.mrb[0].mxu0
        %v1278 = vpop.f32.mrb[0].mxu0
        %v1279 = vadd.f32 0.0, %v1278
        %v1280 = vpop.f32.mrb[0].mxu0
        %1281 = vmatprep.mubr.bf16.mxu0 0
        %1282 = vmatmul.mubr.bf16.gmra.mrb[0].mxu0 %v1154
        %v1283 = vpop.f32.mrb[0].mxu0
        %v1284 = vadd.f32 0.0, %v1283
        %v1285 = vpop.f32.mrb[0].mxu0
        %v1286 = vpop.f32.mrb[0].mxu0
        %v1287 = vadd.f32 0.0, %v1286
        %v1288 = vpop.f32.mrb[0].mxu0
        %1289 = vmatprep.mubr.bf16.mxu0 0
        %1290 = vmatmul.mubr.bf16.gmra.mrb[0].mxu0 %v1157
        %v1291 = vpop.f32.mrb[0].mxu0
        %v1292 = vadd.f32 0.0, %v1291
        %v1293 = vpop.f32.mrb[0].mxu0
        %v1294 = vpop.f32.mrb[0].mxu0
        %v1295 = vadd.f32 0.0, %v1294
        %v1296 = vpop.f32.mrb[0].mxu0
        %1297 = vmatprep.mubr.bf16.mxu0 0
        %1298 = vmatmul.mubr.bf16.gmra.mrb[0].mxu0 %v1160
        %v1299 = vpop.f32.mrb[0].mxu0
        %v1300 = vadd.f32 0.0, %v1299
        %v1301 = vpop.f32.mrb[0].mxu0
        %v1302 = vpop.f32.mrb[0].mxu0
        %v1303 = vadd.f32 0.0, %v1302
        %v1304 = vpop.f32.mrb[0].mxu0
        %1305 = vmatprep.mubr.bf16.mxu0 0
        %1306 = vmatmul.mubr.bf16.gmra.mrb[0].mxu0 %v1163
        %v1307 = vpop.f32.mrb[0].mxu0
        %v1308 = vadd.f32 0.0, %v1307
        %v1309 = vpop.f32.mrb[0].mxu0
        %v1310 = vpop.f32.mrb[0].mxu0
        %v1311 = vadd.f32 0.0, %v1310
        %v1312 = vpop.f32.mrb[0].mxu0
        %1313 = vmatprep.mubr.bf16.mxu0 0
        %1314 = vmatmul.mubr.bf16.gmra.mrb[0].mxu0 %v1166
        %v1315 = vpop.f32.mrb[0].mxu0
        %v1316 = vadd.f32 0.0, %v1315
        %v1317 = vpop.f32.mrb[0].mxu0
        %v1318 = vpop.f32.mrb[0].mxu0
        %v1319 = vadd.f32 0.0, %v1318
        %v1320 = vpop.f32.mrb[0].mxu0
        %1321 = vmatprep.mubr.bf16.mxu0 0
        %1322 = vmatmul.mubr.bf16.gmra.mrb[0].mxu0 %v1169
        %v1323 = vpop.f32.mrb[0].mxu0
        %v1324 = vadd.f32 0.0, %v1323
        %v1325 = vpop.f32.mrb[0].mxu0
        %v1326 = vpop.f32.mrb[0].mxu0
        %v1327 = vadd.f32 0.0, %v1326
        %v1328 = vpop.f32.mrb[0].mxu0
        %1329 = vmatprep.mubr.bf16.mxu0 0
        %1330 = vmatmul.mubr.bf16.gmra.mrb[0].mxu0 %v1172
        %v1331 = vpop.f32.mrb[0].mxu0
        %v1332 = vadd.f32 0.0, %v1331
        %v1333 = vpop.f32.mrb[0].mxu0
        %v1334 = vpop.f32.mrb[0].mxu0
        %v1335 = vadd.f32 0.0, %v1334
        %v1336 = vpop.f32.mrb[0].mxu0
        %1337 = vdwg.mxu0
        %v1338 = vld [vmem:[#allocation3] sm:$0xff]
        %v1339 = vld [vmem:[#allocation3 + $0x8] sm:$0xff]
        %v1340 = vld [vmem:[#allocation3 + $0x10] sm:$0xff]
        %v1341 = vld [vmem:[#allocation3 + $0x18] sm:$0xff]
        %v1342 = vld [vmem:[#allocation3 + $0x20] sm:$0xff]
        %v1343 = vld [vmem:[#allocation3 + $0x28] sm:$0xff]
        %v1344 = vld [vmem:[#allocation3 + $0x30] sm:$0xff]
        %v1345 = vld [vmem:[#allocation3 + $0x38] sm:$0xff]
        %v1346 = vld [vmem:[#allocation3 + $0x40] sm:$0xff]
        %v1347 = vld [vmem:[#allocation3 + $0x48] sm:$0xff]
        %v1348 = vld [vmem:[#allocation3 + $0x50] sm:$0xff]
        %v1349 = vld [vmem:[#allocation3 + $0x58] sm:$0xff]
        %v1350 = vld [vmem:[#allocation3 + $0x60] sm:$0xff]
        %v1351 = vld [vmem:[#allocation3 + $0x68] sm:$0xff]
        %v1352 = vld [vmem:[#allocation3 + $0x70] sm:$0xff]
        %v1353 = vld [vmem:[#allocation3 + $0x78] sm:$0xff]
        %v1354 = vld [vmem:[#allocation3 + $0x80] sm:$0xff]
        %v1355 = vld [vmem:[#allocation3 + $0x88] sm:$0xff]
        %v1356 = vld [vmem:[#allocation3 + $0x90] sm:$0xff]
        %v1357 = vld [vmem:[#allocation3 + $0x98] sm:$0xff]
        %v1358 = vld [vmem:[#allocation3 + $0xa0] sm:$0xff]
        %v1359 = vld [vmem:[#allocation3 + $0xa8] sm:$0xff]
        %v1360 = vld [vmem:[#allocation3 + $0xb0] sm:$0xff]
        %v1361 = vld [vmem:[#allocation3 + $0xb8] sm:$0xff]
        %v1362 = vld [vmem:[#allocation3 + $0xc0] sm:$0xff]
        %v1363 = vld [vmem:[#allocation3 + $0xc8] sm:$0xff]
        %v1364 = vld [vmem:[#allocation3 + $0xd0] sm:$0xff]
        %v1365 = vld [vmem:[#allocation3 + $0xd8] sm:$0xff]
        %v1366 = vld [vmem:[#allocation3 + $0xe0] sm:$0xff]
        %v1367 = vld [vmem:[#allocation3 + $0xe8] sm:$0xff]
        %v1368 = vld [vmem:[#allocation3 + $0xf0] sm:$0xff]
        %v1369 = vld [vmem:[#allocation3 + $0xf8] sm:$0xff]
        %v1370 = vadd.f32 %v1338, %v1212
        %v1371 = vadd.f32 %v1339, %v1215
        %v1372 = vadd.f32 %v1340, %v1220
        %v1373 = vadd.f32 %v1341, %v1223
        %v1374 = vadd.f32 %v1342, %v1228
        %v1375 = vadd.f32 %v1343, %v1231
        %v1376 = vadd.f32 %v1344, %v1236
        %v1377 = vadd.f32 %v1345, %v1239
        %v1378 = vadd.f32 %v1346, %v1244
        %v1379 = vadd.f32 %v1347, %v1247
        %v1380 = vadd.f32 %v1348, %v1252
        %v1381 = vadd.f32 %v1349, %v1255
        %v1382 = vadd.f32 %v1350, %v1260
        %v1383 = vadd.f32 %v1351, %v1263
        %v1384 = vadd.f32 %v1352, %v1268
        %v1385 = vadd.f32 %v1353, %v1271
        %v1386 = vadd.f32 %v1354, %v1276
        %v1387 = vadd.f32 %v1355, %v1279
        %v1388 = vadd.f32 %v1356, %v1284
        %v1389 = vadd.f32 %v1357, %v1287
        %v1390 = vadd.f32 %v1358, %v1292
        %v1391 = vadd.f32 %v1359, %v1295
        %v1392 = vadd.f32 %v1360, %v1300
        %v1393 = vadd.f32 %v1361, %v1303
        %v1394 = vadd.f32 %v1362, %v1308
        %v1395 = vadd.f32 %v1363, %v1311
        %v1396 = vadd.f32 %v1364, %v1316
        %v1397 = vadd.f32 %v1365, %v1319
        %v1398 = vadd.f32 %v1366, %v1324
        %v1399 = vadd.f32 %v1367, %v1327
        %v1400 = vadd.f32 %v1368, %v1332
        %v1401 = vadd.f32 %v1369, %v1335
        %1402 = vst.msk [vmem:[#allocation3] sm:$0xff] %vm1069, %v1370
        %1403 = vst.msk [vmem:[#allocation3 + $0x8] sm:$0xff] %vm1069, %v1371
        %1404 = vst.msk [vmem:[#allocation3 + $0x10] sm:$0xff] %vm1069, %v1372
        %1405 = vst.msk [vmem:[#allocation3 + $0x18] sm:$0xff] %vm1069, %v1373
        %1406 = vst.msk [vmem:[#allocation3 + $0x20] sm:$0xff] %vm1069, %v1374
        %1407 = vst.msk [vmem:[#allocation3 + $0x28] sm:$0xff] %vm1069, %v1375
        %1408 = vst.msk [vmem:[#allocation3 + $0x30] sm:$0xff] %vm1069, %v1376
        %1409 = vst.msk [vmem:[#allocation3 + $0x38] sm:$0xff] %vm1069, %v1377
        %1410 = vst.msk [vmem:[#allocation3 + $0x40] sm:$0xff] %vm1069, %v1378
        %1411 = vst.msk [vmem:[#allocation3 + $0x48] sm:$0xff] %vm1069, %v1379
        %1412 = vst.msk [vmem:[#allocation3 + $0x50] sm:$0xff] %vm1069, %v1380
        %1413 = vst.msk [vmem:[#allocation3 + $0x58] sm:$0xff] %vm1069, %v1381
        %1414 = vst.msk [vmem:[#allocation3 + $0x60] sm:$0xff] %vm1069, %v1382
        %1415 = vst.msk [vmem:[#allocation3 + $0x68] sm:$0xff] %vm1069, %v1383
        %1416 = vst.msk [vmem:[#allocation3 + $0x70] sm:$0xff] %vm1069, %v1384
        %1417 = vst.msk [vmem:[#allocation3 + $0x78] sm:$0xff] %vm1069, %v1385
        %1418 = vst.msk [vmem:[#allocation3 + $0x80] sm:$0xff] %vm1069, %v1386
        %1419 = vst.msk [vmem:[#allocation3 + $0x88] sm:$0xff] %vm1069, %v1387
        %1420 = vst.msk [vmem:[#allocation3 + $0x90] sm:$0xff] %vm1069, %v1388
        %1421 = vst.msk [vmem:[#allocation3 + $0x98] sm:$0xff] %vm1069, %v1389
        %1422 = vst.msk [vmem:[#allocation3 + $0xa0] sm:$0xff] %vm1069, %v1390
        %1423 = vst.msk [vmem:[#allocation3 + $0xa8] sm:$0xff] %vm1069, %v1391
        %1424 = vst.msk [vmem:[#allocation3 + $0xb0] sm:$0xff] %vm1069, %v1392
        %1425 = vst.msk [vmem:[#allocation3 + $0xb8] sm:$0xff] %vm1069, %v1393
        %1426 = vst.msk [vmem:[#allocation3 + $0xc0] sm:$0xff] %vm1069, %v1394
        %1427 = vst.msk [vmem:[#allocation3 + $0xc8] sm:$0xff] %vm1069, %v1395
        %1428 = vst.msk [vmem:[#allocation3 + $0xd0] sm:$0xff] %vm1069, %v1396
        %1429 = vst.msk [vmem:[#allocation3 + $0xd8] sm:$0xff] %vm1069, %v1397
        %1430 = vst.msk [vmem:[#allocation3 + $0xe0] sm:$0xff] %vm1069, %v1398
        %1431 = vst.msk [vmem:[#allocation3 + $0xe8] sm:$0xff] %vm1069, %v1399
        %1432 = vst.msk [vmem:[#allocation3 + $0xf0] sm:$0xff] %vm1069, %v1400
        %1433 = vst.msk [vmem:[#allocation3 + $0xf8] sm:$0xff] %vm1069, %v1401
        %v1434 = vld [vmem:[%s825] sm:$0xff]
        %v1435 = vld [vmem:[%s825 + $0x8] sm:$0xff]
        %v1436 = vld [vmem:[%s825 + $0x10] sm:$0xff]
        %v1437 = vld [vmem:[%s825 + $0x18] sm:$0xff]
        %v1438 = vld [vmem:[%s825 + $0x20] sm:$0xff]
        %v1439 = vld [vmem:[%s825 + $0x28] sm:$0xff]
        %v1440 = vld [vmem:[%s825 + $0x30] sm:$0xff]
        %v1441 = vld [vmem:[%s825 + $0x38] sm:$0xff]
        %v1442 = vld [vmem:[%s825 + $0x40] sm:$0xff]
        %v1443 = vld [vmem:[%s825 + $0x48] sm:$0xff]
        %v1444 = vld [vmem:[%s825 + $0x50] sm:$0xff]
        %v1445 = vld [vmem:[%s825 + $0x58] sm:$0xff]
        %v1446 = vld [vmem:[%s825 + $0x60] sm:$0xff]
        %v1447 = vld [vmem:[%s825 + $0x68] sm:$0xff]
        %v1448 = vld [vmem:[%s825 + $0x70] sm:$0xff]
        %v1449 = vld [vmem:[%s825 + $0x78] sm:$0xff]
        %s1450 = scalar_lea.vmem [#allocation7], 16
        %v1451 = vld [vmem:[%s1450] sm:$0xf]
        %v1452 = vld [vmem:[%s1450 + $0x4] sm:$0x3]
        %v1455 = vunpack.c.l.b16 %v1451
        %v1456 = vunpack.c.l.b16 %v1452
        %v1457 = vpack.c.b16 %v1456, %v1455
        %v1459 = vsel %vm827, %v1434, 0
        %v1462 = vsel %vm827, %v1435, 0
        %v1465 = vsel %vm827, %v1436, 0
        %v1468 = vsel %vm827, %v1437, 0
        %v1471 = vsel %vm827, %v1438, 0
        %v1474 = vsel %vm827, %v1439, 0
        %v1477 = vsel %vm827, %v1440, 0
        %v1480 = vsel %vm827, %v1441, 0
        %v1483 = vsel %vm827, %v1442, 0
        %v1486 = vsel %vm827, %v1443, 0
        %v1489 = vsel %vm827, %v1444, 0
        %v1492 = vsel %vm827, %v1445, 0
        %v1495 = vsel %vm827, %v1446, 0
        %v1498 = vsel %vm827, %v1447, 0
        %v1501 = vsel %vm827, %v1448, 0
        %v1504 = vsel %vm827, %v1449, 0
        %v1507 = vsel %vm904, %v1457, 0
        %1509 = vmatprep.subr.bf16.mxu0 0
        %1510 = vmatpush1.bf16.msra.mxu0 %v1507
        %1511 = vmatprep.subr.bf16.mxu0 0
        %1512 = vmatpush1.bf16.msra.mxu0 0
        %1513 = vmatprep.subr.bf16.mxu0 0
        %1514 = vmatpush1.bf16.msra.mxu0 0
        %1515 = vmatprep.subr.bf16.mxu0 0
        %1516 = vmatpush1.bf16.msra.mxu0 0
        %1517 = vmatprep.subr.bf16.mxu0 0
        %1518 = vmatpush1.bf16.msra.mxu0 0
        %1519 = vmatprep.subr.bf16.mxu0 0
        %1520 = vmatpush1.bf16.msra.mxu0 0
        %1521 = vmatprep.subr.bf16.mxu0 0
        %1522 = vmatpush1.bf16.msra.mxu0 0
        %1523 = vmatprep.subr.bf16.mxu0 0
        %1524 = vmatpush1.bf16.msra.mxu0 0
        %1525 = vmatprep.subr.bf16.mxu0 0
        %1526 = vmatpush1.bf16.msra.mxu0 0
        %1527 = vmatprep.subr.bf16.mxu0 0
        %1528 = vmatpush1.bf16.msra.mxu0 0
        %1529 = vmatprep.subr.bf16.mxu0 0
        %1530 = vmatpush1.bf16.msra.mxu0 0
        %1531 = vmatprep.subr.bf16.mxu0 0
        %1532 = vmatpush1.bf16.msra.mxu0 0
        %1533 = vmatprep.subr.bf16.mxu0 0
        %1534 = vmatpush1.bf16.msra.mxu0 0
        %1535 = vmatprep.subr.bf16.mxu0 0
        %1536 = vmatpush1.bf16.msra.mxu0 0
        %1537 = vmatprep.subr.bf16.mxu0 0
        %1538 = vmatpush1.bf16.msra.mxu0 0
        %1539 = vmatprep.subr.bf16.mxu0 0
        %1540 = vmatpush1.bf16.msra.mxu0 0
        %1541 = vmatprep.mubr.bf16.mxu0 0
        %1542 = vmatmul.mubr.bf16.gmra.mrb[0].mxu0 %v1459
        %v1543 = vpop.f32.mrb[0].mxu0
        %v1544 = vadd.f32 0.0, %v1543
        %v1545 = vpop.f32.mrb[0].mxu0
        %v1546 = vpop.f32.mrb[0].mxu0
        %v1547 = vadd.f32 0.0, %v1546
        %v1548 = vpop.f32.mrb[0].mxu0
        %1549 = vmatprep.mubr.bf16.mxu0 0
        %1550 = vmatmul.mubr.bf16.gmra.mrb[0].mxu0 %v1462
        %v1551 = vpop.f32.mrb[0].mxu0
        %v1552 = vadd.f32 0.0, %v1551
        %v1553 = vpop.f32.mrb[0].mxu0
        %v1554 = vpop.f32.mrb[0].mxu0
        %v1555 = vadd.f32 0.0, %v1554
        %v1556 = vpop.f32.mrb[0].mxu0
        %1557 = vmatprep.mubr.bf16.mxu0 0
        %1558 = vmatmul.mubr.bf16.gmra.mrb[0].mxu0 %v1465
        %v1559 = vpop.f32.mrb[0].mxu0
        %v1560 = vadd.f32 0.0, %v1559
        %v1561 = vpop.f32.mrb[0].mxu0
        %v1562 = vpop.f32.mrb[0].mxu0
        %v1563 = vadd.f32 0.0, %v1562
        %v1564 = vpop.f32.mrb[0].mxu0
        %1565 = vmatprep.mubr.bf16.mxu0 0
        %1566 = vmatmul.mubr.bf16.gmra.mrb[0].mxu0 %v1468
        %v1567 = vpop.f32.mrb[0].mxu0
        %v1568 = vadd.f32 0.0, %v1567
        %v1569 = vpop.f32.mrb[0].mxu0
        %v1570 = vpop.f32.mrb[0].mxu0
        %v1571 = vadd.f32 0.0, %v1570
        %v1572 = vpop.f32.mrb[0].mxu0
        %1573 = vmatprep.mubr.bf16.mxu0 0
        %1574 = vmatmul.mubr.bf16.gmra.mrb[0].mxu0 %v1471
        %v1575 = vpop.f32.mrb[0].mxu0
        %v1576 = vadd.f32 0.0, %v1575
        %v1577 = vpop.f32.mrb[0].mxu0
        %v1578 = vpop.f32.mrb[0].mxu0
        %v1579 = vadd.f32 0.0, %v1578
        %v1580 = vpop.f32.mrb[0].mxu0
        %1581 = vmatprep.mubr.bf16.mxu0 0
        %1582 = vmatmul.mubr.bf16.gmra.mrb[0].mxu0 %v1474
        %v1583 = vpop.f32.mrb[0].mxu0
        %v1584 = vadd.f32 0.0, %v1583
        %v1585 = vpop.f32.mrb[0].mxu0
        %v1586 = vpop.f32.mrb[0].mxu0
        %v1587 = vadd.f32 0.0, %v1586
        %v1588 = vpop.f32.mrb[0].mxu0
        %1589 = vmatprep.mubr.bf16.mxu0 0
        %1590 = vmatmul.mubr.bf16.gmra.mrb[0].mxu0 %v1477
        %v1591 = vpop.f32.mrb[0].mxu0
        %v1592 = vadd.f32 0.0, %v1591
        %v1593 = vpop.f32.mrb[0].mxu0
        %v1594 = vpop.f32.mrb[0].mxu0
        %v1595 = vadd.f32 0.0, %v1594
        %v1596 = vpop.f32.mrb[0].mxu0
        %1597 = vmatprep.mubr.bf16.mxu0 0
        %1598 = vmatmul.mubr.bf16.gmra.mrb[0].mxu0 %v1480
        %v1599 = vpop.f32.mrb[0].mxu0
        %v1600 = vadd.f32 0.0, %v1599
        %v1601 = vpop.f32.mrb[0].mxu0
        %v1602 = vpop.f32.mrb[0].mxu0
        %v1603 = vadd.f32 0.0, %v1602
        %v1604 = vpop.f32.mrb[0].mxu0
        %1605 = vmatprep.mubr.bf16.mxu0 0
        %1606 = vmatmul.mubr.bf16.gmra.mrb[0].mxu0 %v1483
        %v1607 = vpop.f32.mrb[0].mxu0
        %v1608 = vadd.f32 0.0, %v1607
        %v1609 = vpop.f32.mrb[0].mxu0
        %v1610 = vpop.f32.mrb[0].mxu0
        %v1611 = vadd.f32 0.0, %v1610
        %v1612 = vpop.f32.mrb[0].mxu0
        %1613 = vmatprep.mubr.bf16.mxu0 0
        %1614 = vmatmul.mubr.bf16.gmra.mrb[0].mxu0 %v1486
        %v1615 = vpop.f32.mrb[0].mxu0
        %v1616 = vadd.f32 0.0, %v1615
        %v1617 = vpop.f32.mrb[0].mxu0
        %v1618 = vpop.f32.mrb[0].mxu0
        %v1619 = vadd.f32 0.0, %v1618
        %v1620 = vpop.f32.mrb[0].mxu0
        %1621 = vmatprep.mubr.bf16.mxu0 0
        %1622 = vmatmul.mubr.bf16.gmra.mrb[0].mxu0 %v1489
        %v1623 = vpop.f32.mrb[0].mxu0
        %v1624 = vadd.f32 0.0, %v1623
        %v1625 = vpop.f32.mrb[0].mxu0
        %v1626 = vpop.f32.mrb[0].mxu0
        %v1627 = vadd.f32 0.0, %v1626
        %v1628 = vpop.f32.mrb[0].mxu0
        %1629 = vmatprep.mubr.bf16.mxu0 0
        %1630 = vmatmul.mubr.bf16.gmra.mrb[0].mxu0 %v1492
        %v1631 = vpop.f32.mrb[0].mxu0
        %v1632 = vadd.f32 0.0, %v1631
        %v1633 = vpop.f32.mrb[0].mxu0
        %v1634 = vpop.f32.mrb[0].mxu0
        %v1635 = vadd.f32 0.0, %v1634
        %v1636 = vpop.f32.mrb[0].mxu0
        %1637 = vmatprep.mubr.bf16.mxu0 0
        %1638 = vmatmul.mubr.bf16.gmra.mrb[0].mxu0 %v1495
        %v1639 = vpop.f32.mrb[0].mxu0
        %v1640 = vadd.f32 0.0, %v1639
        %v1641 = vpop.f32.mrb[0].mxu0
        %v1642 = vpop.f32.mrb[0].mxu0
        %v1643 = vadd.f32 0.0, %v1642
        %v1644 = vpop.f32.mrb[0].mxu0
        %1645 = vmatprep.mubr.bf16.mxu0 0
        %1646 = vmatmul.mubr.bf16.gmra.mrb[0].mxu0 %v1498
        %v1647 = vpop.f32.mrb[0].mxu0
        %v1648 = vadd.f32 0.0, %v1647
        %v1649 = vpop.f32.mrb[0].mxu0
        %v1650 = vpop.f32.mrb[0].mxu0
        %v1651 = vadd.f32 0.0, %v1650
        %v1652 = vpop.f32.mrb[0].mxu0
        %1653 = vmatprep.mubr.bf16.mxu0 0
        %1654 = vmatmul.mubr.bf16.gmra.mrb[0].mxu0 %v1501
        %v1655 = vpop.f32.mrb[0].mxu0
        %v1656 = vadd.f32 0.0, %v1655
        %v1657 = vpop.f32.mrb[0].mxu0
        %v1658 = vpop.f32.mrb[0].mxu0
        %v1659 = vadd.f32 0.0, %v1658
        %v1660 = vpop.f32.mrb[0].mxu0
        %1661 = vmatprep.mubr.bf16.mxu0 0
        %1662 = vmatmul.mubr.bf16.gmra.mrb[0].mxu0 %v1504
        %v1663 = vpop.f32.mrb[0].mxu0
        %v1664 = vadd.f32 0.0, %v1663
        %v1665 = vpop.f32.mrb[0].mxu0
        %v1666 = vpop.f32.mrb[0].mxu0
        %v1667 = vadd.f32 0.0, %v1666
        %v1668 = vpop.f32.mrb[0].mxu0
        %1669 = vdwg.mxu0
        %v1670 = vld [vmem:[#allocation3] sm:$0xff]
        %v1671 = vld [vmem:[#allocation3 + $0x8] sm:$0xff]
        %v1672 = vld [vmem:[#allocation3 + $0x10] sm:$0xff]
        %v1673 = vld [vmem:[#allocation3 + $0x18] sm:$0xff]
        %v1674 = vld [vmem:[#allocation3 + $0x20] sm:$0xff]
        %v1675 = vld [vmem:[#allocation3 + $0x28] sm:$0xff]
        %v1676 = vld [vmem:[#allocation3 + $0x30] sm:$0xff]
        %v1677 = vld [vmem:[#allocation3 + $0x38] sm:$0xff]
        %v1678 = vld [vmem:[#allocation3 + $0x40] sm:$0xff]
        %v1679 = vld [vmem:[#allocation3 + $0x48] sm:$0xff]
        %v1680 = vld [vmem:[#allocation3 + $0x50] sm:$0xff]
        %v1681 = vld [vmem:[#allocation3 + $0x58] sm:$0xff]
        %v1682 = vld [vmem:[#allocation3 + $0x60] sm:$0xff]
        %v1683 = vld [vmem:[#allocation3 + $0x68] sm:$0xff]
        %v1684 = vld [vmem:[#allocation3 + $0x70] sm:$0xff]
        %v1685 = vld [vmem:[#allocation3 + $0x78] sm:$0xff]
        %v1686 = vld [vmem:[#allocation3 + $0x80] sm:$0xff]
        %v1687 = vld [vmem:[#allocation3 + $0x88] sm:$0xff]
        %v1688 = vld [vmem:[#allocation3 + $0x90] sm:$0xff]
        %v1689 = vld [vmem:[#allocation3 + $0x98] sm:$0xff]
        %v1690 = vld [vmem:[#allocation3 + $0xa0] sm:$0xff]
        %v1691 = vld [vmem:[#allocation3 + $0xa8] sm:$0xff]
        %v1692 = vld [vmem:[#allocation3 + $0xb0] sm:$0xff]
        %v1693 = vld [vmem:[#allocation3 + $0xb8] sm:$0xff]
        %v1694 = vld [vmem:[#allocation3 + $0xc0] sm:$0xff]
        %v1695 = vld [vmem:[#allocation3 + $0xc8] sm:$0xff]
        %v1696 = vld [vmem:[#allocation3 + $0xd0] sm:$0xff]
        %v1697 = vld [vmem:[#allocation3 + $0xd8] sm:$0xff]
        %v1698 = vld [vmem:[#allocation3 + $0xe0] sm:$0xff]
        %v1699 = vld [vmem:[#allocation3 + $0xe8] sm:$0xff]
        %v1700 = vld [vmem:[#allocation3 + $0xf0] sm:$0xff]
        %v1701 = vld [vmem:[#allocation3 + $0xf8] sm:$0xff]
        %v1702 = vadd.f32 %v1670, %v1544
        %v1703 = vadd.f32 %v1671, %v1547
        %v1704 = vadd.f32 %v1672, %v1552
        %v1705 = vadd.f32 %v1673, %v1555
        %v1706 = vadd.f32 %v1674, %v1560
        %v1707 = vadd.f32 %v1675, %v1563
        %v1708 = vadd.f32 %v1676, %v1568
        %v1709 = vadd.f32 %v1677, %v1571
        %v1710 = vadd.f32 %v1678, %v1576
        %v1711 = vadd.f32 %v1679, %v1579
        %v1712 = vadd.f32 %v1680, %v1584
        %v1713 = vadd.f32 %v1681, %v1587
        %v1714 = vadd.f32 %v1682, %v1592
        %v1715 = vadd.f32 %v1683, %v1595
        %v1716 = vadd.f32 %v1684, %v1600
        %v1717 = vadd.f32 %v1685, %v1603
        %v1718 = vadd.f32 %v1686, %v1608
        %v1719 = vadd.f32 %v1687, %v1611
        %v1720 = vadd.f32 %v1688, %v1616
        %v1721 = vadd.f32 %v1689, %v1619
        %v1722 = vadd.f32 %v1690, %v1624
        %v1723 = vadd.f32 %v1691, %v1627
        %v1724 = vadd.f32 %v1692, %v1632
        %v1725 = vadd.f32 %v1693, %v1635
        %v1726 = vadd.f32 %v1694, %v1640
        %v1727 = vadd.f32 %v1695, %v1643
        %v1728 = vadd.f32 %v1696, %v1648
        %v1729 = vadd.f32 %v1697, %v1651
        %v1730 = vadd.f32 %v1698, %v1656
        %v1731 = vadd.f32 %v1699, %v1659
        %v1732 = vadd.f32 %v1700, %v1664
        %v1733 = vadd.f32 %v1701, %v1667
        %1734 = vst.msk [vmem:[#allocation3] sm:$0xff] %vm1069, %v1702
        %1735 = vst.msk [vmem:[#allocation3 + $0x8] sm:$0xff] %vm1069, %v1703
        %1736 = vst.msk [vmem:[#allocation3 + $0x10] sm:$0xff] %vm1069, %v1704
        %1737 = vst.msk [vmem:[#allocation3 + $0x18] sm:$0xff] %vm1069, %v1705
        %1738 = vst.msk [vmem:[#allocation3 + $0x20] sm:$0xff] %vm1069, %v1706
        %1739 = vst.msk [vmem:[#allocation3 + $0x28] sm:$0xff] %vm1069, %v1707
        %1740 = vst.msk [vmem:[#allocation3 + $0x30] sm:$0xff] %vm1069, %v1708
        %1741 = vst.msk [vmem:[#allocation3 + $0x38] sm:$0xff] %vm1069, %v1709
        %1742 = vst.msk [vmem:[#allocation3 + $0x40] sm:$0xff] %vm1069, %v1710
        %1743 = vst.msk [vmem:[#allocation3 + $0x48] sm:$0xff] %vm1069, %v1711
        %1744 = vst.msk [vmem:[#allocation3 + $0x50] sm:$0xff] %vm1069, %v1712
        %1745 = vst.msk [vmem:[#allocation3 + $0x58] sm:$0xff] %vm1069, %v1713
        %1746 = vst.msk [vmem:[#allocation3 + $0x60] sm:$0xff] %vm1069, %v1714
        %1747 = vst.msk [vmem:[#allocation3 + $0x68] sm:$0xff] %vm1069, %v1715
        %1748 = vst.msk [vmem:[#allocation3 + $0x70] sm:$0xff] %vm1069, %v1716
        %1749 = vst.msk [vmem:[#allocation3 + $0x78] sm:$0xff] %vm1069, %v1717
        %1750 = vst.msk [vmem:[#allocation3 + $0x80] sm:$0xff] %vm1069, %v1718
        %1751 = vst.msk [vmem:[#allocation3 + $0x88] sm:$0xff] %vm1069, %v1719
        %1752 = vst.msk [vmem:[#allocation3 + $0x90] sm:$0xff] %vm1069, %v1720
        %1753 = vst.msk [vmem:[#allocation3 + $0x98] sm:$0xff] %vm1069, %v1721
        %1754 = vst.msk [vmem:[#allocation3 + $0xa0] sm:$0xff] %vm1069, %v1722
        %1755 = vst.msk [vmem:[#allocation3 + $0xa8] sm:$0xff] %vm1069, %v1723
        %1756 = vst.msk [vmem:[#allocation3 + $0xb0] sm:$0xff] %vm1069, %v1724
        %1757 = vst.msk [vmem:[#allocation3 + $0xb8] sm:$0xff] %vm1069, %v1725
        %1758 = vst.msk [vmem:[#allocation3 + $0xc0] sm:$0xff] %vm1069, %v1726
        %1759 = vst.msk [vmem:[#allocation3 + $0xc8] sm:$0xff] %vm1069, %v1727
        %1760 = vst.msk [vmem:[#allocation3 + $0xd0] sm:$0xff] %vm1069, %v1728
        %1761 = vst.msk [vmem:[#allocation3 + $0xd8] sm:$0xff] %vm1069, %v1729
        %1762 = vst.msk [vmem:[#allocation3 + $0xe0] sm:$0xff] %vm1069, %v1730
        %1763 = vst.msk [vmem:[#allocation3 + $0xe8] sm:$0xff] %vm1069, %v1731
        %1764 = vst.msk [vmem:[#allocation3 + $0xf0] sm:$0xff] %vm1069, %v1732
        %1765 = vst.msk [vmem:[#allocation3 + $0xf8] sm:$0xff] %vm1069, %v1733
        %v1766 = vld [vmem:[#allocation3] sm:$0xff]
        %v1767 = vld [vmem:[#allocation3 + $0x8] sm:$0xff]
        %v1768 = vld [vmem:[#allocation3 + $0x10] sm:$0xff]
        %v1769 = vld [vmem:[#allocation3 + $0x18] sm:$0xff]
        %v1770 = vld [vmem:[#allocation3 + $0x20] sm:$0xff]
        %v1771 = vld [vmem:[#allocation3 + $0x28] sm:$0xff]
        %v1772 = vld [vmem:[#allocation3 + $0x30] sm:$0xff]
        %v1773 = vld [vmem:[#allocation3 + $0x38] sm:$0xff]
        %v1774 = vld [vmem:[#allocation3 + $0x40] sm:$0xff]
        %v1775 = vld [vmem:[#allocation3 + $0x48] sm:$0xff]
        %v1776 = vld [vmem:[#allocation3 + $0x50] sm:$0xff]
        %v1777 = vld [vmem:[#allocation3 + $0x58] sm:$0xff]
        %v1778 = vld [vmem:[#allocation3 + $0x60] sm:$0xff]
        %v1779 = vld [vmem:[#allocation3 + $0x68] sm:$0xff]
        %v1780 = vld [vmem:[#allocation3 + $0x70] sm:$0xff]
        %v1781 = vld [vmem:[#allocation3 + $0x78] sm:$0xff]
        %v1782 = vld [vmem:[#allocation3 + $0x80] sm:$0xff]
        %v1783 = vld [vmem:[#allocation3 + $0x88] sm:$0xff]
        %v1784 = vld [vmem:[#allocation3 + $0x90] sm:$0xff]
        %v1785 = vld [vmem:[#allocation3 + $0x98] sm:$0xff]
        %v1786 = vld [vmem:[#allocation3 + $0xa0] sm:$0xff]
        %v1787 = vld [vmem:[#allocation3 + $0xa8] sm:$0xff]
        %v1788 = vld [vmem:[#allocation3 + $0xb0] sm:$0xff]
        %v1789 = vld [vmem:[#allocation3 + $0xb8] sm:$0xff]
        %v1790 = vld [vmem:[#allocation3 + $0xc0] sm:$0xff]
        %v1791 = vld [vmem:[#allocation3 + $0xc8] sm:$0xff]
        %v1792 = vld [vmem:[#allocation3 + $0xd0] sm:$0xff]
        %v1793 = vld [vmem:[#allocation3 + $0xd8] sm:$0xff]
        %v1794 = vld [vmem:[#allocation3 + $0xe0] sm:$0xff]
        %v1795 = vld [vmem:[#allocation3 + $0xe8] sm:$0xff]
        %v1796 = vld [vmem:[#allocation3 + $0xf0] sm:$0xff]
        %v1797 = vld [vmem:[#allocation3 + $0xf8] sm:$0xff]
        %v1798 = vsel %vm1069, %v1766, 0.0
        %v1799 = vsel %vm1069, %v1767, 0.0
        %v1800 = vadd.f32 %v1798, %v1799
        %v1801 = vsel %vm1069, %v1768, 0.0
        %v1802 = vadd.f32 %v1800, %v1801
        %v1803 = vsel %vm1069, %v1769, 0.0
        %v1804 = vadd.f32 %v1802, %v1803
        %v1805 = vsel %vm1069, %v1770, 0.0
        %v1806 = vadd.f32 %v1804, %v1805
        %v1807 = vsel %vm1069, %v1771, 0.0
        %v1808 = vadd.f32 %v1806, %v1807
        %v1809 = vsel %vm1069, %v1772, 0.0
        %v1810 = vadd.f32 %v1808, %v1809
        %v1811 = vsel %vm1069, %v1773, 0.0
        %v1812 = vadd.f32 %v1810, %v1811
        %v1813 = vsel %vm1069, %v1774, 0.0
        %v1814 = vadd.f32 %v1812, %v1813
        %v1815 = vsel %vm1069, %v1775, 0.0
        %v1816 = vadd.f32 %v1814, %v1815
        %v1817 = vsel %vm1069, %v1776, 0.0
        %v1818 = vadd.f32 %v1816, %v1817
        %v1819 = vsel %vm1069, %v1777, 0.0
        %v1820 = vadd.f32 %v1818, %v1819
        %v1821 = vsel %vm1069, %v1778, 0.0
        %v1822 = vadd.f32 %v1820, %v1821
        %v1823 = vsel %vm1069, %v1779, 0.0
        %v1824 = vadd.f32 %v1822, %v1823
        %v1825 = vsel %vm1069, %v1780, 0.0
        %v1826 = vadd.f32 %v1824, %v1825
        %v1827 = vsel %vm1069, %v1781, 0.0
        %v1828 = vadd.f32 %v1826, %v1827
        %v1829 = vsel %vm1069, %v1782, 0.0
        %v1830 = vadd.f32 %v1828, %v1829
        %v1831 = vsel %vm1069, %v1783, 0.0
        %v1832 = vadd.f32 %v1830, %v1831
        %v1833 = vsel %vm1069, %v1784, 0.0
        %v1834 = vadd.f32 %v1832, %v1833
        %v1835 = vsel %vm1069, %v1785, 0.0
        %v1836 = vadd.f32 %v1834, %v1835
        %v1837 = vsel %vm1069, %v1786, 0.0
        %v1838 = vadd.f32 %v1836, %v1837
        %v1839 = vsel %vm1069, %v1787, 0.0
        %v1840 = vadd.f32 %v1838, %v1839
        %v1841 = vsel %vm1069, %v1788, 0.0
        %v1842 = vadd.f32 %v1840, %v1841
        %v1843 = vsel %vm1069, %v1789, 0.0
        %v1844 = vadd.f32 %v1842, %v1843
        %v1845 = vsel %vm1069, %v1790, 0.0
        %v1846 = vadd.f32 %v1844, %v1845
        %v1847 = vsel %vm1069, %v1791, 0.0
        %v1848 = vadd.f32 %v1846, %v1847
        %v1849 = vsel %vm1069, %v1792, 0.0
        %v1850 = vadd.f32 %v1848, %v1849
        %v1851 = vsel %vm1069, %v1793, 0.0
        %v1852 = vadd.f32 %v1850, %v1851
        %v1853 = vsel %vm1069, %v1794, 0.0
        %v1854 = vadd.f32 %v1852, %v1853
        %v1855 = vsel %vm1069, %v1795, 0.0
        %v1856 = vadd.f32 %v1854, %v1855
        %v1857 = vsel %vm1069, %v1796, 0.0
        %v1858 = vadd.f32 %v1856, %v1857
        %v1859 = vsel %vm1069, %v1797, 0.0
        %v1860 = vadd.f32 %v1858, %v1859
        %v1861 = vrot.slane %v1860, 4
        %v1862 = vadd.f32 %v1860, %v1861
        %v1863 = vrot.slane %v1862, 2
        %v1864 = vadd.f32 %v1862, %v1863
        %v1865 = vrot.slane %v1864, 1
        %v1866 = vadd.f32 %v1864, %v1865
        %v1867 = vrcp.pop 256.0
        %v1868 = vmul.f32 %v1866, %v1867
        %v1869 = vsub.f32 %v1766, %v1868
        %v1870 = vsub.f32 %v1767, %v1868
        %v1871 = vsub.f32 %v1768, %v1868
        %v1872 = vsub.f32 %v1769, %v1868
        %v1873 = vsub.f32 %v1770, %v1868
        %v1874 = vsub.f32 %v1771, %v1868
        %v1875 = vsub.f32 %v1772, %v1868
        %v1876 = vsub.f32 %v1773, %v1868
        %v1877 = vsub.f32 %v1774, %v1868
        %v1878 = vsub.f32 %v1775, %v1868
        %v1879 = vsub.f32 %v1776, %v1868
        %v1880 = vsub.f32 %v1777, %v1868
        %v1881 = vsub.f32 %v1778, %v1868
        %v1882 = vsub.f32 %v1779, %v1868
        %v1883 = vsub.f32 %v1780, %v1868
        %v1884 = vsub.f32 %v1781, %v1868
        %v1885 = vsub.f32 %v1782, %v1868
        %v1886 = vsub.f32 %v1783, %v1868
        %v1887 = vsub.f32 %v1784, %v1868
        %v1888 = vsub.f32 %v1785, %v1868
        %v1889 = vsub.f32 %v1786, %v1868
        %v1890 = vsub.f32 %v1787, %v1868
        %v1891 = vsub.f32 %v1788, %v1868
        %v1892 = vsub.f32 %v1789, %v1868
        %v1893 = vsub.f32 %v1790, %v1868
        %v1894 = vsub.f32 %v1791, %v1868
        %v1895 = vsub.f32 %v1792, %v1868
        %v1896 = vsub.f32 %v1793, %v1868
        %v1897 = vsub.f32 %v1794, %v1868
        %v1898 = vsub.f32 %v1795, %v1868
        %v1899 = vsub.f32 %v1796, %v1868
        %v1900 = vsub.f32 %v1797, %v1868
        %v1901 = vmul.f32 %v1869, %v1869
        %v1902 = vmul.f32 %v1870, %v1870
        %v1903 = vmul.f32 %v1871, %v1871
        %v1904 = vmul.f32 %v1872, %v1872
        %v1905 = vmul.f32 %v1873, %v1873
        %v1906 = vmul.f32 %v1874, %v1874
        %v1907 = vmul.f32 %v1875, %v1875
        %v1908 = vmul.f32 %v1876, %v1876
        %v1909 = vmul.f32 %v1877, %v1877
        %v1910 = vmul.f32 %v1878, %v1878
        %v1911 = vmul.f32 %v1879, %v1879
        %v1912 = vmul.f32 %v1880, %v1880
        %v1913 = vmul.f32 %v1881, %v1881
        %v1914 = vmul.f32 %v1882, %v1882
        %v1915 = vmul.f32 %v1883, %v1883
        %v1916 = vmul.f32 %v1884, %v1884
        %v1917 = vmul.f32 %v1885, %v1885
        %v1918 = vmul.f32 %v1886, %v1886
        %v1919 = vmul.f32 %v1887, %v1887
        %v1920 = vmul.f32 %v1888, %v1888
        %v1921 = vmul.f32 %v1889, %v1889
        %v1922 = vmul.f32 %v1890, %v1890
        %v1923 = vmul.f32 %v1891, %v1891
        %v1924 = vmul.f32 %v1892, %v1892
        %v1925 = vmul.f32 %v1893, %v1893
        %v1926 = vmul.f32 %v1894, %v1894
        %v1927 = vmul.f32 %v1895, %v1895
        %v1928 = vmul.f32 %v1896, %v1896
        %v1929 = vmul.f32 %v1897, %v1897
        %v1930 = vmul.f32 %v1898, %v1898
        %v1931 = vmul.f32 %v1899, %v1899
        %v1932 = vmul.f32 %v1900, %v1900
        %v1933 = vsel %vm1069, %v1901, 0.0
        %v1934 = vsel %vm1069, %v1902, 0.0
        %v1935 = vadd.f32 %v1933, %v1934
        %v1936 = vsel %vm1069, %v1903, 0.0
        %v1937 = vadd.f32 %v1935, %v1936
        %v1938 = vsel %vm1069, %v1904, 0.0
        %v1939 = vadd.f32 %v1937, %v1938
        %v1940 = vsel %vm1069, %v1905, 0.0
        %v1941 = vadd.f32 %v1939, %v1940
        %v1942 = vsel %vm1069, %v1906, 0.0
        %v1943 = vadd.f32 %v1941, %v1942
        %v1944 = vsel %vm1069, %v1907, 0.0
        %v1945 = vadd.f32 %v1943, %v1944
        %v1946 = vsel %vm1069, %v1908, 0.0
        %v1947 = vadd.f32 %v1945, %v1946
        %v1948 = vsel %vm1069, %v1909, 0.0
        %v1949 = vadd.f32 %v1947, %v1948
        %v1950 = vsel %vm1069, %v1910, 0.0
        %v1951 = vadd.f32 %v1949, %v1950
        %v1952 = vsel %vm1069, %v1911, 0.0
        %v1953 = vadd.f32 %v1951, %v1952
        %v1954 = vsel %vm1069, %v1912, 0.0
        %v1955 = vadd.f32 %v1953, %v1954
        %v1956 = vsel %vm1069, %v1913, 0.0
        %v1957 = vadd.f32 %v1955, %v1956
        %v1958 = vsel %vm1069, %v1914, 0.0
        %v1959 = vadd.f32 %v1957, %v1958
        %v1960 = vsel %vm1069, %v1915, 0.0
        %v1961 = vadd.f32 %v1959, %v1960
        %v1962 = vsel %vm1069, %v1916, 0.0
        %v1963 = vadd.f32 %v1961, %v1962
        %v1964 = vsel %vm1069, %v1917, 0.0
        %v1965 = vadd.f32 %v1963, %v1964
        %v1966 = vsel %vm1069, %v1918, 0.0
        %v1967 = vadd.f32 %v1965, %v1966
        %v1968 = vsel %vm1069, %v1919, 0.0
        %v1969 = vadd.f32 %v1967, %v1968
        %v1970 = vsel %vm1069, %v1920, 0.0
        %v1971 = vadd.f32 %v1969, %v1970
        %v1972 = vsel %vm1069, %v1921, 0.0
        %v1973 = vadd.f32 %v1971, %v1972
        %v1974 = vsel %vm1069, %v1922, 0.0
        %v1975 = vadd.f32 %v1973, %v1974
        %v1976 = vsel %vm1069, %v1923, 0.0
        %v1977 = vadd.f32 %v1975, %v1976
        %v1978 = vsel %vm1069, %v1924, 0.0
        %v1979 = vadd.f32 %v1977, %v1978
        %v1980 = vsel %vm1069, %v1925, 0.0
        %v1981 = vadd.f32 %v1979, %v1980
        %v1982 = vsel %vm1069, %v1926, 0.0
        %v1983 = vadd.f32 %v1981, %v1982
        %v1984 = vsel %vm1069, %v1927, 0.0
        %v1985 = vadd.f32 %v1983, %v1984
        %v1986 = vsel %vm1069, %v1928, 0.0
        %v1987 = vadd.f32 %v1985, %v1986
        %v1988 = vsel %vm1069, %v1929, 0.0
        %v1989 = vadd.f32 %v1987, %v1988
        %v1990 = vsel %vm1069, %v1930, 0.0
        %v1991 = vadd.f32 %v1989, %v1990
        %v1992 = vsel %vm1069, %v1931, 0.0
        %v1993 = vadd.f32 %v1991, %v1992
        %v1994 = vsel %vm1069, %v1932, 0.0
        %v1995 = vadd.f32 %v1993, %v1994
        %v1996 = vrot.slane %v1995, 4
        %v1997 = vadd.f32 %v1995, %v1996
        %v1998 = vrot.slane %v1997, 2
        %v1999 = vadd.f32 %v1997, %v1998
        %v2000 = vrot.slane %v1999, 1
        %v2001 = vadd.f32 %v1999, %v2000
        %v2002 = vmul.f32 %v2001, %v1867
        %v2003 = vadd.f32 %v2002, 1e-05
        %v2004 = vrsqrt.pop %v2003
        %v2005 = vmul.f32 %v1869, %v2004
        %v2006 = vmul.f32 %v1870, %v2004
        %v2007 = vmul.f32 %v1871, %v2004
        %v2008 = vmul.f32 %v1872, %v2004
        %v2009 = vmul.f32 %v1873, %v2004
        %v2010 = vmul.f32 %v1874, %v2004
        %v2011 = vmul.f32 %v1875, %v2004
        %v2012 = vmul.f32 %v1876, %v2004
        %v2013 = vmul.f32 %v1877, %v2004
        %v2014 = vmul.f32 %v1878, %v2004
        %v2015 = vmul.f32 %v1879, %v2004
        %v2016 = vmul.f32 %v1880, %v2004
        %v2017 = vmul.f32 %v1881, %v2004
        %v2018 = vmul.f32 %v1882, %v2004
        %v2019 = vmul.f32 %v1883, %v2004
        %v2020 = vmul.f32 %v1884, %v2004
        %v2021 = vmul.f32 %v1885, %v2004
        %v2022 = vmul.f32 %v1886, %v2004
        %v2023 = vmul.f32 %v1887, %v2004
        %v2024 = vmul.f32 %v1888, %v2004
        %v2025 = vmul.f32 %v1889, %v2004
        %v2026 = vmul.f32 %v1890, %v2004
        %v2027 = vmul.f32 %v1891, %v2004
        %v2028 = vmul.f32 %v1892, %v2004
        %v2029 = vmul.f32 %v1893, %v2004
        %v2030 = vmul.f32 %v1894, %v2004
        %v2031 = vmul.f32 %v1895, %v2004
        %v2032 = vmul.f32 %v1896, %v2004
        %v2033 = vmul.f32 %v1897, %v2004
        %v2034 = vmul.f32 %v1898, %v2004
        %v2035 = vmul.f32 %v1899, %v2004
        %v2036 = vmul.f32 %v1900, %v2004
        %v2037 = vmax.f32 %v2005, 0.0
        %v2038 = vmax.f32 %v2006, 0.0
        %v2039 = vmax.f32 %v2007, 0.0
        %v2040 = vmax.f32 %v2008, 0.0
        %v2041 = vmax.f32 %v2009, 0.0
        %v2042 = vmax.f32 %v2010, 0.0
        %v2043 = vmax.f32 %v2011, 0.0
        %v2044 = vmax.f32 %v2012, 0.0
        %v2045 = vmax.f32 %v2013, 0.0
        %v2046 = vmax.f32 %v2014, 0.0
        %v2047 = vmax.f32 %v2015, 0.0
        %v2048 = vmax.f32 %v2016, 0.0
        %v2049 = vmax.f32 %v2017, 0.0
        %v2050 = vmax.f32 %v2018, 0.0
        %v2051 = vmax.f32 %v2019, 0.0
        %v2052 = vmax.f32 %v2020, 0.0
        %v2053 = vmax.f32 %v2021, 0.0
        %v2054 = vmax.f32 %v2022, 0.0
        %v2055 = vmax.f32 %v2023, 0.0
        %v2056 = vmax.f32 %v2024, 0.0
        %v2057 = vmax.f32 %v2025, 0.0
        %v2058 = vmax.f32 %v2026, 0.0
        %v2059 = vmax.f32 %v2027, 0.0
        %v2060 = vmax.f32 %v2028, 0.0
        %v2061 = vmax.f32 %v2029, 0.0
        %v2062 = vmax.f32 %v2030, 0.0
        %v2063 = vmax.f32 %v2031, 0.0
        %v2064 = vmax.f32 %v2032, 0.0
        %v2065 = vmax.f32 %v2033, 0.0
        %v2066 = vmax.f32 %v2034, 0.0
        %v2067 = vmax.f32 %v2035, 0.0
        %v2068 = vmax.f32 %v2036, 0.0
        %v2069 = vpack.c.bf16 %v2038, %v2037
        %v2070 = vpack.c.bf16 %v2040, %v2039
        %v2071 = vpack.c.bf16 %v2042, %v2041
        %v2072 = vpack.c.bf16 %v2044, %v2043
        %v2073 = vpack.c.bf16 %v2046, %v2045
        %v2074 = vpack.c.bf16 %v2048, %v2047
        %v2075 = vpack.c.bf16 %v2050, %v2049
        %v2076 = vpack.c.bf16 %v2052, %v2051
        %v2077 = vpack.c.bf16 %v2054, %v2053
        %v2078 = vpack.c.bf16 %v2056, %v2055
        %v2079 = vpack.c.bf16 %v2058, %v2057
        %v2080 = vpack.c.bf16 %v2060, %v2059
        %v2081 = vpack.c.bf16 %v2062, %v2061
        %v2082 = vpack.c.bf16 %v2064, %v2063
        %v2083 = vpack.c.bf16 %v2066, %v2065
        %v2084 = vpack.c.bf16 %v2068, %v2067
        %v2086 = vshrl.u32 %v2069, 16
        %v2089 = vshrl.u32 %v2070, 16
        %v2092 = vshrl.u32 %v2071, 16
        %v2095 = vshrl.u32 %v2072, 16
        %v2098 = vshrl.u32 %v2073, 16
        %v2101 = vshrl.u32 %v2074, 16
        %v2104 = vshrl.u32 %v2075, 16
        %v2107 = vshrl.u32 %v2076, 16
        %v2110 = vshrl.u32 %v2077, 16
        %v2113 = vshrl.u32 %v2078, 16
        %v2116 = vshrl.u32 %v2079, 16
        %v2119 = vshrl.u32 %v2080, 16
        %v2122 = vshrl.u32 %v2081, 16
        %v2125 = vshrl.u32 %v2082, 16
        %v2128 = vshrl.u32 %v2083, 16
        %v2131 = vshrl.u32 %v2084, 16
        %v2149 = vld [vmem:[%s331] sm:$0x1]
        %v2150 = vsel %vm334, %v2086, %v2149
        %2151 = vst [vmem:[%s331] sm:$0x1] %v2150
        %v2152 = vld [vmem:[%s331 + $0x8] sm:$0x1]
        %v2153 = vsel %vm334, %v2089, %v2152
        %2154 = vst [vmem:[%s331 + $0x8] sm:$0x1] %v2153
        %v2155 = vld [vmem:[%s331 + $0x10] sm:$0x1]
        %v2156 = vsel %vm334, %v2092, %v2155
        %2157 = vst [vmem:[%s331 + $0x10] sm:$0x1] %v2156
        %v2158 = vld [vmem:[%s331 + $0x18] sm:$0x1]
        %v2159 = vsel %vm334, %v2095, %v2158
        %2160 = vst [vmem:[%s331 + $0x18] sm:$0x1] %v2159
        %v2161 = vld [vmem:[%s331 + $0x20] sm:$0x1]
        %v2162 = vsel %vm334, %v2098, %v2161
        %2163 = vst [vmem:[%s331 + $0x20] sm:$0x1] %v2162
        %v2164 = vld [vmem:[%s331 + $0x28] sm:$0x1]
        %v2165 = vsel %vm334, %v2101, %v2164
        %2166 = vst [vmem:[%s331 + $0x28] sm:$0x1] %v2165
        %v2167 = vld [vmem:[%s331 + $0x30] sm:$0x1]
        %v2168 = vsel %vm334, %v2104, %v2167
        %2169 = vst [vmem:[%s331 + $0x30] sm:$0x1] %v2168
        %v2170 = vld [vmem:[%s331 + $0x38] sm:$0x1]
        %v2171 = vsel %vm334, %v2107, %v2170
        %2172 = vst [vmem:[%s331 + $0x38] sm:$0x1] %v2171
        %v2173 = vld [vmem:[%s331 + $0x40] sm:$0x1]
        %v2174 = vsel %vm334, %v2110, %v2173
        %2175 = vst [vmem:[%s331 + $0x40] sm:$0x1] %v2174
        %v2176 = vld [vmem:[%s331 + $0x48] sm:$0x1]
        %v2177 = vsel %vm334, %v2113, %v2176
        %2178 = vst [vmem:[%s331 + $0x48] sm:$0x1] %v2177
        %v2179 = vld [vmem:[%s331 + $0x50] sm:$0x1]
        %v2180 = vsel %vm334, %v2116, %v2179
        %2181 = vst [vmem:[%s331 + $0x50] sm:$0x1] %v2180
        %v2182 = vld [vmem:[%s331 + $0x58] sm:$0x1]
        %v2183 = vsel %vm334, %v2119, %v2182
        %2184 = vst [vmem:[%s331 + $0x58] sm:$0x1] %v2183
        %v2185 = vld [vmem:[%s331 + $0x60] sm:$0x1]
        %v2186 = vsel %vm334, %v2122, %v2185
        %2187 = vst [vmem:[%s331 + $0x60] sm:$0x1] %v2186
        %v2188 = vld [vmem:[%s331 + $0x68] sm:$0x1]
        %v2189 = vsel %vm334, %v2125, %v2188
        %2190 = vst [vmem:[%s331 + $0x68] sm:$0x1] %v2189
        %v2191 = vld [vmem:[%s331 + $0x70] sm:$0x1]
        %v2192 = vsel %vm334, %v2128, %v2191
        %2193 = vst [vmem:[%s331 + $0x70] sm:$0x1] %v2192
        %v2194 = vld [vmem:[%s331 + $0x78] sm:$0x1]
        %v2195 = vsel %vm334, %v2131, %v2194
        %2196 = vst [vmem:[%s331 + $0x78] sm:$0x1] %v2195
        %v2197 = vrot.slane %v2086, 7
        %v2198 = vshll.u32 %v2069, 16
        %v2200 = vor.u32 %v2197, %v2198
        %v2201 = vrot.slane %v2089, 7
        %v2202 = vshll.u32 %v2070, 16
        %v2204 = vor.u32 %v2201, %v2202
        %v2205 = vrot.slane %v2092, 7
        %v2206 = vshll.u32 %v2071, 16
        %v2208 = vor.u32 %v2205, %v2206
        %v2209 = vrot.slane %v2095, 7
        %v2210 = vshll.u32 %v2072, 16
        %v2212 = vor.u32 %v2209, %v2210
        %v2213 = vrot.slane %v2098, 7
        %v2214 = vshll.u32 %v2073, 16
        %v2216 = vor.u32 %v2213, %v2214
        %v2217 = vrot.slane %v2101, 7
        %v2218 = vshll.u32 %v2074, 16
        %v2220 = vor.u32 %v2217, %v2218
        %v2221 = vrot.slane %v2104, 7
        %v2222 = vshll.u32 %v2075, 16
        %v2224 = vor.u32 %v2221, %v2222
        %v2225 = vrot.slane %v2107, 7
        %v2226 = vshll.u32 %v2076, 16
        %v2228 = vor.u32 %v2225, %v2226
        %v2229 = vrot.slane %v2110, 7
        %v2230 = vshll.u32 %v2077, 16
        %v2232 = vor.u32 %v2229, %v2230
        %v2233 = vrot.slane %v2113, 7
        %v2234 = vshll.u32 %v2078, 16
        %v2236 = vor.u32 %v2233, %v2234
        %v2237 = vrot.slane %v2116, 7
        %v2238 = vshll.u32 %v2079, 16
        %v2240 = vor.u32 %v2237, %v2238
        %v2241 = vrot.slane %v2119, 7
        %v2242 = vshll.u32 %v2080, 16
        %v2244 = vor.u32 %v2241, %v2242
        %v2245 = vrot.slane %v2122, 7
        %v2246 = vshll.u32 %v2081, 16
        %v2248 = vor.u32 %v2245, %v2246
        %v2249 = vrot.slane %v2125, 7
        %v2250 = vshll.u32 %v2082, 16
        %v2252 = vor.u32 %v2249, %v2250
        %v2253 = vrot.slane %v2128, 7
        %v2254 = vshll.u32 %v2083, 16
        %v2256 = vor.u32 %v2253, %v2254
        %v2257 = vrot.slane %v2131, 7
        %v2258 = vshll.u32 %v2084, 16
        %v2260 = vor.u32 %v2257, %v2258
        %v2277 = vld [vmem:[%s331] sm:$0xff]
        %v2278 = vsel %vm465, %v2200, %v2277
        %2279 = vst [vmem:[%s331] sm:$0xff] %v2278
        %v2280 = vld [vmem:[%s331 + $0x8] sm:$0xff]
        %v2281 = vsel %vm465, %v2204, %v2280
        %2282 = vst [vmem:[%s331 + $0x8] sm:$0xff] %v2281
        %v2283 = vld [vmem:[%s331 + $0x10] sm:$0xff]
        %v2284 = vsel %vm465, %v2208, %v2283
        %2285 = vst [vmem:[%s331 + $0x10] sm:$0xff] %v2284
        %v2286 = vld [vmem:[%s331 + $0x18] sm:$0xff]
        %v2287 = vsel %vm465, %v2212, %v2286
        %2288 = vst [vmem:[%s331 + $0x18] sm:$0xff] %v2287
        %v2289 = vld [vmem:[%s331 + $0x20] sm:$0xff]
        %v2290 = vsel %vm465, %v2216, %v2289
        %2291 = vst [vmem:[%s331 + $0x20] sm:$0xff] %v2290
        %v2292 = vld [vmem:[%s331 + $0x28] sm:$0xff]
        %v2293 = vsel %vm465, %v2220, %v2292
        %2294 = vst [vmem:[%s331 + $0x28] sm:$0xff] %v2293
        %v2295 = vld [vmem:[%s331 + $0x30] sm:$0xff]
        %v2296 = vsel %vm465, %v2224, %v2295
        %2297 = vst [vmem:[%s331 + $0x30] sm:$0xff] %v2296
        %v2298 = vld [vmem:[%s331 + $0x38] sm:$0xff]
        %v2299 = vsel %vm465, %v2228, %v2298
        %2300 = vst [vmem:[%s331 + $0x38] sm:$0xff] %v2299
        %v2301 = vld [vmem:[%s331 + $0x40] sm:$0xff]
        %v2302 = vsel %vm465, %v2232, %v2301
        %2303 = vst [vmem:[%s331 + $0x40] sm:$0xff] %v2302
        %v2304 = vld [vmem:[%s331 + $0x48] sm:$0xff]
        %v2305 = vsel %vm465, %v2236, %v2304
        %2306 = vst [vmem:[%s331 + $0x48] sm:$0xff] %v2305
        %v2307 = vld [vmem:[%s331 + $0x50] sm:$0xff]
        %v2308 = vsel %vm465, %v2240, %v2307
        %2309 = vst [vmem:[%s331 + $0x50] sm:$0xff] %v2308
        %v2310 = vld [vmem:[%s331 + $0x58] sm:$0xff]
        %v2311 = vsel %vm465, %v2244, %v2310
        %2312 = vst [vmem:[%s331 + $0x58] sm:$0xff] %v2311
        %v2313 = vld [vmem:[%s331 + $0x60] sm:$0xff]
        %v2314 = vsel %vm465, %v2248, %v2313
        %2315 = vst [vmem:[%s331 + $0x60] sm:$0xff] %v2314
        %v2316 = vld [vmem:[%s331 + $0x68] sm:$0xff]
        %v2317 = vsel %vm465, %v2252, %v2316
        %2318 = vst [vmem:[%s331 + $0x68] sm:$0xff] %v2317
        %v2319 = vld [vmem:[%s331 + $0x70] sm:$0xff]
        %v2320 = vsel %vm465, %v2256, %v2319
        %2321 = vst [vmem:[%s331 + $0x70] sm:$0xff] %v2320
        %v2322 = vld [vmem:[%s331 + $0x78] sm:$0xff]
        %v2323 = vsel %vm465, %v2260, %v2322
        %2324 = vst [vmem:[%s331 + $0x78] sm:$0xff] %v2323
        %2341 = vrot.lane.b32.xlu0 %v2069, 4
        %v2342 = vpop.permute.xlu0 %2341
        %2343 = vrot.lane.b32.xlu0 %v2070, 4
        %v2344 = vpop.permute.xlu0 %2343
        %2345 = vrot.lane.b32.xlu0 %v2071, 4
        %v2346 = vpop.permute.xlu0 %2345
        %2347 = vrot.lane.b32.xlu0 %v2072, 4
        %v2348 = vpop.permute.xlu0 %2347
        %2349 = vrot.lane.b32.xlu0 %v2073, 4
        %v2350 = vpop.permute.xlu0 %2349
        %2351 = vrot.lane.b32.xlu0 %v2074, 4
        %v2352 = vpop.permute.xlu0 %2351
        %2353 = vrot.lane.b32.xlu0 %v2075, 4
        %v2354 = vpop.permute.xlu0 %2353
        %2355 = vrot.lane.b32.xlu0 %v2076, 4
        %v2356 = vpop.permute.xlu0 %2355
        %2357 = vrot.lane.b32.xlu0 %v2077, 4
        %v2358 = vpop.permute.xlu0 %2357
        %2359 = vrot.lane.b32.xlu0 %v2078, 4
        %v2360 = vpop.permute.xlu0 %2359
        %2361 = vrot.lane.b32.xlu0 %v2079, 4
        %v2362 = vpop.permute.xlu0 %2361
        %2363 = vrot.lane.b32.xlu0 %v2080, 4
        %v2364 = vpop.permute.xlu0 %2363
        %2365 = vrot.lane.b32.xlu0 %v2081, 4
        %v2366 = vpop.permute.xlu0 %2365
        %2367 = vrot.lane.b32.xlu0 %v2082, 4
        %v2368 = vpop.permute.xlu0 %2367
        %2369 = vrot.lane.b32.xlu0 %v2083, 4
        %v2370 = vpop.permute.xlu0 %2369
        %2371 = vrot.lane.b32.xlu0 %v2084, 4
        %v2372 = vpop.permute.xlu0 %2371
        %2389 = vst.msk [vmem:[%s331] sm:$0xff] %vm578, %v2342
        %2390 = vst.msk [vmem:[%s331 + $0x8] sm:$0xff] %vm578, %v2344
        %2391 = vst.msk [vmem:[%s331 + $0x10] sm:$0xff] %vm578, %v2346
        %2392 = vst.msk [vmem:[%s331 + $0x18] sm:$0xff] %vm578, %v2348
        %2393 = vst.msk [vmem:[%s331 + $0x20] sm:$0xff] %vm578, %v2350
        %2394 = vst.msk [vmem:[%s331 + $0x28] sm:$0xff] %vm578, %v2352
        %2395 = vst.msk [vmem:[%s331 + $0x30] sm:$0xff] %vm578, %v2354
        %2396 = vst.msk [vmem:[%s331 + $0x38] sm:$0xff] %vm578, %v2356
        %2397 = vst.msk [vmem:[%s331 + $0x40] sm:$0xff] %vm578, %v2358
        %2398 = vst.msk [vmem:[%s331 + $0x48] sm:$0xff] %vm578, %v2360
        %2399 = vst.msk [vmem:[%s331 + $0x50] sm:$0xff] %vm578, %v2362
        %2400 = vst.msk [vmem:[%s331 + $0x58] sm:$0xff] %vm578, %v2364
        %2401 = vst.msk [vmem:[%s331 + $0x60] sm:$0xff] %vm578, %v2366
        %2402 = vst.msk [vmem:[%s331 + $0x68] sm:$0xff] %vm578, %v2368
        %2403 = vst.msk [vmem:[%s331 + $0x70] sm:$0xff] %vm578, %v2370
        %2404 = vst.msk [vmem:[%s331 + $0x78] sm:$0xff] %vm578, %v2372
        %v2405 = vrot.slane %v2198, 1
        %v2406 = vor.u32 %v2086, %v2405
        %v2407 = vrot.slane %v2202, 1
        %v2408 = vor.u32 %v2089, %v2407
        %v2409 = vrot.slane %v2206, 1
        %v2410 = vor.u32 %v2092, %v2409
        %v2411 = vrot.slane %v2210, 1
        %v2412 = vor.u32 %v2095, %v2411
        %v2413 = vrot.slane %v2214, 1
        %v2414 = vor.u32 %v2098, %v2413
        %v2415 = vrot.slane %v2218, 1
        %v2416 = vor.u32 %v2101, %v2415
        %v2417 = vrot.slane %v2222, 1
        %v2418 = vor.u32 %v2104, %v2417
        %v2419 = vrot.slane %v2226, 1
        %v2420 = vor.u32 %v2107, %v2419
        %v2421 = vrot.slane %v2230, 1
        %v2422 = vor.u32 %v2110, %v2421
        %v2423 = vrot.slane %v2234, 1
        %v2424 = vor.u32 %v2113, %v2423
        %v2425 = vrot.slane %v2238, 1
        %v2426 = vor.u32 %v2116, %v2425
        %v2427 = vrot.slane %v2242, 1
        %v2428 = vor.u32 %v2119, %v2427
        %v2429 = vrot.slane %v2246, 1
        %v2430 = vor.u32 %v2122, %v2429
        %v2431 = vrot.slane %v2250, 1
        %v2432 = vor.u32 %v2125, %v2431
        %v2433 = vrot.slane %v2254, 1
        %v2434 = vor.u32 %v2128, %v2433
        %v2435 = vrot.slane %v2258, 1
        %v2436 = vor.u32 %v2131, %v2435
        %2437 = vrot.lane.b32.xlu0 %v2406, 8
        %v2438 = vpop.permute.xlu0 %2437
        %2439 = vrot.lane.b32.xlu0 %v2408, 8
        %v2440 = vpop.permute.xlu0 %2439
        %2441 = vrot.lane.b32.xlu0 %v2410, 8
        %v2442 = vpop.permute.xlu0 %2441
        %2443 = vrot.lane.b32.xlu0 %v2412, 8
        %v2444 = vpop.permute.xlu0 %2443
        %2445 = vrot.lane.b32.xlu0 %v2414, 8
        %v2446 = vpop.permute.xlu0 %2445
        %2447 = vrot.lane.b32.xlu0 %v2416, 8
        %v2448 = vpop.permute.xlu0 %2447
        %2449 = vrot.lane.b32.xlu0 %v2418, 8
        %v2450 = vpop.permute.xlu0 %2449
        %2451 = vrot.lane.b32.xlu0 %v2420, 8
        %v2452 = vpop.permute.xlu0 %2451
        %2453 = vrot.lane.b32.xlu0 %v2422, 8
        %v2454 = vpop.permute.xlu0 %2453
        %2455 = vrot.lane.b32.xlu0 %v2424, 8
        %v2456 = vpop.permute.xlu0 %2455
        %2457 = vrot.lane.b32.xlu0 %v2426, 8
        %v2458 = vpop.permute.xlu0 %2457
        %2459 = vrot.lane.b32.xlu0 %v2428, 8
        %v2460 = vpop.permute.xlu0 %2459
        %2461 = vrot.lane.b32.xlu0 %v2430, 8
        %v2462 = vpop.permute.xlu0 %2461
        %2463 = vrot.lane.b32.xlu0 %v2432, 8
        %v2464 = vpop.permute.xlu0 %2463
        %2465 = vrot.lane.b32.xlu0 %v2434, 8
        %v2466 = vpop.permute.xlu0 %2465
        %2467 = vrot.lane.b32.xlu0 %v2436, 8
        %v2468 = vpop.permute.xlu0 %2467
        %v2485 = vld [vmem:[%s331] sm:$0xff]
        %v2486 = vsel %vm677, %v2438, %v2485
        %2487 = vst [vmem:[%s331] sm:$0xff] %v2486
        %v2488 = vld [vmem:[%s331 + $0x8] sm:$0xff]
        %v2489 = vsel %vm677, %v2440, %v2488
        %2490 = vst [vmem:[%s331 + $0x8] sm:$0xff] %v2489
        %v2491 = vld [vmem:[%s331 + $0x10] sm:$0xff]
        %v2492 = vsel %vm677, %v2442, %v2491
        %2493 = vst [vmem:[%s331 + $0x10] sm:$0xff] %v2492
        %v2494 = vld [vmem:[%s331 + $0x18] sm:$0xff]
        %v2495 = vsel %vm677, %v2444, %v2494
        %2496 = vst [vmem:[%s331 + $0x18] sm:$0xff] %v2495
        %v2497 = vld [vmem:[%s331 + $0x20] sm:$0xff]
        %v2498 = vsel %vm677, %v2446, %v2497
        %2499 = vst [vmem:[%s331 + $0x20] sm:$0xff] %v2498
        %v2500 = vld [vmem:[%s331 + $0x28] sm:$0xff]
        %v2501 = vsel %vm677, %v2448, %v2500
        %2502 = vst [vmem:[%s331 + $0x28] sm:$0xff] %v2501
        %v2503 = vld [vmem:[%s331 + $0x30] sm:$0xff]
        %v2504 = vsel %vm677, %v2450, %v2503
        %2505 = vst [vmem:[%s331 + $0x30] sm:$0xff] %v2504
        %v2506 = vld [vmem:[%s331 + $0x38] sm:$0xff]
        %v2507 = vsel %vm677, %v2452, %v2506
        %2508 = vst [vmem:[%s331 + $0x38] sm:$0xff] %v2507
        %v2509 = vld [vmem:[%s331 + $0x40] sm:$0xff]
        %v2510 = vsel %vm677, %v2454, %v2509
        %2511 = vst [vmem:[%s331 + $0x40] sm:$0xff] %v2510
        %v2512 = vld [vmem:[%s331 + $0x48] sm:$0xff]
        %v2513 = vsel %vm677, %v2456, %v2512
        %2514 = vst [vmem:[%s331 + $0x48] sm:$0xff] %v2513
        %v2515 = vld [vmem:[%s331 + $0x50] sm:$0xff]
        %v2516 = vsel %vm677, %v2458, %v2515
        %2517 = vst [vmem:[%s331 + $0x50] sm:$0xff] %v2516
        %v2518 = vld [vmem:[%s331 + $0x58] sm:$0xff]
        %v2519 = vsel %vm677, %v2460, %v2518
        %2520 = vst [vmem:[%s331 + $0x58] sm:$0xff] %v2519
        %v2521 = vld [vmem:[%s331 + $0x60] sm:$0xff]
        %v2522 = vsel %vm677, %v2462, %v2521
        %2523 = vst [vmem:[%s331 + $0x60] sm:$0xff] %v2522
        %v2524 = vld [vmem:[%s331 + $0x68] sm:$0xff]
        %v2525 = vsel %vm677, %v2464, %v2524
        %2526 = vst [vmem:[%s331 + $0x68] sm:$0xff] %v2525
        %v2527 = vld [vmem:[%s331 + $0x70] sm:$0xff]
        %v2528 = vsel %vm677, %v2466, %v2527
        %2529 = vst [vmem:[%s331 + $0x70] sm:$0xff] %v2528
        %v2530 = vld [vmem:[%s331 + $0x78] sm:$0xff]
        %v2531 = vsel %vm677, %v2468, %v2530
        %2532 = vst [vmem:[%s331 + $0x78] sm:$0xff] %v2531
        %2533 = vrot.lane.b32.xlu0 %v2198, 8
        %v2534 = vpop.permute.xlu0 %2533
        %2535 = vrot.lane.b32.xlu0 %v2202, 8
        %v2536 = vpop.permute.xlu0 %2535
        %2537 = vrot.lane.b32.xlu0 %v2206, 8
        %v2538 = vpop.permute.xlu0 %2537
        %2539 = vrot.lane.b32.xlu0 %v2210, 8
        %v2540 = vpop.permute.xlu0 %2539
        %2541 = vrot.lane.b32.xlu0 %v2214, 8
        %v2542 = vpop.permute.xlu0 %2541
        %2543 = vrot.lane.b32.xlu0 %v2218, 8
        %v2544 = vpop.permute.xlu0 %2543
        %2545 = vrot.lane.b32.xlu0 %v2222, 8
        %v2546 = vpop.permute.xlu0 %2545
        %2547 = vrot.lane.b32.xlu0 %v2226, 8
        %v2548 = vpop.permute.xlu0 %2547
        %2549 = vrot.lane.b32.xlu0 %v2230, 8
        %v2550 = vpop.permute.xlu0 %2549
        %2551 = vrot.lane.b32.xlu0 %v2234, 8
        %v2552 = vpop.permute.xlu0 %2551
        %2553 = vrot.lane.b32.xlu0 %v2238, 8
        %v2554 = vpop.permute.xlu0 %2553
        %2555 = vrot.lane.b32.xlu0 %v2242, 8
        %v2556 = vpop.permute.xlu0 %2555
        %2557 = vrot.lane.b32.xlu0 %v2246, 8
        %v2558 = vpop.permute.xlu0 %2557
        %2559 = vrot.lane.b32.xlu0 %v2250, 8
        %v2560 = vpop.permute.xlu0 %2559
        %2561 = vrot.lane.b32.xlu0 %v2254, 8
        %v2562 = vpop.permute.xlu0 %2561
        %2563 = vrot.lane.b32.xlu0 %v2258, 8
        %v2564 = vpop.permute.xlu0 %2563
        %v2581 = vld [vmem:[%s331] sm:$0x80]
        %v2582 = vsel %vm776, %v2534, %v2581
        %2583 = vst [vmem:[%s331] sm:$0x80] %v2582
        %v2584 = vld [vmem:[%s331 + $0x8] sm:$0x80]
        %v2585 = vsel %vm776, %v2536, %v2584
        %2586 = vst [vmem:[%s331 + $0x8] sm:$0x80] %v2585
        %v2587 = vld [vmem:[%s331 + $0x10] sm:$0x80]
        %v2588 = vsel %vm776, %v2538, %v2587
        %2589 = vst [vmem:[%s331 + $0x10] sm:$0x80] %v2588
        %v2590 = vld [vmem:[%s331 + $0x18] sm:$0x80]
        %v2591 = vsel %vm776, %v2540, %v2590
        %2592 = vst [vmem:[%s331 + $0x18] sm:$0x80] %v2591
        %v2593 = vld [vmem:[%s331 + $0x20] sm:$0x80]
        %v2594 = vsel %vm776, %v2542, %v2593
        %2595 = vst [vmem:[%s331 + $0x20] sm:$0x80] %v2594
        %v2596 = vld [vmem:[%s331 + $0x28] sm:$0x80]
        %v2597 = vsel %vm776, %v2544, %v2596
        %2598 = vst [vmem:[%s331 + $0x28] sm:$0x80] %v2597
        %v2599 = vld [vmem:[%s331 + $0x30] sm:$0x80]
        %v2600 = vsel %vm776, %v2546, %v2599
        %2601 = vst [vmem:[%s331 + $0x30] sm:$0x80] %v2600
        %v2602 = vld [vmem:[%s331 + $0x38] sm:$0x80]
        %v2603 = vsel %vm776, %v2548, %v2602
        %2604 = vst [vmem:[%s331 + $0x38] sm:$0x80] %v2603
        %v2605 = vld [vmem:[%s331 + $0x40] sm:$0x80]
        %v2606 = vsel %vm776, %v2550, %v2605
        %2607 = vst [vmem:[%s331 + $0x40] sm:$0x80] %v2606
        %v2608 = vld [vmem:[%s331 + $0x48] sm:$0x80]
        %v2609 = vsel %vm776, %v2552, %v2608
        %2610 = vst [vmem:[%s331 + $0x48] sm:$0x80] %v2609
        %v2611 = vld [vmem:[%s331 + $0x50] sm:$0x80]
        %v2612 = vsel %vm776, %v2554, %v2611
        %2613 = vst [vmem:[%s331 + $0x50] sm:$0x80] %v2612
        %v2614 = vld [vmem:[%s331 + $0x58] sm:$0x80]
        %v2615 = vsel %vm776, %v2556, %v2614
        %2616 = vst [vmem:[%s331 + $0x58] sm:$0x80] %v2615
        %v2617 = vld [vmem:[%s331 + $0x60] sm:$0x80]
        %v2618 = vsel %vm776, %v2558, %v2617
        %2619 = vst [vmem:[%s331 + $0x60] sm:$0x80] %v2618
        %v2620 = vld [vmem:[%s331 + $0x68] sm:$0x80]
        %v2621 = vsel %vm776, %v2560, %v2620
        %2622 = vst [vmem:[%s331 + $0x68] sm:$0x80] %v2621
        %v2623 = vld [vmem:[%s331 + $0x70] sm:$0x80]
        %v2624 = vsel %vm776, %v2562, %v2623
        %2625 = vst [vmem:[%s331 + $0x70] sm:$0x80] %v2624
        %v2626 = vld [vmem:[%s331 + $0x78] sm:$0x80]
        %v2627 = vsel %vm776, %v2564, %v2626
        %2628 = vst [vmem:[%s331 + $0x78] sm:$0x80] %v2627
        %v2629 = vld [vmem:[%s825] sm:$0xff]
        %2630 = vst.msk [vmem:[#allocation2] sm:$0xff] %vm827, %v2629
        %v2631 = vld [vmem:[%s829] sm:$0xff]
        %2632 = vst.msk [vmem:[%s831] sm:$0xff] %vm827, %v2631
        %v2633 = vld [vmem:[#allocation2] sm:$0xff]
        %v2634 = vld [vmem:[#allocation2 + $0x8] sm:$0xff]
        %v2635 = vld [vmem:[#allocation2 + $0x10] sm:$0xff]
        %v2636 = vld [vmem:[#allocation2 + $0x18] sm:$0xff]
        %v2637 = vld [vmem:[#allocation2 + $0x20] sm:$0xff]
        %v2638 = vld [vmem:[#allocation2 + $0x28] sm:$0xff]
        %v2639 = vld [vmem:[#allocation2 + $0x30] sm:$0xff]
        %v2640 = vld [vmem:[#allocation2 + $0x38] sm:$0xff]
        %v2641 = vld [vmem:[#allocation2 + $0x40] sm:$0xff]
        %v2642 = vld [vmem:[#allocation2 + $0x48] sm:$0xff]
        %v2643 = vld [vmem:[#allocation2 + $0x50] sm:$0xff]
        %v2644 = vld [vmem:[#allocation2 + $0x58] sm:$0xff]
        %v2645 = vld [vmem:[#allocation2 + $0x60] sm:$0xff]
        %v2646 = vld [vmem:[#allocation2 + $0x68] sm:$0xff]
        %v2647 = vld [vmem:[#allocation2 + $0x70] sm:$0xff]
        %v2648 = vld [vmem:[#allocation2 + $0x78] sm:$0xff]
        %v2649 = vld [vmem:[#allocation9] sm:$0xf]
        %v2650 = vld [vmem:[#allocation9 + $0x4] sm:$0x3]
        %v2653 = vunpack.c.l.b16 %v2649
        %v2654 = vunpack.c.l.b16 %v2650
        %v2655 = vpack.c.b16 %v2654, %v2653
        %v2657 = vsel %vm827, %v2633, 0
        %v2660 = vsel %vm827, %v2634, 0
        %v2663 = vsel %vm827, %v2635, 0
        %v2666 = vsel %vm827, %v2636, 0
        %v2669 = vsel %vm827, %v2637, 0
        %v2672 = vsel %vm827, %v2638, 0
        %v2675 = vsel %vm827, %v2639, 0
        %v2678 = vsel %vm827, %v2640, 0
        %v2681 = vsel %vm827, %v2641, 0
        %v2684 = vsel %vm827, %v2642, 0
        %v2687 = vsel %vm827, %v2643, 0
        %v2690 = vsel %vm827, %v2644, 0
        %v2693 = vsel %vm827, %v2645, 0
        %v2696 = vsel %vm827, %v2646, 0
        %v2699 = vsel %vm827, %v2647, 0
        %v2702 = vsel %vm827, %v2648, 0
        %v2705 = vsel %vm904, %v2655, 0
        %2707 = vmatprep.subr.bf16.mxu0 0
        %2708 = vmatpush1.bf16.msra.mxu0 %v2705
        %2709 = vmatprep.subr.bf16.mxu0 0
        %2710 = vmatpush1.bf16.msra.mxu0 0
        %2711 = vmatprep.subr.bf16.mxu0 0
        %2712 = vmatpush1.bf16.msra.mxu0 0
        %2713 = vmatprep.subr.bf16.mxu0 0
        %2714 = vmatpush1.bf16.msra.mxu0 0
        %2715 = vmatprep.subr.bf16.mxu0 0
        %2716 = vmatpush1.bf16.msra.mxu0 0
        %2717 = vmatprep.subr.bf16.mxu0 0
        %2718 = vmatpush1.bf16.msra.mxu0 0
        %2719 = vmatprep.subr.bf16.mxu0 0
        %2720 = vmatpush1.bf16.msra.mxu0 0
        %2721 = vmatprep.subr.bf16.mxu0 0
        %2722 = vmatpush1.bf16.msra.mxu0 0
        %2723 = vmatprep.subr.bf16.mxu0 0
        %2724 = vmatpush1.bf16.msra.mxu0 0
        %2725 = vmatprep.subr.bf16.mxu0 0
        %2726 = vmatpush1.bf16.msra.mxu0 0
        %2727 = vmatprep.subr.bf16.mxu0 0
        %2728 = vmatpush1.bf16.msra.mxu0 0
        %2729 = vmatprep.subr.bf16.mxu0 0
        %2730 = vmatpush1.bf16.msra.mxu0 0
        %2731 = vmatprep.subr.bf16.mxu0 0
        %2732 = vmatpush1.bf16.msra.mxu0 0
        %2733 = vmatprep.subr.bf16.mxu0 0
        %2734 = vmatpush1.bf16.msra.mxu0 0
        %2735 = vmatprep.subr.bf16.mxu0 0
        %2736 = vmatpush1.bf16.msra.mxu0 0
        %2737 = vmatprep.subr.bf16.mxu0 0
        %2738 = vmatpush1.bf16.msra.mxu0 0
        %2739 = vmatprep.mubr.bf16.mxu0 0
        %2740 = vmatmul.mubr.bf16.gmra.mrb[0].mxu0 %v2657
        %v2741 = vpop.f32.mrb[0].mxu0
        %v2742 = vadd.f32 0.0, %v2741
        %v2743 = vpop.f32.mrb[0].mxu0
        %v2744 = vpop.f32.mrb[0].mxu0
        %v2745 = vadd.f32 0.0, %v2744
        %v2746 = vpop.f32.mrb[0].mxu0
        %2747 = vmatprep.mubr.bf16.mxu0 0
        %2748 = vmatmul.mubr.bf16.gmra.mrb[0].mxu0 %v2660
        %v2749 = vpop.f32.mrb[0].mxu0
        %v2750 = vadd.f32 0.0, %v2749
        %v2751 = vpop.f32.mrb[0].mxu0
        %v2752 = vpop.f32.mrb[0].mxu0
        %v2753 = vadd.f32 0.0, %v2752
        %v2754 = vpop.f32.mrb[0].mxu0
        %2755 = vmatprep.mubr.bf16.mxu0 0
        %2756 = vmatmul.mubr.bf16.gmra.mrb[0].mxu0 %v2663
        %v2757 = vpop.f32.mrb[0].mxu0
        %v2758 = vadd.f32 0.0, %v2757
        %v2759 = vpop.f32.mrb[0].mxu0
        %v2760 = vpop.f32.mrb[0].mxu0
        %v2761 = vadd.f32 0.0, %v2760
        %v2762 = vpop.f32.mrb[0].mxu0
        %2763 = vmatprep.mubr.bf16.mxu0 0
        %2764 = vmatmul.mubr.bf16.gmra.mrb[0].mxu0 %v2666
        %v2765 = vpop.f32.mrb[0].mxu0
        %v2766 = vadd.f32 0.0, %v2765
        %v2767 = vpop.f32.mrb[0].mxu0
        %v2768 = vpop.f32.mrb[0].mxu0
        %v2769 = vadd.f32 0.0, %v2768
        %v2770 = vpop.f32.mrb[0].mxu0
        %2771 = vmatprep.mubr.bf16.mxu0 0
        %2772 = vmatmul.mubr.bf16.gmra.mrb[0].mxu0 %v2669
        %v2773 = vpop.f32.mrb[0].mxu0
        %v2774 = vadd.f32 0.0, %v2773
        %v2775 = vpop.f32.mrb[0].mxu0
        %v2776 = vpop.f32.mrb[0].mxu0
        %v2777 = vadd.f32 0.0, %v2776
        %v2778 = vpop.f32.mrb[0].mxu0
        %2779 = vmatprep.mubr.bf16.mxu0 0
        %2780 = vmatmul.mubr.bf16.gmra.mrb[0].mxu0 %v2672
        %v2781 = vpop.f32.mrb[0].mxu0
        %v2782 = vadd.f32 0.0, %v2781
        %v2783 = vpop.f32.mrb[0].mxu0
        %v2784 = vpop.f32.mrb[0].mxu0
        %v2785 = vadd.f32 0.0, %v2784
        %v2786 = vpop.f32.mrb[0].mxu0
        %2787 = vmatprep.mubr.bf16.mxu0 0
        %2788 = vmatmul.mubr.bf16.gmra.mrb[0].mxu0 %v2675
        %v2789 = vpop.f32.mrb[0].mxu0
        %v2790 = vadd.f32 0.0, %v2789
        %v2791 = vpop.f32.mrb[0].mxu0
        %v2792 = vpop.f32.mrb[0].mxu0
        %v2793 = vadd.f32 0.0, %v2792
        %v2794 = vpop.f32.mrb[0].mxu0
        %2795 = vmatprep.mubr.bf16.mxu0 0
        %2796 = vmatmul.mubr.bf16.gmra.mrb[0].mxu0 %v2678
        %v2797 = vpop.f32.mrb[0].mxu0
        %v2798 = vadd.f32 0.0, %v2797
        %v2799 = vpop.f32.mrb[0].mxu0
        %v2800 = vpop.f32.mrb[0].mxu0
        %v2801 = vadd.f32 0.0, %v2800
        %v2802 = vpop.f32.mrb[0].mxu0
        %2803 = vmatprep.mubr.bf16.mxu0 0
        %2804 = vmatmul.mubr.bf16.gmra.mrb[0].mxu0 %v2681
        %v2805 = vpop.f32.mrb[0].mxu0
        %v2806 = vadd.f32 0.0, %v2805
        %v2807 = vpop.f32.mrb[0].mxu0
        %v2808 = vpop.f32.mrb[0].mxu0
        %v2809 = vadd.f32 0.0, %v2808
        %v2810 = vpop.f32.mrb[0].mxu0
        %2811 = vmatprep.mubr.bf16.mxu0 0
        %2812 = vmatmul.mubr.bf16.gmra.mrb[0].mxu0 %v2684
        %v2813 = vpop.f32.mrb[0].mxu0
        %v2814 = vadd.f32 0.0, %v2813
        %v2815 = vpop.f32.mrb[0].mxu0
        %v2816 = vpop.f32.mrb[0].mxu0
        %v2817 = vadd.f32 0.0, %v2816
        %v2818 = vpop.f32.mrb[0].mxu0
        %2819 = vmatprep.mubr.bf16.mxu0 0
        %2820 = vmatmul.mubr.bf16.gmra.mrb[0].mxu0 %v2687
        %v2821 = vpop.f32.mrb[0].mxu0
        %v2822 = vadd.f32 0.0, %v2821
        %v2823 = vpop.f32.mrb[0].mxu0
        %v2824 = vpop.f32.mrb[0].mxu0
        %v2825 = vadd.f32 0.0, %v2824
        %v2826 = vpop.f32.mrb[0].mxu0
        %2827 = vmatprep.mubr.bf16.mxu0 0
        %2828 = vmatmul.mubr.bf16.gmra.mrb[0].mxu0 %v2690
        %v2829 = vpop.f32.mrb[0].mxu0
        %v2830 = vadd.f32 0.0, %v2829
        %v2831 = vpop.f32.mrb[0].mxu0
        %v2832 = vpop.f32.mrb[0].mxu0
        %v2833 = vadd.f32 0.0, %v2832
        %v2834 = vpop.f32.mrb[0].mxu0
        %2835 = vmatprep.mubr.bf16.mxu0 0
        %2836 = vmatmul.mubr.bf16.gmra.mrb[0].mxu0 %v2693
        %v2837 = vpop.f32.mrb[0].mxu0
        %v2838 = vadd.f32 0.0, %v2837
        %v2839 = vpop.f32.mrb[0].mxu0
        %v2840 = vpop.f32.mrb[0].mxu0
        %v2841 = vadd.f32 0.0, %v2840
        %v2842 = vpop.f32.mrb[0].mxu0
        %2843 = vmatprep.mubr.bf16.mxu0 0
        %2844 = vmatmul.mubr.bf16.gmra.mrb[0].mxu0 %v2696
        %v2845 = vpop.f32.mrb[0].mxu0
        %v2846 = vadd.f32 0.0, %v2845
        %v2847 = vpop.f32.mrb[0].mxu0
        %v2848 = vpop.f32.mrb[0].mxu0
        %v2849 = vadd.f32 0.0, %v2848
        %v2850 = vpop.f32.mrb[0].mxu0
        %2851 = vmatprep.mubr.bf16.mxu0 0
        %2852 = vmatmul.mubr.bf16.gmra.mrb[0].mxu0 %v2699
        %v2853 = vpop.f32.mrb[0].mxu0
        %v2854 = vadd.f32 0.0, %v2853
        %v2855 = vpop.f32.mrb[0].mxu0
        %v2856 = vpop.f32.mrb[0].mxu0
        %v2857 = vadd.f32 0.0, %v2856
        %v2858 = vpop.f32.mrb[0].mxu0
        %2859 = vmatprep.mubr.bf16.mxu0 0
        %2860 = vmatmul.mubr.bf16.gmra.mrb[0].mxu0 %v2702
        %v2861 = vpop.f32.mrb[0].mxu0
        %v2862 = vadd.f32 0.0, %v2861
        %v2863 = vpop.f32.mrb[0].mxu0
        %v2864 = vpop.f32.mrb[0].mxu0
        %v2865 = vadd.f32 0.0, %v2864
        %v2866 = vpop.f32.mrb[0].mxu0
        %2867 = vdwg.mxu0
        %2868 = vst.msk [vmem:[#allocation3] sm:$0xff] %vm1069, %v2742
        %2869 = vst.msk [vmem:[#allocation3 + $0x8] sm:$0xff] %vm1069, %v2745
        %2870 = vst.msk [vmem:[#allocation3 + $0x10] sm:$0xff] %vm1069, %v2750
        %2871 = vst.msk [vmem:[#allocation3 + $0x18] sm:$0xff] %vm1069, %v2753
        %2872 = vst.msk [vmem:[#allocation3 + $0x20] sm:$0xff] %vm1069, %v2758
        %2873 = vst.msk [vmem:[#allocation3 + $0x28] sm:$0xff] %vm1069, %v2761
        %2874 = vst.msk [vmem:[#allocation3 + $0x30] sm:$0xff] %vm1069, %v2766
        %2875 = vst.msk [vmem:[#allocation3 + $0x38] sm:$0xff] %vm1069, %v2769
        %2876 = vst.msk [vmem:[#allocation3 + $0x40] sm:$0xff] %vm1069, %v2774
        %2877 = vst.msk [vmem:[#allocation3 + $0x48] sm:$0xff] %vm1069, %v2777
        %2878 = vst.msk [vmem:[#allocation3 + $0x50] sm:$0xff] %vm1069, %v2782
        %2879 = vst.msk [vmem:[#allocation3 + $0x58] sm:$0xff] %vm1069, %v2785
        %2880 = vst.msk [vmem:[#allocation3 + $0x60] sm:$0xff] %vm1069, %v2790
        %2881 = vst.msk [vmem:[#allocation3 + $0x68] sm:$0xff] %vm1069, %v2793
        %2882 = vst.msk [vmem:[#allocation3 + $0x70] sm:$0xff] %vm1069, %v2798
        %2883 = vst.msk [vmem:[#allocation3 + $0x78] sm:$0xff] %vm1069, %v2801
        %2884 = vst.msk [vmem:[#allocation3 + $0x80] sm:$0xff] %vm1069, %v2806
        %2885 = vst.msk [vmem:[#allocation3 + $0x88] sm:$0xff] %vm1069, %v2809
        %2886 = vst.msk [vmem:[#allocation3 + $0x90] sm:$0xff] %vm1069, %v2814
        %2887 = vst.msk [vmem:[#allocation3 + $0x98] sm:$0xff] %vm1069, %v2817
        %2888 = vst.msk [vmem:[#allocation3 + $0xa0] sm:$0xff] %vm1069, %v2822
        %2889 = vst.msk [vmem:[#allocation3 + $0xa8] sm:$0xff] %vm1069, %v2825
        %2890 = vst.msk [vmem:[#allocation3 + $0xb0] sm:$0xff] %vm1069, %v2830
        %2891 = vst.msk [vmem:[#allocation3 + $0xb8] sm:$0xff] %vm1069, %v2833
        %2892 = vst.msk [vmem:[#allocation3 + $0xc0] sm:$0xff] %vm1069, %v2838
        %2893 = vst.msk [vmem:[#allocation3 + $0xc8] sm:$0xff] %vm1069, %v2841
        %2894 = vst.msk [vmem:[#allocation3 + $0xd0] sm:$0xff] %vm1069, %v2846
        %2895 = vst.msk [vmem:[#allocation3 + $0xd8] sm:$0xff] %vm1069, %v2849
        %2896 = vst.msk [vmem:[#allocation3 + $0xe0] sm:$0xff] %vm1069, %v2854
        %2897 = vst.msk [vmem:[#allocation3 + $0xe8] sm:$0xff] %vm1069, %v2857
        %2898 = vst.msk [vmem:[#allocation3 + $0xf0] sm:$0xff] %vm1069, %v2862
        %2899 = vst.msk [vmem:[#allocation3 + $0xf8] sm:$0xff] %vm1069, %v2865
        %v2900 = vld [vmem:[%s331] sm:$0xff]
        %v2901 = vld [vmem:[%s331 + $0x8] sm:$0xff]
        %v2902 = vld [vmem:[%s331 + $0x10] sm:$0xff]
        %v2903 = vld [vmem:[%s331 + $0x18] sm:$0xff]
        %v2904 = vld [vmem:[%s331 + $0x20] sm:$0xff]
        %v2905 = vld [vmem:[%s331 + $0x28] sm:$0xff]
        %v2906 = vld [vmem:[%s331 + $0x30] sm:$0xff]
        %v2907 = vld [vmem:[%s331 + $0x38] sm:$0xff]
        %v2908 = vld [vmem:[%s331 + $0x40] sm:$0xff]
        %v2909 = vld [vmem:[%s331 + $0x48] sm:$0xff]
        %v2910 = vld [vmem:[%s331 + $0x50] sm:$0xff]
        %v2911 = vld [vmem:[%s331 + $0x58] sm:$0xff]
        %v2912 = vld [vmem:[%s331 + $0x60] sm:$0xff]
        %v2913 = vld [vmem:[%s331 + $0x68] sm:$0xff]
        %v2914 = vld [vmem:[%s331 + $0x70] sm:$0xff]
        %v2915 = vld [vmem:[%s331 + $0x78] sm:$0xff]
        %s2916 = scalar_lea.vmem [#allocation9], 8
        %v2917 = vld [vmem:[%s2916] sm:$0xf]
        %v2918 = vld [vmem:[%s2916 + $0x4] sm:$0x3]
        %v2921 = vunpack.c.l.b16 %v2917
        %v2922 = vunpack.c.l.b16 %v2918
        %v2923 = vpack.c.b16 %v2922, %v2921
        %v2925 = vsel %vm827, %v2900, 0
        %v2928 = vsel %vm827, %v2901, 0
        %v2931 = vsel %vm827, %v2902, 0
        %v2934 = vsel %vm827, %v2903, 0
        %v2937 = vsel %vm827, %v2904, 0
        %v2940 = vsel %vm827, %v2905, 0
        %v2943 = vsel %vm827, %v2906, 0
        %v2946 = vsel %vm827, %v2907, 0
        %v2949 = vsel %vm827, %v2908, 0
        %v2952 = vsel %vm827, %v2909, 0
        %v2955 = vsel %vm827, %v2910, 0
        %v2958 = vsel %vm827, %v2911, 0
        %v2961 = vsel %vm827, %v2912, 0
        %v2964 = vsel %vm827, %v2913, 0
        %v2967 = vsel %vm827, %v2914, 0
        %v2970 = vsel %vm827, %v2915, 0
        %v2973 = vsel %vm904, %v2923, 0
        %2975 = vmatprep.subr.bf16.mxu0 0
        %2976 = vmatpush1.bf16.msra.mxu0 %v2973
        %2977 = vmatprep.subr.bf16.mxu0 0
        %2978 = vmatpush1.bf16.msra.mxu0 0
        %2979 = vmatprep.subr.bf16.mxu0 0
        %2980 = vmatpush1.bf16.msra.mxu0 0
        %2981 = vmatprep.subr.bf16.mxu0 0
        %2982 = vmatpush1.bf16.msra.mxu0 0
        %2983 = vmatprep.subr.bf16.mxu0 0
        %2984 = vmatpush1.bf16.msra.mxu0 0
        %2985 = vmatprep.subr.bf16.mxu0 0
        %2986 = vmatpush1.bf16.msra.mxu0 0
        %2987 = vmatprep.subr.bf16.mxu0 0
        %2988 = vmatpush1.bf16.msra.mxu0 0
        %2989 = vmatprep.subr.bf16.mxu0 0
        %2990 = vmatpush1.bf16.msra.mxu0 0
        %2991 = vmatprep.subr.bf16.mxu0 0
        %2992 = vmatpush1.bf16.msra.mxu0 0
        %2993 = vmatprep.subr.bf16.mxu0 0
        %2994 = vmatpush1.bf16.msra.mxu0 0
        %2995 = vmatprep.subr.bf16.mxu0 0
        %2996 = vmatpush1.bf16.msra.mxu0 0
        %2997 = vmatprep.subr.bf16.mxu0 0
        %2998 = vmatpush1.bf16.msra.mxu0 0
        %2999 = vmatprep.subr.bf16.mxu0 0
        %3000 = vmatpush1.bf16.msra.mxu0 0
        %3001 = vmatprep.subr.bf16.mxu0 0
        %3002 = vmatpush1.bf16.msra.mxu0 0
        %3003 = vmatprep.subr.bf16.mxu0 0
        %3004 = vmatpush1.bf16.msra.mxu0 0
        %3005 = vmatprep.subr.bf16.mxu0 0
        %3006 = vmatpush1.bf16.msra.mxu0 0
        %3007 = vmatprep.mubr.bf16.mxu0 0
        %3008 = vmatmul.mubr.bf16.gmra.mrb[0].mxu0 %v2925
        %v3009 = vpop.f32.mrb[0].mxu0
        %v3010 = vadd.f32 0.0, %v3009
        %v3011 = vpop.f32.mrb[0].mxu0
        %v3012 = vpop.f32.mrb[0].mxu0
        %v3013 = vadd.f32 0.0, %v3012
        %v3014 = vpop.f32.mrb[0].mxu0
        %3015 = vmatprep.mubr.bf16.mxu0 0
        %3016 = vmatmul.mubr.bf16.gmra.mrb[0].mxu0 %v2928
        %v3017 = vpop.f32.mrb[0].mxu0
        %v3018 = vadd.f32 0.0, %v3017
        %v3019 = vpop.f32.mrb[0].mxu0
        %v3020 = vpop.f32.mrb[0].mxu0
        %v3021 = vadd.f32 0.0, %v3020
        %v3022 = vpop.f32.mrb[0].mxu0
        %3023 = vmatprep.mubr.bf16.mxu0 0
        %3024 = vmatmul.mubr.bf16.gmra.mrb[0].mxu0 %v2931
        %v3025 = vpop.f32.mrb[0].mxu0
        %v3026 = vadd.f32 0.0, %v3025
        %v3027 = vpop.f32.mrb[0].mxu0
        %v3028 = vpop.f32.mrb[0].mxu0
        %v3029 = vadd.f32 0.0, %v3028
        %v3030 = vpop.f32.mrb[0].mxu0
        %3031 = vmatprep.mubr.bf16.mxu0 0
        %3032 = vmatmul.mubr.bf16.gmra.mrb[0].mxu0 %v2934
        %v3033 = vpop.f32.mrb[0].mxu0
        %v3034 = vadd.f32 0.0, %v3033
        %v3035 = vpop.f32.mrb[0].mxu0
        %v3036 = vpop.f32.mrb[0].mxu0
        %v3037 = vadd.f32 0.0, %v3036
        %v3038 = vpop.f32.mrb[0].mxu0
        %3039 = vmatprep.mubr.bf16.mxu0 0
        %3040 = vmatmul.mubr.bf16.gmra.mrb[0].mxu0 %v2937
        %v3041 = vpop.f32.mrb[0].mxu0
        %v3042 = vadd.f32 0.0, %v3041
        %v3043 = vpop.f32.mrb[0].mxu0
        %v3044 = vpop.f32.mrb[0].mxu0
        %v3045 = vadd.f32 0.0, %v3044
        %v3046 = vpop.f32.mrb[0].mxu0
        %3047 = vmatprep.mubr.bf16.mxu0 0
        %3048 = vmatmul.mubr.bf16.gmra.mrb[0].mxu0 %v2940
        %v3049 = vpop.f32.mrb[0].mxu0
        %v3050 = vadd.f32 0.0, %v3049
        %v3051 = vpop.f32.mrb[0].mxu0
        %v3052 = vpop.f32.mrb[0].mxu0
        %v3053 = vadd.f32 0.0, %v3052
        %v3054 = vpop.f32.mrb[0].mxu0
        %3055 = vmatprep.mubr.bf16.mxu0 0
        %3056 = vmatmul.mubr.bf16.gmra.mrb[0].mxu0 %v2943
        %v3057 = vpop.f32.mrb[0].mxu0
        %v3058 = vadd.f32 0.0, %v3057
        %v3059 = vpop.f32.mrb[0].mxu0
        %v3060 = vpop.f32.mrb[0].mxu0
        %v3061 = vadd.f32 0.0, %v3060
        %v3062 = vpop.f32.mrb[0].mxu0
        %3063 = vmatprep.mubr.bf16.mxu0 0
        %3064 = vmatmul.mubr.bf16.gmra.mrb[0].mxu0 %v2946
        %v3065 = vpop.f32.mrb[0].mxu0
        %v3066 = vadd.f32 0.0, %v3065
        %v3067 = vpop.f32.mrb[0].mxu0
        %v3068 = vpop.f32.mrb[0].mxu0
        %v3069 = vadd.f32 0.0, %v3068
        %v3070 = vpop.f32.mrb[0].mxu0
        %3071 = vmatprep.mubr.bf16.mxu0 0
        %3072 = vmatmul.mubr.bf16.gmra.mrb[0].mxu0 %v2949
        %v3073 = vpop.f32.mrb[0].mxu0
        %v3074 = vadd.f32 0.0, %v3073
        %v3075 = vpop.f32.mrb[0].mxu0
        %v3076 = vpop.f32.mrb[0].mxu0
        %v3077 = vadd.f32 0.0, %v3076
        %v3078 = vpop.f32.mrb[0].mxu0
        %3079 = vmatprep.mubr.bf16.mxu0 0
        %3080 = vmatmul.mubr.bf16.gmra.mrb[0].mxu0 %v2952
        %v3081 = vpop.f32.mrb[0].mxu0
        %v3082 = vadd.f32 0.0, %v3081
        %v3083 = vpop.f32.mrb[0].mxu0
        %v3084 = vpop.f32.mrb[0].mxu0
        %v3085 = vadd.f32 0.0, %v3084
        %v3086 = vpop.f32.mrb[0].mxu0
        %3087 = vmatprep.mubr.bf16.mxu0 0
        %3088 = vmatmul.mubr.bf16.gmra.mrb[0].mxu0 %v2955
        %v3089 = vpop.f32.mrb[0].mxu0
        %v3090 = vadd.f32 0.0, %v3089
        %v3091 = vpop.f32.mrb[0].mxu0
        %v3092 = vpop.f32.mrb[0].mxu0
        %v3093 = vadd.f32 0.0, %v3092
        %v3094 = vpop.f32.mrb[0].mxu0
        %3095 = vmatprep.mubr.bf16.mxu0 0
        %3096 = vmatmul.mubr.bf16.gmra.mrb[0].mxu0 %v2958
        %v3097 = vpop.f32.mrb[0].mxu0
        %v3098 = vadd.f32 0.0, %v3097
        %v3099 = vpop.f32.mrb[0].mxu0
        %v3100 = vpop.f32.mrb[0].mxu0
        %v3101 = vadd.f32 0.0, %v3100
        %v3102 = vpop.f32.mrb[0].mxu0
        %3103 = vmatprep.mubr.bf16.mxu0 0
        %3104 = vmatmul.mubr.bf16.gmra.mrb[0].mxu0 %v2961
        %v3105 = vpop.f32.mrb[0].mxu0
        %v3106 = vadd.f32 0.0, %v3105
        %v3107 = vpop.f32.mrb[0].mxu0
        %v3108 = vpop.f32.mrb[0].mxu0
        %v3109 = vadd.f32 0.0, %v3108
        %v3110 = vpop.f32.mrb[0].mxu0
        %3111 = vmatprep.mubr.bf16.mxu0 0
        %3112 = vmatmul.mubr.bf16.gmra.mrb[0].mxu0 %v2964
        %v3113 = vpop.f32.mrb[0].mxu0
        %v3114 = vadd.f32 0.0, %v3113
        %v3115 = vpop.f32.mrb[0].mxu0
        %v3116 = vpop.f32.mrb[0].mxu0
        %v3117 = vadd.f32 0.0, %v3116
        %v3118 = vpop.f32.mrb[0].mxu0
        %3119 = vmatprep.mubr.bf16.mxu0 0
        %3120 = vmatmul.mubr.bf16.gmra.mrb[0].mxu0 %v2967
        %v3121 = vpop.f32.mrb[0].mxu0
        %v3122 = vadd.f32 0.0, %v3121
        %v3123 = vpop.f32.mrb[0].mxu0
        %v3124 = vpop.f32.mrb[0].mxu0
        %v3125 = vadd.f32 0.0, %v3124
        %v3126 = vpop.f32.mrb[0].mxu0
        %3127 = vmatprep.mubr.bf16.mxu0 0
        %3128 = vmatmul.mubr.bf16.gmra.mrb[0].mxu0 %v2970
        %v3129 = vpop.f32.mrb[0].mxu0
        %v3130 = vadd.f32 0.0, %v3129
        %v3131 = vpop.f32.mrb[0].mxu0
        %v3132 = vpop.f32.mrb[0].mxu0
        %v3133 = vadd.f32 0.0, %v3132
        %v3134 = vpop.f32.mrb[0].mxu0
        %3135 = vdwg.mxu0
        %v3136 = vld [vmem:[#allocation3] sm:$0xff]
        %v3137 = vld [vmem:[#allocation3 + $0x8] sm:$0xff]
        %v3138 = vld [vmem:[#allocation3 + $0x10] sm:$0xff]
        %v3139 = vld [vmem:[#allocation3 + $0x18] sm:$0xff]
        %v3140 = vld [vmem:[#allocation3 + $0x20] sm:$0xff]
        %v3141 = vld [vmem:[#allocation3 + $0x28] sm:$0xff]
        %v3142 = vld [vmem:[#allocation3 + $0x30] sm:$0xff]
        %v3143 = vld [vmem:[#allocation3 + $0x38] sm:$0xff]
        %v3144 = vld [vmem:[#allocation3 + $0x40] sm:$0xff]
        %v3145 = vld [vmem:[#allocation3 + $0x48] sm:$0xff]
        %v3146 = vld [vmem:[#allocation3 + $0x50] sm:$0xff]
        %v3147 = vld [vmem:[#allocation3 + $0x58] sm:$0xff]
        %v3148 = vld [vmem:[#allocation3 + $0x60] sm:$0xff]
        %v3149 = vld [vmem:[#allocation3 + $0x68] sm:$0xff]
        %v3150 = vld [vmem:[#allocation3 + $0x70] sm:$0xff]
        %v3151 = vld [vmem:[#allocation3 + $0x78] sm:$0xff]
        %v3152 = vld [vmem:[#allocation3 + $0x80] sm:$0xff]
        %v3153 = vld [vmem:[#allocation3 + $0x88] sm:$0xff]
        %v3154 = vld [vmem:[#allocation3 + $0x90] sm:$0xff]
        %v3155 = vld [vmem:[#allocation3 + $0x98] sm:$0xff]
        %v3156 = vld [vmem:[#allocation3 + $0xa0] sm:$0xff]
        %v3157 = vld [vmem:[#allocation3 + $0xa8] sm:$0xff]
        %v3158 = vld [vmem:[#allocation3 + $0xb0] sm:$0xff]
        %v3159 = vld [vmem:[#allocation3 + $0xb8] sm:$0xff]
        %v3160 = vld [vmem:[#allocation3 + $0xc0] sm:$0xff]
        %v3161 = vld [vmem:[#allocation3 + $0xc8] sm:$0xff]
        %v3162 = vld [vmem:[#allocation3 + $0xd0] sm:$0xff]
        %v3163 = vld [vmem:[#allocation3 + $0xd8] sm:$0xff]
        %v3164 = vld [vmem:[#allocation3 + $0xe0] sm:$0xff]
        %v3165 = vld [vmem:[#allocation3 + $0xe8] sm:$0xff]
        %v3166 = vld [vmem:[#allocation3 + $0xf0] sm:$0xff]
        %v3167 = vld [vmem:[#allocation3 + $0xf8] sm:$0xff]
        %v3168 = vadd.f32 %v3136, %v3010
        %v3169 = vadd.f32 %v3137, %v3013
        %v3170 = vadd.f32 %v3138, %v3018
        %v3171 = vadd.f32 %v3139, %v3021
        %v3172 = vadd.f32 %v3140, %v3026
        %v3173 = vadd.f32 %v3141, %v3029
        %v3174 = vadd.f32 %v3142, %v3034
        %v3175 = vadd.f32 %v3143, %v3037
        %v3176 = vadd.f32 %v3144, %v3042
        %v3177 = vadd.f32 %v3145, %v3045
        %v3178 = vadd.f32 %v3146, %v3050
        %v3179 = vadd.f32 %v3147, %v3053
        %v3180 = vadd.f32 %v3148, %v3058
        %v3181 = vadd.f32 %v3149, %v3061
        %v3182 = vadd.f32 %v3150, %v3066
        %v3183 = vadd.f32 %v3151, %v3069
        %v3184 = vadd.f32 %v3152, %v3074
        %v3185 = vadd.f32 %v3153, %v3077
        %v3186 = vadd.f32 %v3154, %v3082
        %v3187 = vadd.f32 %v3155, %v3085
        %v3188 = vadd.f32 %v3156, %v3090
        %v3189 = vadd.f32 %v3157, %v3093
        %v3190 = vadd.f32 %v3158, %v3098
        %v3191 = vadd.f32 %v3159, %v3101
        %v3192 = vadd.f32 %v3160, %v3106
        %v3193 = vadd.f32 %v3161, %v3109
        %v3194 = vadd.f32 %v3162, %v3114
        %v3195 = vadd.f32 %v3163, %v3117
        %v3196 = vadd.f32 %v3164, %v3122
        %v3197 = vadd.f32 %v3165, %v3125
        %v3198 = vadd.f32 %v3166, %v3130
        %v3199 = vadd.f32 %v3167, %v3133
        %3200 = vst.msk [vmem:[#allocation3] sm:$0xff] %vm1069, %v3168
        %3201 = vst.msk [vmem:[#allocation3 + $0x8] sm:$0xff] %vm1069, %v3169
        %3202 = vst.msk [vmem:[#allocation3 + $0x10] sm:$0xff] %vm1069, %v3170
        %3203 = vst.msk [vmem:[#allocation3 + $0x18] sm:$0xff] %vm1069, %v3171
        %3204 = vst.msk [vmem:[#allocation3 + $0x20] sm:$0xff] %vm1069, %v3172
        %3205 = vst.msk [vmem:[#allocation3 + $0x28] sm:$0xff] %vm1069, %v3173
        %3206 = vst.msk [vmem:[#allocation3 + $0x30] sm:$0xff] %vm1069, %v3174
        %3207 = vst.msk [vmem:[#allocation3 + $0x38] sm:$0xff] %vm1069, %v3175
        %3208 = vst.msk [vmem:[#allocation3 + $0x40] sm:$0xff] %vm1069, %v3176
        %3209 = vst.msk [vmem:[#allocation3 + $0x48] sm:$0xff] %vm1069, %v3177
        %3210 = vst.msk [vmem:[#allocation3 + $0x50] sm:$0xff] %vm1069, %v3178
        %3211 = vst.msk [vmem:[#allocation3 + $0x58] sm:$0xff] %vm1069, %v3179
        %3212 = vst.msk [vmem:[#allocation3 + $0x60] sm:$0xff] %vm1069, %v3180
        %3213 = vst.msk [vmem:[#allocation3 + $0x68] sm:$0xff] %vm1069, %v3181
        %3214 = vst.msk [vmem:[#allocation3 + $0x70] sm:$0xff] %vm1069, %v3182
        %3215 = vst.msk [vmem:[#allocation3 + $0x78] sm:$0xff] %vm1069, %v3183
        %3216 = vst.msk [vmem:[#allocation3 + $0x80] sm:$0xff] %vm1069, %v3184
        %3217 = vst.msk [vmem:[#allocation3 + $0x88] sm:$0xff] %vm1069, %v3185
        %3218 = vst.msk [vmem:[#allocation3 + $0x90] sm:$0xff] %vm1069, %v3186
        %3219 = vst.msk [vmem:[#allocation3 + $0x98] sm:$0xff] %vm1069, %v3187
        %3220 = vst.msk [vmem:[#allocation3 + $0xa0] sm:$0xff] %vm1069, %v3188
        %3221 = vst.msk [vmem:[#allocation3 + $0xa8] sm:$0xff] %vm1069, %v3189
        %3222 = vst.msk [vmem:[#allocation3 + $0xb0] sm:$0xff] %vm1069, %v3190
        %3223 = vst.msk [vmem:[#allocation3 + $0xb8] sm:$0xff] %vm1069, %v3191
        %3224 = vst.msk [vmem:[#allocation3 + $0xc0] sm:$0xff] %vm1069, %v3192
        %3225 = vst.msk [vmem:[#allocation3 + $0xc8] sm:$0xff] %vm1069, %v3193
        %3226 = vst.msk [vmem:[#allocation3 + $0xd0] sm:$0xff] %vm1069, %v3194
        %3227 = vst.msk [vmem:[#allocation3 + $0xd8] sm:$0xff] %vm1069, %v3195
        %3228 = vst.msk [vmem:[#allocation3 + $0xe0] sm:$0xff] %vm1069, %v3196
        %3229 = vst.msk [vmem:[#allocation3 + $0xe8] sm:$0xff] %vm1069, %v3197
        %3230 = vst.msk [vmem:[#allocation3 + $0xf0] sm:$0xff] %vm1069, %v3198
        %3231 = vst.msk [vmem:[#allocation3 + $0xf8] sm:$0xff] %vm1069, %v3199
        %v3232 = vld [vmem:[%s825] sm:$0xff]
        %v3233 = vld [vmem:[%s825 + $0x8] sm:$0xff]
        %v3234 = vld [vmem:[%s825 + $0x10] sm:$0xff]
        %v3235 = vld [vmem:[%s825 + $0x18] sm:$0xff]
        %v3236 = vld [vmem:[%s825 + $0x20] sm:$0xff]
        %v3237 = vld [vmem:[%s825 + $0x28] sm:$0xff]
        %v3238 = vld [vmem:[%s825 + $0x30] sm:$0xff]
        %v3239 = vld [vmem:[%s825 + $0x38] sm:$0xff]
        %v3240 = vld [vmem:[%s825 + $0x40] sm:$0xff]
        %v3241 = vld [vmem:[%s825 + $0x48] sm:$0xff]
        %v3242 = vld [vmem:[%s825 + $0x50] sm:$0xff]
        %v3243 = vld [vmem:[%s825 + $0x58] sm:$0xff]
        %v3244 = vld [vmem:[%s825 + $0x60] sm:$0xff]
        %v3245 = vld [vmem:[%s825 + $0x68] sm:$0xff]
        %v3246 = vld [vmem:[%s825 + $0x70] sm:$0xff]
        %v3247 = vld [vmem:[%s825 + $0x78] sm:$0xff]
        %s3248 = scalar_lea.vmem [#allocation9], 16
        %v3249 = vld [vmem:[%s3248] sm:$0xf]
        %v3250 = vld [vmem:[%s3248 + $0x4] sm:$0x3]
        %v3253 = vunpack.c.l.b16 %v3249
        %v3254 = vunpack.c.l.b16 %v3250
        %v3255 = vpack.c.b16 %v3254, %v3253
        %v3257 = vsel %vm827, %v3232, 0
        %v3260 = vsel %vm827, %v3233, 0
        %v3263 = vsel %vm827, %v3234, 0
        %v3266 = vsel %vm827, %v3235, 0
        %v3269 = vsel %vm827, %v3236, 0
        %v3272 = vsel %vm827, %v3237, 0
        %v3275 = vsel %vm827, %v3238, 0
        %v3278 = vsel %vm827, %v3239, 0
        %v3281 = vsel %vm827, %v3240, 0
        %v3284 = vsel %vm827, %v3241, 0
        %v3287 = vsel %vm827, %v3242, 0
        %v3290 = vsel %vm827, %v3243, 0
        %v3293 = vsel %vm827, %v3244, 0
        %v3296 = vsel %vm827, %v3245, 0
        %v3299 = vsel %vm827, %v3246, 0
        %v3302 = vsel %vm827, %v3247, 0
        %v3305 = vsel %vm904, %v3255, 0
        %3307 = vmatprep.subr.bf16.mxu0 0
        %3308 = vmatpush1.bf16.msra.mxu0 %v3305
        %3309 = vmatprep.subr.bf16.mxu0 0
        %3310 = vmatpush1.bf16.msra.mxu0 0
        %3311 = vmatprep.subr.bf16.mxu0 0
        %3312 = vmatpush1.bf16.msra.mxu0 0
        %3313 = vmatprep.subr.bf16.mxu0 0
        %3314 = vmatpush1.bf16.msra.mxu0 0
        %3315 = vmatprep.subr.bf16.mxu0 0
        %3316 = vmatpush1.bf16.msra.mxu0 0
        %3317 = vmatprep.subr.bf16.mxu0 0
        %3318 = vmatpush1.bf16.msra.mxu0 0
        %3319 = vmatprep.subr.bf16.mxu0 0
        %3320 = vmatpush1.bf16.msra.mxu0 0
        %3321 = vmatprep.subr.bf16.mxu0 0
        %3322 = vmatpush1.bf16.msra.mxu0 0
        %3323 = vmatprep.subr.bf16.mxu0 0
        %3324 = vmatpush1.bf16.msra.mxu0 0
        %3325 = vmatprep.subr.bf16.mxu0 0
        %3326 = vmatpush1.bf16.msra.mxu0 0
        %3327 = vmatprep.subr.bf16.mxu0 0
        %3328 = vmatpush1.bf16.msra.mxu0 0
        %3329 = vmatprep.subr.bf16.mxu0 0
        %3330 = vmatpush1.bf16.msra.mxu0 0
        %3331 = vmatprep.subr.bf16.mxu0 0
        %3332 = vmatpush1.bf16.msra.mxu0 0
        %3333 = vmatprep.subr.bf16.mxu0 0
        %3334 = vmatpush1.bf16.msra.mxu0 0
        %3335 = vmatprep.subr.bf16.mxu0 0
        %3336 = vmatpush1.bf16.msra.mxu0 0
        %3337 = vmatprep.subr.bf16.mxu0 0
        %3338 = vmatpush1.bf16.msra.mxu0 0
        %3339 = vmatprep.mubr.bf16.mxu0 0
        %3340 = vmatmul.mubr.bf16.gmra.mrb[0].mxu0 %v3257
        %v3341 = vpop.f32.mrb[0].mxu0
        %v3342 = vadd.f32 0.0, %v3341
        %v3343 = vpop.f32.mrb[0].mxu0
        %v3344 = vpop.f32.mrb[0].mxu0
        %v3345 = vadd.f32 0.0, %v3344
        %v3346 = vpop.f32.mrb[0].mxu0
        %3347 = vmatprep.mubr.bf16.mxu0 0
        %3348 = vmatmul.mubr.bf16.gmra.mrb[0].mxu0 %v3260
        %v3349 = vpop.f32.mrb[0].mxu0
        %v3350 = vadd.f32 0.0, %v3349
        %v3351 = vpop.f32.mrb[0].mxu0
        %v3352 = vpop.f32.mrb[0].mxu0
        %v3353 = vadd.f32 0.0, %v3352
        %v3354 = vpop.f32.mrb[0].mxu0
        %3355 = vmatprep.mubr.bf16.mxu0 0
        %3356 = vmatmul.mubr.bf16.gmra.mrb[0].mxu0 %v3263
        %v3357 = vpop.f32.mrb[0].mxu0
        %v3358 = vadd.f32 0.0, %v3357
        %v3359 = vpop.f32.mrb[0].mxu0
        %v3360 = vpop.f32.mrb[0].mxu0
        %v3361 = vadd.f32 0.0, %v3360
        %v3362 = vpop.f32.mrb[0].mxu0
        %3363 = vmatprep.mubr.bf16.mxu0 0
        %3364 = vmatmul.mubr.bf16.gmra.mrb[0].mxu0 %v3266
        %v3365 = vpop.f32.mrb[0].mxu0
        %v3366 = vadd.f32 0.0, %v3365
        %v3367 = vpop.f32.mrb[0].mxu0
        %v3368 = vpop.f32.mrb[0].mxu0
        %v3369 = vadd.f32 0.0, %v3368
        %v3370 = vpop.f32.mrb[0].mxu0
        %3371 = vmatprep.mubr.bf16.mxu0 0
        %3372 = vmatmul.mubr.bf16.gmra.mrb[0].mxu0 %v3269
        %v3373 = vpop.f32.mrb[0].mxu0
        %v3374 = vadd.f32 0.0, %v3373
        %v3375 = vpop.f32.mrb[0].mxu0
        %v3376 = vpop.f32.mrb[0].mxu0
        %v3377 = vadd.f32 0.0, %v3376
        %v3378 = vpop.f32.mrb[0].mxu0
        %3379 = vmatprep.mubr.bf16.mxu0 0
        %3380 = vmatmul.mubr.bf16.gmra.mrb[0].mxu0 %v3272
        %v3381 = vpop.f32.mrb[0].mxu0
        %v3382 = vadd.f32 0.0, %v3381
        %v3383 = vpop.f32.mrb[0].mxu0
        %v3384 = vpop.f32.mrb[0].mxu0
        %v3385 = vadd.f32 0.0, %v3384
        %v3386 = vpop.f32.mrb[0].mxu0
        %3387 = vmatprep.mubr.bf16.mxu0 0
        %3388 = vmatmul.mubr.bf16.gmra.mrb[0].mxu0 %v3275
        %v3389 = vpop.f32.mrb[0].mxu0
        %v3390 = vadd.f32 0.0, %v3389
        %v3391 = vpop.f32.mrb[0].mxu0
        %v3392 = vpop.f32.mrb[0].mxu0
        %v3393 = vadd.f32 0.0, %v3392
        %v3394 = vpop.f32.mrb[0].mxu0
        %3395 = vmatprep.mubr.bf16.mxu0 0
        %3396 = vmatmul.mubr.bf16.gmra.mrb[0].mxu0 %v3278
        %v3397 = vpop.f32.mrb[0].mxu0
        %v3398 = vadd.f32 0.0, %v3397
        %v3399 = vpop.f32.mrb[0].mxu0
        %v3400 = vpop.f32.mrb[0].mxu0
        %v3401 = vadd.f32 0.0, %v3400
        %v3402 = vpop.f32.mrb[0].mxu0
        %3403 = vmatprep.mubr.bf16.mxu0 0
        %3404 = vmatmul.mubr.bf16.gmra.mrb[0].mxu0 %v3281
        %v3405 = vpop.f32.mrb[0].mxu0
        %v3406 = vadd.f32 0.0, %v3405
        %v3407 = vpop.f32.mrb[0].mxu0
        %v3408 = vpop.f32.mrb[0].mxu0
        %v3409 = vadd.f32 0.0, %v3408
        %v3410 = vpop.f32.mrb[0].mxu0
        %3411 = vmatprep.mubr.bf16.mxu0 0
        %3412 = vmatmul.mubr.bf16.gmra.mrb[0].mxu0 %v3284
        %v3413 = vpop.f32.mrb[0].mxu0
        %v3414 = vadd.f32 0.0, %v3413
        %v3415 = vpop.f32.mrb[0].mxu0
        %v3416 = vpop.f32.mrb[0].mxu0
        %v3417 = vadd.f32 0.0, %v3416
        %v3418 = vpop.f32.mrb[0].mxu0
        %3419 = vmatprep.mubr.bf16.mxu0 0
        %3420 = vmatmul.mubr.bf16.gmra.mrb[0].mxu0 %v3287
        %v3421 = vpop.f32.mrb[0].mxu0
        %v3422 = vadd.f32 0.0, %v3421
        %v3423 = vpop.f32.mrb[0].mxu0
        %v3424 = vpop.f32.mrb[0].mxu0
        %v3425 = vadd.f32 0.0, %v3424
        %v3426 = vpop.f32.mrb[0].mxu0
        %3427 = vmatprep.mubr.bf16.mxu0 0
        %3428 = vmatmul.mubr.bf16.gmra.mrb[0].mxu0 %v3290
        %v3429 = vpop.f32.mrb[0].mxu0
        %v3430 = vadd.f32 0.0, %v3429
        %v3431 = vpop.f32.mrb[0].mxu0
        %v3432 = vpop.f32.mrb[0].mxu0
        %v3433 = vadd.f32 0.0, %v3432
        %v3434 = vpop.f32.mrb[0].mxu0
        %3435 = vmatprep.mubr.bf16.mxu0 0
        %3436 = vmatmul.mubr.bf16.gmra.mrb[0].mxu0 %v3293
        %v3437 = vpop.f32.mrb[0].mxu0
        %v3438 = vadd.f32 0.0, %v3437
        %v3439 = vpop.f32.mrb[0].mxu0
        %v3440 = vpop.f32.mrb[0].mxu0
        %v3441 = vadd.f32 0.0, %v3440
        %v3442 = vpop.f32.mrb[0].mxu0
        %3443 = vmatprep.mubr.bf16.mxu0 0
        %3444 = vmatmul.mubr.bf16.gmra.mrb[0].mxu0 %v3296
        %v3445 = vpop.f32.mrb[0].mxu0
        %v3446 = vadd.f32 0.0, %v3445
        %v3447 = vpop.f32.mrb[0].mxu0
        %v3448 = vpop.f32.mrb[0].mxu0
        %v3449 = vadd.f32 0.0, %v3448
        %v3450 = vpop.f32.mrb[0].mxu0
        %3451 = vmatprep.mubr.bf16.mxu0 0
        %3452 = vmatmul.mubr.bf16.gmra.mrb[0].mxu0 %v3299
        %v3453 = vpop.f32.mrb[0].mxu0
        %v3454 = vadd.f32 0.0, %v3453
        %v3455 = vpop.f32.mrb[0].mxu0
        %v3456 = vpop.f32.mrb[0].mxu0
        %v3457 = vadd.f32 0.0, %v3456
        %v3458 = vpop.f32.mrb[0].mxu0
        %3459 = vmatprep.mubr.bf16.mxu0 0
        %3460 = vmatmul.mubr.bf16.gmra.mrb[0].mxu0 %v3302
        %v3461 = vpop.f32.mrb[0].mxu0
        %v3462 = vadd.f32 0.0, %v3461
        %v3463 = vpop.f32.mrb[0].mxu0
        %v3464 = vpop.f32.mrb[0].mxu0
        %v3465 = vadd.f32 0.0, %v3464
        %v3466 = vpop.f32.mrb[0].mxu0
        %3467 = vdwg.mxu0
        %v3468 = vld [vmem:[#allocation3] sm:$0xff]
        %v3469 = vld [vmem:[#allocation3 + $0x8] sm:$0xff]
        %v3470 = vld [vmem:[#allocation3 + $0x10] sm:$0xff]
        %v3471 = vld [vmem:[#allocation3 + $0x18] sm:$0xff]
        %v3472 = vld [vmem:[#allocation3 + $0x20] sm:$0xff]
        %v3473 = vld [vmem:[#allocation3 + $0x28] sm:$0xff]
        %v3474 = vld [vmem:[#allocation3 + $0x30] sm:$0xff]
        %v3475 = vld [vmem:[#allocation3 + $0x38] sm:$0xff]
        %v3476 = vld [vmem:[#allocation3 + $0x40] sm:$0xff]
        %v3477 = vld [vmem:[#allocation3 + $0x48] sm:$0xff]
        %v3478 = vld [vmem:[#allocation3 + $0x50] sm:$0xff]
        %v3479 = vld [vmem:[#allocation3 + $0x58] sm:$0xff]
        %v3480 = vld [vmem:[#allocation3 + $0x60] sm:$0xff]
        %v3481 = vld [vmem:[#allocation3 + $0x68] sm:$0xff]
        %v3482 = vld [vmem:[#allocation3 + $0x70] sm:$0xff]
        %v3483 = vld [vmem:[#allocation3 + $0x78] sm:$0xff]
        %v3484 = vld [vmem:[#allocation3 + $0x80] sm:$0xff]
        %v3485 = vld [vmem:[#allocation3 + $0x88] sm:$0xff]
        %v3486 = vld [vmem:[#allocation3 + $0x90] sm:$0xff]
        %v3487 = vld [vmem:[#allocation3 + $0x98] sm:$0xff]
        %v3488 = vld [vmem:[#allocation3 + $0xa0] sm:$0xff]
        %v3489 = vld [vmem:[#allocation3 + $0xa8] sm:$0xff]
        %v3490 = vld [vmem:[#allocation3 + $0xb0] sm:$0xff]
        %v3491 = vld [vmem:[#allocation3 + $0xb8] sm:$0xff]
        %v3492 = vld [vmem:[#allocation3 + $0xc0] sm:$0xff]
        %v3493 = vld [vmem:[#allocation3 + $0xc8] sm:$0xff]
        %v3494 = vld [vmem:[#allocation3 + $0xd0] sm:$0xff]
        %v3495 = vld [vmem:[#allocation3 + $0xd8] sm:$0xff]
        %v3496 = vld [vmem:[#allocation3 + $0xe0] sm:$0xff]
        %v3497 = vld [vmem:[#allocation3 + $0xe8] sm:$0xff]
        %v3498 = vld [vmem:[#allocation3 + $0xf0] sm:$0xff]
        %v3499 = vld [vmem:[#allocation3 + $0xf8] sm:$0xff]
        %v3500 = vadd.f32 %v3468, %v3342
        %v3501 = vadd.f32 %v3469, %v3345
        %v3502 = vadd.f32 %v3470, %v3350
        %v3503 = vadd.f32 %v3471, %v3353
        %v3504 = vadd.f32 %v3472, %v3358
        %v3505 = vadd.f32 %v3473, %v3361
        %v3506 = vadd.f32 %v3474, %v3366
        %v3507 = vadd.f32 %v3475, %v3369
        %v3508 = vadd.f32 %v3476, %v3374
        %v3509 = vadd.f32 %v3477, %v3377
        %v3510 = vadd.f32 %v3478, %v3382
        %v3511 = vadd.f32 %v3479, %v3385
        %v3512 = vadd.f32 %v3480, %v3390
        %v3513 = vadd.f32 %v3481, %v3393
        %v3514 = vadd.f32 %v3482, %v3398
        %v3515 = vadd.f32 %v3483, %v3401
        %v3516 = vadd.f32 %v3484, %v3406
        %v3517 = vadd.f32 %v3485, %v3409
        %v3518 = vadd.f32 %v3486, %v3414
        %v3519 = vadd.f32 %v3487, %v3417
        %v3520 = vadd.f32 %v3488, %v3422
        %v3521 = vadd.f32 %v3489, %v3425
        %v3522 = vadd.f32 %v3490, %v3430
        %v3523 = vadd.f32 %v3491, %v3433
        %v3524 = vadd.f32 %v3492, %v3438
        %v3525 = vadd.f32 %v3493, %v3441
        %v3526 = vadd.f32 %v3494, %v3446
        %v3527 = vadd.f32 %v3495, %v3449
        %v3528 = vadd.f32 %v3496, %v3454
        %v3529 = vadd.f32 %v3497, %v3457
        %v3530 = vadd.f32 %v3498, %v3462
        %v3531 = vadd.f32 %v3499, %v3465
        %3532 = vst.msk [vmem:[#allocation3] sm:$0xff] %vm1069, %v3500
        %3533 = vst.msk [vmem:[#allocation3 + $0x8] sm:$0xff] %vm1069, %v3501
        %3534 = vst.msk [vmem:[#allocation3 + $0x10] sm:$0xff] %vm1069, %v3502
        %3535 = vst.msk [vmem:[#allocation3 + $0x18] sm:$0xff] %vm1069, %v3503
        %3536 = vst.msk [vmem:[#allocation3 + $0x20] sm:$0xff] %vm1069, %v3504
        %3537 = vst.msk [vmem:[#allocation3 + $0x28] sm:$0xff] %vm1069, %v3505
        %3538 = vst.msk [vmem:[#allocation3 + $0x30] sm:$0xff] %vm1069, %v3506
        %3539 = vst.msk [vmem:[#allocation3 + $0x38] sm:$0xff] %vm1069, %v3507
        %3540 = vst.msk [vmem:[#allocation3 + $0x40] sm:$0xff] %vm1069, %v3508
        %3541 = vst.msk [vmem:[#allocation3 + $0x48] sm:$0xff] %vm1069, %v3509
        %3542 = vst.msk [vmem:[#allocation3 + $0x50] sm:$0xff] %vm1069, %v3510
        %3543 = vst.msk [vmem:[#allocation3 + $0x58] sm:$0xff] %vm1069, %v3511
        %3544 = vst.msk [vmem:[#allocation3 + $0x60] sm:$0xff] %vm1069, %v3512
        %3545 = vst.msk [vmem:[#allocation3 + $0x68] sm:$0xff] %vm1069, %v3513
        %3546 = vst.msk [vmem:[#allocation3 + $0x70] sm:$0xff] %vm1069, %v3514
        %3547 = vst.msk [vmem:[#allocation3 + $0x78] sm:$0xff] %vm1069, %v3515
        %3548 = vst.msk [vmem:[#allocation3 + $0x80] sm:$0xff] %vm1069, %v3516
        %3549 = vst.msk [vmem:[#allocation3 + $0x88] sm:$0xff] %vm1069, %v3517
        %3550 = vst.msk [vmem:[#allocation3 + $0x90] sm:$0xff] %vm1069, %v3518
        %3551 = vst.msk [vmem:[#allocation3 + $0x98] sm:$0xff] %vm1069, %v3519
        %3552 = vst.msk [vmem:[#allocation3 + $0xa0] sm:$0xff] %vm1069, %v3520
        %3553 = vst.msk [vmem:[#allocation3 + $0xa8] sm:$0xff] %vm1069, %v3521
        %3554 = vst.msk [vmem:[#allocation3 + $0xb0] sm:$0xff] %vm1069, %v3522
        %3555 = vst.msk [vmem:[#allocation3 + $0xb8] sm:$0xff] %vm1069, %v3523
        %3556 = vst.msk [vmem:[#allocation3 + $0xc0] sm:$0xff] %vm1069, %v3524
        %3557 = vst.msk [vmem:[#allocation3 + $0xc8] sm:$0xff] %vm1069, %v3525
        %3558 = vst.msk [vmem:[#allocation3 + $0xd0] sm:$0xff] %vm1069, %v3526
        %3559 = vst.msk [vmem:[#allocation3 + $0xd8] sm:$0xff] %vm1069, %v3527
        %3560 = vst.msk [vmem:[#allocation3 + $0xe0] sm:$0xff] %vm1069, %v3528
        %3561 = vst.msk [vmem:[#allocation3 + $0xe8] sm:$0xff] %vm1069, %v3529
        %3562 = vst.msk [vmem:[#allocation3 + $0xf0] sm:$0xff] %vm1069, %v3530
        %3563 = vst.msk [vmem:[#allocation3 + $0xf8] sm:$0xff] %vm1069, %v3531
        %v3564 = vld [vmem:[#allocation3] sm:$0xff]
        %v3565 = vld [vmem:[#allocation3 + $0x8] sm:$0xff]
        %v3566 = vld [vmem:[#allocation3 + $0x10] sm:$0xff]
        %v3567 = vld [vmem:[#allocation3 + $0x18] sm:$0xff]
        %v3568 = vld [vmem:[#allocation3 + $0x20] sm:$0xff]
        %v3569 = vld [vmem:[#allocation3 + $0x28] sm:$0xff]
        %v3570 = vld [vmem:[#allocation3 + $0x30] sm:$0xff]
        %v3571 = vld [vmem:[#allocation3 + $0x38] sm:$0xff]
        %v3572 = vld [vmem:[#allocation3 + $0x40] sm:$0xff]
        %v3573 = vld [vmem:[#allocation3 + $0x48] sm:$0xff]
        %v3574 = vld [vmem:[#allocation3 + $0x50] sm:$0xff]
        %v3575 = vld [vmem:[#allocation3 + $0x58] sm:$0xff]
        %v3576 = vld [vmem:[#allocation3 + $0x60] sm:$0xff]
        %v3577 = vld [vmem:[#allocation3 + $0x68] sm:$0xff]
        %v3578 = vld [vmem:[#allocation3 + $0x70] sm:$0xff]
        %v3579 = vld [vmem:[#allocation3 + $0x78] sm:$0xff]
        %v3580 = vld [vmem:[#allocation3 + $0x80] sm:$0xff]
        %v3581 = vld [vmem:[#allocation3 + $0x88] sm:$0xff]
        %v3582 = vld [vmem:[#allocation3 + $0x90] sm:$0xff]
        %v3583 = vld [vmem:[#allocation3 + $0x98] sm:$0xff]
        %v3584 = vld [vmem:[#allocation3 + $0xa0] sm:$0xff]
        %v3585 = vld [vmem:[#allocation3 + $0xa8] sm:$0xff]
        %v3586 = vld [vmem:[#allocation3 + $0xb0] sm:$0xff]
        %v3587 = vld [vmem:[#allocation3 + $0xb8] sm:$0xff]
        %v3588 = vld [vmem:[#allocation3 + $0xc0] sm:$0xff]
        %v3589 = vld [vmem:[#allocation3 + $0xc8] sm:$0xff]
        %v3590 = vld [vmem:[#allocation3 + $0xd0] sm:$0xff]
        %v3591 = vld [vmem:[#allocation3 + $0xd8] sm:$0xff]
        %v3592 = vld [vmem:[#allocation3 + $0xe0] sm:$0xff]
        %v3593 = vld [vmem:[#allocation3 + $0xe8] sm:$0xff]
        %v3594 = vld [vmem:[#allocation3 + $0xf0] sm:$0xff]
        %v3595 = vld [vmem:[#allocation3 + $0xf8] sm:$0xff]
        %v3596 = vsel %vm1069, %v3564, 0.0
        %v3597 = vsel %vm1069, %v3565, 0.0
        %v3598 = vadd.f32 %v3596, %v3597
        %v3599 = vsel %vm1069, %v3566, 0.0
        %v3600 = vadd.f32 %v3598, %v3599
        %v3601 = vsel %vm1069, %v3567, 0.0
        %v3602 = vadd.f32 %v3600, %v3601
        %v3603 = vsel %vm1069, %v3568, 0.0
        %v3604 = vadd.f32 %v3602, %v3603
        %v3605 = vsel %vm1069, %v3569, 0.0
        %v3606 = vadd.f32 %v3604, %v3605
        %v3607 = vsel %vm1069, %v3570, 0.0
        %v3608 = vadd.f32 %v3606, %v3607
        %v3609 = vsel %vm1069, %v3571, 0.0
        %v3610 = vadd.f32 %v3608, %v3609
        %v3611 = vsel %vm1069, %v3572, 0.0
        %v3612 = vadd.f32 %v3610, %v3611
        %v3613 = vsel %vm1069, %v3573, 0.0
        %v3614 = vadd.f32 %v3612, %v3613
        %v3615 = vsel %vm1069, %v3574, 0.0
        %v3616 = vadd.f32 %v3614, %v3615
        %v3617 = vsel %vm1069, %v3575, 0.0
        %v3618 = vadd.f32 %v3616, %v3617
        %v3619 = vsel %vm1069, %v3576, 0.0
        %v3620 = vadd.f32 %v3618, %v3619
        %v3621 = vsel %vm1069, %v3577, 0.0
        %v3622 = vadd.f32 %v3620, %v3621
        %v3623 = vsel %vm1069, %v3578, 0.0
        %v3624 = vadd.f32 %v3622, %v3623
        %v3625 = vsel %vm1069, %v3579, 0.0
        %v3626 = vadd.f32 %v3624, %v3625
        %v3627 = vsel %vm1069, %v3580, 0.0
        %v3628 = vadd.f32 %v3626, %v3627
        %v3629 = vsel %vm1069, %v3581, 0.0
        %v3630 = vadd.f32 %v3628, %v3629
        %v3631 = vsel %vm1069, %v3582, 0.0
        %v3632 = vadd.f32 %v3630, %v3631
        %v3633 = vsel %vm1069, %v3583, 0.0
        %v3634 = vadd.f32 %v3632, %v3633
        %v3635 = vsel %vm1069, %v3584, 0.0
        %v3636 = vadd.f32 %v3634, %v3635
        %v3637 = vsel %vm1069, %v3585, 0.0
        %v3638 = vadd.f32 %v3636, %v3637
        %v3639 = vsel %vm1069, %v3586, 0.0
        %v3640 = vadd.f32 %v3638, %v3639
        %v3641 = vsel %vm1069, %v3587, 0.0
        %v3642 = vadd.f32 %v3640, %v3641
        %v3643 = vsel %vm1069, %v3588, 0.0
        %v3644 = vadd.f32 %v3642, %v3643
        %v3645 = vsel %vm1069, %v3589, 0.0
        %v3646 = vadd.f32 %v3644, %v3645
        %v3647 = vsel %vm1069, %v3590, 0.0
        %v3648 = vadd.f32 %v3646, %v3647
        %v3649 = vsel %vm1069, %v3591, 0.0
        %v3650 = vadd.f32 %v3648, %v3649
        %v3651 = vsel %vm1069, %v3592, 0.0
        %v3652 = vadd.f32 %v3650, %v3651
        %v3653 = vsel %vm1069, %v3593, 0.0
        %v3654 = vadd.f32 %v3652, %v3653
        %v3655 = vsel %vm1069, %v3594, 0.0
        %v3656 = vadd.f32 %v3654, %v3655
        %v3657 = vsel %vm1069, %v3595, 0.0
        %v3658 = vadd.f32 %v3656, %v3657
        %v3659 = vrot.slane %v3658, 4
        %v3660 = vadd.f32 %v3658, %v3659
        %v3661 = vrot.slane %v3660, 2
        %v3662 = vadd.f32 %v3660, %v3661
        %v3663 = vrot.slane %v3662, 1
        %v3664 = vadd.f32 %v3662, %v3663
        %v3665 = vmul.f32 %v3664, %v1867
        %v3666 = vsub.f32 %v3564, %v3665
        %v3667 = vsub.f32 %v3565, %v3665
        %v3668 = vsub.f32 %v3566, %v3665
        %v3669 = vsub.f32 %v3567, %v3665
        %v3670 = vsub.f32 %v3568, %v3665
        %v3671 = vsub.f32 %v3569, %v3665
        %v3672 = vsub.f32 %v3570, %v3665
        %v3673 = vsub.f32 %v3571, %v3665
        %v3674 = vsub.f32 %v3572, %v3665
        %v3675 = vsub.f32 %v3573, %v3665
        %v3676 = vsub.f32 %v3574, %v3665
        %v3677 = vsub.f32 %v3575, %v3665
        %v3678 = vsub.f32 %v3576, %v3665
        %v3679 = vsub.f32 %v3577, %v3665
        %v3680 = vsub.f32 %v3578, %v3665
        %v3681 = vsub.f32 %v3579, %v3665
        %v3682 = vsub.f32 %v3580, %v3665
        %v3683 = vsub.f32 %v3581, %v3665
        %v3684 = vsub.f32 %v3582, %v3665
        %v3685 = vsub.f32 %v3583, %v3665
        %v3686 = vsub.f32 %v3584, %v3665
        %v3687 = vsub.f32 %v3585, %v3665
        %v3688 = vsub.f32 %v3586, %v3665
        %v3689 = vsub.f32 %v3587, %v3665
        %v3690 = vsub.f32 %v3588, %v3665
        %v3691 = vsub.f32 %v3589, %v3665
        %v3692 = vsub.f32 %v3590, %v3665
        %v3693 = vsub.f32 %v3591, %v3665
        %v3694 = vsub.f32 %v3592, %v3665
        %v3695 = vsub.f32 %v3593, %v3665
        %v3696 = vsub.f32 %v3594, %v3665
        %v3697 = vsub.f32 %v3595, %v3665
        %v3698 = vmul.f32 %v3666, %v3666
        %v3699 = vmul.f32 %v3667, %v3667
        %v3700 = vmul.f32 %v3668, %v3668
        %v3701 = vmul.f32 %v3669, %v3669
        %v3702 = vmul.f32 %v3670, %v3670
        %v3703 = vmul.f32 %v3671, %v3671
        %v3704 = vmul.f32 %v3672, %v3672
        %v3705 = vmul.f32 %v3673, %v3673
        %v3706 = vmul.f32 %v3674, %v3674
        %v3707 = vmul.f32 %v3675, %v3675
        %v3708 = vmul.f32 %v3676, %v3676
        %v3709 = vmul.f32 %v3677, %v3677
        %v3710 = vmul.f32 %v3678, %v3678
        %v3711 = vmul.f32 %v3679, %v3679
        %v3712 = vmul.f32 %v3680, %v3680
        %v3713 = vmul.f32 %v3681, %v3681
        %v3714 = vmul.f32 %v3682, %v3682
        %v3715 = vmul.f32 %v3683, %v3683
        %v3716 = vmul.f32 %v3684, %v3684
        %v3717 = vmul.f32 %v3685, %v3685
        %v3718 = vmul.f32 %v3686, %v3686
        %v3719 = vmul.f32 %v3687, %v3687
        %v3720 = vmul.f32 %v3688, %v3688
        %v3721 = vmul.f32 %v3689, %v3689
        %v3722 = vmul.f32 %v3690, %v3690
        %v3723 = vmul.f32 %v3691, %v3691
        %v3724 = vmul.f32 %v3692, %v3692
        %v3725 = vmul.f32 %v3693, %v3693
        %v3726 = vmul.f32 %v3694, %v3694
        %v3727 = vmul.f32 %v3695, %v3695
        %v3728 = vmul.f32 %v3696, %v3696
        %v3729 = vmul.f32 %v3697, %v3697
        %v3730 = vsel %vm1069, %v3698, 0.0
        %v3731 = vsel %vm1069, %v3699, 0.0
        %v3732 = vadd.f32 %v3730, %v3731
        %v3733 = vsel %vm1069, %v3700, 0.0
        %v3734 = vadd.f32 %v3732, %v3733
        %v3735 = vsel %vm1069, %v3701, 0.0
        %v3736 = vadd.f32 %v3734, %v3735
        %v3737 = vsel %vm1069, %v3702, 0.0
        %v3738 = vadd.f32 %v3736, %v3737
        %v3739 = vsel %vm1069, %v3703, 0.0
        %v3740 = vadd.f32 %v3738, %v3739
        %v3741 = vsel %vm1069, %v3704, 0.0
        %v3742 = vadd.f32 %v3740, %v3741
        %v3743 = vsel %vm1069, %v3705, 0.0
        %v3744 = vadd.f32 %v3742, %v3743
        %v3745 = vsel %vm1069, %v3706, 0.0
        %v3746 = vadd.f32 %v3744, %v3745
        %v3747 = vsel %vm1069, %v3707, 0.0
        %v3748 = vadd.f32 %v3746, %v3747
        %v3749 = vsel %vm1069, %v3708, 0.0
        %v3750 = vadd.f32 %v3748, %v3749
        %v3751 = vsel %vm1069, %v3709, 0.0
        %v3752 = vadd.f32 %v3750, %v3751
        %v3753 = vsel %vm1069, %v3710, 0.0
        %v3754 = vadd.f32 %v3752, %v3753
        %v3755 = vsel %vm1069, %v3711, 0.0
        %v3756 = vadd.f32 %v3754, %v3755
        %v3757 = vsel %vm1069, %v3712, 0.0
        %v3758 = vadd.f32 %v3756, %v3757
        %v3759 = vsel %vm1069, %v3713, 0.0
        %v3760 = vadd.f32 %v3758, %v3759
        %v3761 = vsel %vm1069, %v3714, 0.0
        %v3762 = vadd.f32 %v3760, %v3761
        %v3763 = vsel %vm1069, %v3715, 0.0
        %v3764 = vadd.f32 %v3762, %v3763
        %v3765 = vsel %vm1069, %v3716, 0.0
        %v3766 = vadd.f32 %v3764, %v3765
        %v3767 = vsel %vm1069, %v3717, 0.0
        %v3768 = vadd.f32 %v3766, %v3767
        %v3769 = vsel %vm1069, %v3718, 0.0
        %v3770 = vadd.f32 %v3768, %v3769
        %v3771 = vsel %vm1069, %v3719, 0.0
        %v3772 = vadd.f32 %v3770, %v3771
        %v3773 = vsel %vm1069, %v3720, 0.0
        %v3774 = vadd.f32 %v3772, %v3773
        %v3775 = vsel %vm1069, %v3721, 0.0
        %v3776 = vadd.f32 %v3774, %v3775
        %v3777 = vsel %vm1069, %v3722, 0.0
        %v3778 = vadd.f32 %v3776, %v3777
        %v3779 = vsel %vm1069, %v3723, 0.0
        %v3780 = vadd.f32 %v3778, %v3779
        %v3781 = vsel %vm1069, %v3724, 0.0
        %v3782 = vadd.f32 %v3780, %v3781
        %v3783 = vsel %vm1069, %v3725, 0.0
        %v3784 = vadd.f32 %v3782, %v3783
        %v3785 = vsel %vm1069, %v3726, 0.0
        %v3786 = vadd.f32 %v3784, %v3785
        %v3787 = vsel %vm1069, %v3727, 0.0
        %v3788 = vadd.f32 %v3786, %v3787
        %v3789 = vsel %vm1069, %v3728, 0.0
        %v3790 = vadd.f32 %v3788, %v3789
        %v3791 = vsel %vm1069, %v3729, 0.0
        %v3792 = vadd.f32 %v3790, %v3791
        %v3793 = vrot.slane %v3792, 4
        %v3794 = vadd.f32 %v3792, %v3793
        %v3795 = vrot.slane %v3794, 2
        %v3796 = vadd.f32 %v3794, %v3795
        %v3797 = vrot.slane %v3796, 1
        %v3798 = vadd.f32 %v3796, %v3797
        %v3799 = vmul.f32 %v3798, %v1867
        %v3800 = vadd.f32 %v3799, 1e-05
        %v3801 = vrsqrt.pop %v3800
        %v3802 = vmul.f32 %v3666, %v3801
        %v3803 = vmul.f32 %v3667, %v3801
        %v3804 = vmul.f32 %v3668, %v3801
        %v3805 = vmul.f32 %v3669, %v3801
        %v3806 = vmul.f32 %v3670, %v3801
        %v3807 = vmul.f32 %v3671, %v3801
        %v3808 = vmul.f32 %v3672, %v3801
        %v3809 = vmul.f32 %v3673, %v3801
        %v3810 = vmul.f32 %v3674, %v3801
        %v3811 = vmul.f32 %v3675, %v3801
        %v3812 = vmul.f32 %v3676, %v3801
        %v3813 = vmul.f32 %v3677, %v3801
        %v3814 = vmul.f32 %v3678, %v3801
        %v3815 = vmul.f32 %v3679, %v3801
        %v3816 = vmul.f32 %v3680, %v3801
        %v3817 = vmul.f32 %v3681, %v3801
        %v3818 = vmul.f32 %v3682, %v3801
        %v3819 = vmul.f32 %v3683, %v3801
        %v3820 = vmul.f32 %v3684, %v3801
        %v3821 = vmul.f32 %v3685, %v3801
        %v3822 = vmul.f32 %v3686, %v3801
        %v3823 = vmul.f32 %v3687, %v3801
        %v3824 = vmul.f32 %v3688, %v3801
        %v3825 = vmul.f32 %v3689, %v3801
        %v3826 = vmul.f32 %v3690, %v3801
        %v3827 = vmul.f32 %v3691, %v3801
        %v3828 = vmul.f32 %v3692, %v3801
        %v3829 = vmul.f32 %v3693, %v3801
        %v3830 = vmul.f32 %v3694, %v3801
        %v3831 = vmul.f32 %v3695, %v3801
        %v3832 = vmul.f32 %v3696, %v3801
        %v3833 = vmul.f32 %v3697, %v3801
        %v3834 = vld [vmem:[%s187] sm:$0xff]
        %v3835 = vld [vmem:[%s187 + $0x8] sm:$0xff]
        %v3836 = vld [vmem:[%s187 + $0x10] sm:$0xff]
        %v3837 = vld [vmem:[%s187 + $0x18] sm:$0xff]
        %v3838 = vld [vmem:[%s187 + $0x20] sm:$0xff]
        %v3839 = vld [vmem:[%s187 + $0x28] sm:$0xff]
        %v3840 = vld [vmem:[%s187 + $0x30] sm:$0xff]
        %v3841 = vld [vmem:[%s187 + $0x38] sm:$0xff]
        %v3842 = vld [vmem:[%s187 + $0x40] sm:$0xff]
        %v3843 = vld [vmem:[%s187 + $0x48] sm:$0xff]
        %v3844 = vld [vmem:[%s187 + $0x50] sm:$0xff]
        %v3845 = vld [vmem:[%s187 + $0x58] sm:$0xff]
        %v3846 = vld [vmem:[%s187 + $0x60] sm:$0xff]
        %v3847 = vld [vmem:[%s187 + $0x68] sm:$0xff]
        %v3848 = vld [vmem:[%s187 + $0x70] sm:$0xff]
        %v3849 = vld [vmem:[%s187 + $0x78] sm:$0xff]
        %v3850 = vld [vmem:[%s187 + $0x80] sm:$0xff]
        %v3851 = vld [vmem:[%s187 + $0x88] sm:$0xff]
        %v3852 = vld [vmem:[%s187 + $0x90] sm:$0xff]
        %v3853 = vld [vmem:[%s187 + $0x98] sm:$0xff]
        %v3854 = vld [vmem:[%s187 + $0xa0] sm:$0xff]
        %v3855 = vld [vmem:[%s187 + $0xa8] sm:$0xff]
        %v3856 = vld [vmem:[%s187 + $0xb0] sm:$0xff]
        %v3857 = vld [vmem:[%s187 + $0xb8] sm:$0xff]
        %v3858 = vld [vmem:[%s187 + $0xc0] sm:$0xff]
        %v3859 = vld [vmem:[%s187 + $0xc8] sm:$0xff]
        %v3860 = vld [vmem:[%s187 + $0xd0] sm:$0xff]
        %v3861 = vld [vmem:[%s187 + $0xd8] sm:$0xff]
        %v3862 = vld [vmem:[%s187 + $0xe0] sm:$0xff]
        %v3863 = vld [vmem:[%s187 + $0xe8] sm:$0xff]
        %v3864 = vld [vmem:[%s187 + $0xf0] sm:$0xff]
        %v3865 = vld [vmem:[%s187 + $0xf8] sm:$0xff]
        %v3866 = vadd.f32 %v3834, %v3802
        %v3867 = vadd.f32 %v3835, %v3803
        %v3868 = vadd.f32 %v3836, %v3804
        %v3869 = vadd.f32 %v3837, %v3805
        %v3870 = vadd.f32 %v3838, %v3806
        %v3871 = vadd.f32 %v3839, %v3807
        %v3872 = vadd.f32 %v3840, %v3808
        %v3873 = vadd.f32 %v3841, %v3809
        %v3874 = vadd.f32 %v3842, %v3810
        %v3875 = vadd.f32 %v3843, %v3811
        %v3876 = vadd.f32 %v3844, %v3812
        %v3877 = vadd.f32 %v3845, %v3813
        %v3878 = vadd.f32 %v3846, %v3814
        %v3879 = vadd.f32 %v3847, %v3815
        %v3880 = vadd.f32 %v3848, %v3816
        %v3881 = vadd.f32 %v3849, %v3817
        %v3882 = vadd.f32 %v3850, %v3818
        %v3883 = vadd.f32 %v3851, %v3819
        %v3884 = vadd.f32 %v3852, %v3820
        %v3885 = vadd.f32 %v3853, %v3821
        %v3886 = vadd.f32 %v3854, %v3822
        %v3887 = vadd.f32 %v3855, %v3823
        %v3888 = vadd.f32 %v3856, %v3824
        %v3889 = vadd.f32 %v3857, %v3825
        %v3890 = vadd.f32 %v3858, %v3826
        %v3891 = vadd.f32 %v3859, %v3827
        %v3892 = vadd.f32 %v3860, %v3828
        %v3893 = vadd.f32 %v3861, %v3829
        %v3894 = vadd.f32 %v3862, %v3830
        %v3895 = vadd.f32 %v3863, %v3831
        %v3896 = vadd.f32 %v3864, %v3832
        %v3897 = vadd.f32 %v3865, %v3833
        %3898 = vst.msk [vmem:[%s217] sm:$0xff] %vm1069, %v3866
        %3899 = vst.msk [vmem:[%s217 + $0x8] sm:$0xff] %vm1069, %v3867
        %3900 = vst.msk [vmem:[%s217 + $0x10] sm:$0xff] %vm1069, %v3868
        %3901 = vst.msk [vmem:[%s217 + $0x18] sm:$0xff] %vm1069, %v3869
        %3902 = vst.msk [vmem:[%s217 + $0x20] sm:$0xff] %vm1069, %v3870
        %3903 = vst.msk [vmem:[%s217 + $0x28] sm:$0xff] %vm1069, %v3871
        %3904 = vst.msk [vmem:[%s217 + $0x30] sm:$0xff] %vm1069, %v3872
        %3905 = vst.msk [vmem:[%s217 + $0x38] sm:$0xff] %vm1069, %v3873
        %3906 = vst.msk [vmem:[%s217 + $0x40] sm:$0xff] %vm1069, %v3874
        %3907 = vst.msk [vmem:[%s217 + $0x48] sm:$0xff] %vm1069, %v3875
        %3908 = vst.msk [vmem:[%s217 + $0x50] sm:$0xff] %vm1069, %v3876
        %3909 = vst.msk [vmem:[%s217 + $0x58] sm:$0xff] %vm1069, %v3877
        %3910 = vst.msk [vmem:[%s217 + $0x60] sm:$0xff] %vm1069, %v3878
        %3911 = vst.msk [vmem:[%s217 + $0x68] sm:$0xff] %vm1069, %v3879
        %3912 = vst.msk [vmem:[%s217 + $0x70] sm:$0xff] %vm1069, %v3880
        %3913 = vst.msk [vmem:[%s217 + $0x78] sm:$0xff] %vm1069, %v3881
        %3914 = vst.msk [vmem:[%s217 + $0x80] sm:$0xff] %vm1069, %v3882
        %3915 = vst.msk [vmem:[%s217 + $0x88] sm:$0xff] %vm1069, %v3883
        %3916 = vst.msk [vmem:[%s217 + $0x90] sm:$0xff] %vm1069, %v3884
        %3917 = vst.msk [vmem:[%s217 + $0x98] sm:$0xff] %vm1069, %v3885
        %3918 = vst.msk [vmem:[%s217 + $0xa0] sm:$0xff] %vm1069, %v3886
        %3919 = vst.msk [vmem:[%s217 + $0xa8] sm:$0xff] %vm1069, %v3887
        %3920 = vst.msk [vmem:[%s217 + $0xb0] sm:$0xff] %vm1069, %v3888
        %3921 = vst.msk [vmem:[%s217 + $0xb8] sm:$0xff] %vm1069, %v3889
        %3922 = vst.msk [vmem:[%s217 + $0xc0] sm:$0xff] %vm1069, %v3890
        %3923 = vst.msk [vmem:[%s217 + $0xc8] sm:$0xff] %vm1069, %v3891
        %3924 = vst.msk [vmem:[%s217 + $0xd0] sm:$0xff] %vm1069, %v3892
        %3925 = vst.msk [vmem:[%s217 + $0xd8] sm:$0xff] %vm1069, %v3893
        %3926 = vst.msk [vmem:[%s217 + $0xe0] sm:$0xff] %vm1069, %v3894
        %3927 = vst.msk [vmem:[%s217 + $0xe8] sm:$0xff] %vm1069, %v3895
        %3928 = vst.msk [vmem:[%s217 + $0xf0] sm:$0xff] %vm1069, %v3896
        %3929 = vst.msk [vmem:[%s217 + $0xf8] sm:$0xff] %vm1069, %v3897
        %s3930 = sand.u32 %s97, 1
        %s3931 = scalar_lea.sflag [#allocation6], %s3930
        %s3932 = sand.u32 %s97, 1
        %s3933 = smul.addr %s3932, 256
        %s3934 = scalar_lea.vmem [#allocation10], %s3933
        // Predicated region
        $region45: #{resnet_block_forward.1} parent=31 // pred_check
          %p3935 = pneg %p107
        $region46: #{resnet_block_forward.1} parent=31 // pred_check_branch
          %3937 = sbr.rel (%p3935) target = $region48
        $region47: #{resnet_block_forward.1} parent=31 // pred_region
          %s3939 = ssub.s32 4096, 4096
          %3940 = vsyncadd %s3931, %s3939
          %s3941 = smul.addr %s21, 32
          %s3942 = smul.addr %s3941, 128
          %s3943 = scalar_lea.hbm %s3, %s3942
          %s3944 = sshll.u32 %s3934, 4
          %s3945 = int_to_ptr.vmem [resolvable:$true] %s3944
          %3950 = dma.vmem_to_hbm [thread:$0]  %s3945, 4096, %s3943, %s3931, 128, 128, 8
        $region48: #{resnet_block_forward.1} parent=31 // pred_fallthru
          _
      $region32: #{resnet_block_forward.1} parent=5 // pred_fallthru
        _
      %p3951 = scmp.le.s32.totalorder 2, %s16
      // Predicated region
      $region49: #{resnet_block_forward.1} parent=5 // pred_check
        %p3952 = pneg %p3951
      $region50: #{resnet_block_forward.1} parent=5 // pred_check_branch
        %3954 = sbr.rel (%p3952) target = $region52
      $region51: #{resnet_block_forward.1} parent=5 // pred_region
        %s3955 = ssub.s32 %s16, 2
        // Predicated region
        $region53: #{resnet_block_forward.1} parent=51 // pred_check
          %p3956 = pneg %p113
        $region54: #{resnet_block_forward.1} parent=51 // pred_check_branch
          %3958 = sbr.rel (%p3956) target = $region56
        $region55: #{resnet_block_forward.1} parent=51 // pred_region
          %s3959 = sand.u32 %s98, 1
          %s3960 = scalar_lea.sflag [#allocation6], %s3959
          %s3961 = sand.u32 %s98, 1
          %s3962 = smul.addr %s3961, 256
          %s3963 = scalar_lea.vmem [#allocation10], %s3962
          %3964 = dma.done %s3960, 4096
        $region56: #{resnet_block_forward.1} parent=51 // pred_fallthru
          _
      $region52: #{resnet_block_forward.1} parent=5 // pred_fallthru
        _
    $region6: #{resnet_block_forward.1} parent=1 // loop_footer
      %s20 = sadd.s32 1, %s16
    $region7: #{resnet_block_forward.1} parent=1 // loop_footer_branch
      %15 = sbr.rel target = $region3
    $region8: #{resnet_block_forward.1} parent=1 // loop_exit
      _
    %3965 = vsyncpa [#allocation5], 1
    %s3966 = scalar_lea.sflag [#allocation5], 1
    %3967 = vsyncpa %s3966, 1
    %3968 = vsyncpa [#allocation8], 1
    %3969 = vsyncpa [#allocation6], 1
    %s3970 = scalar_lea.sflag [#allocation6], 1
    %3971 = vsyncpa %s3970, 1

</llo_original>
